<compile_context>
chip_gen: v6e
topology: v6e:2x2x1
jax: 0.10.0
libtpu: 0.0.40
codegen_flags: <defaults>
</compile_context>

<pallas_src>
import functools

import jax
import jax.numpy as jnp
from jax.experimental import pallas as pl
from jax.experimental.pallas import tpu as pltpu


def _round_up(x, m):
    return (x + m - 1) // m * m


# --------------------------------------------------------------------------
# Pallas kernel: out = relu?(X @ W + b), tiled over M (weight VMEM-resident)
# --------------------------------------------------------------------------
def _matmul_bias_kernel(x_ref, w_ref, b_ref, o_ref, *, apply_relu):
    acc = jnp.dot(x_ref[...], w_ref[...], preferred_element_type=jnp.float32)
    acc = acc + b_ref[...]          # (1, N) broadcasts over rows
    if apply_relu:
        acc = jnp.maximum(acc, 0.0)
    o_ref[...] = acc.astype(o_ref.dtype)


def pallas_matmul_bias(x, w, b, *, apply_relu, out_dtype=jnp.float32, tm=512):
    """x: [M, K], w: [K, N], b: [N] -> [M, N]. bf16 MXU operands, f32 accum."""
    M, K = x.shape
    K2, N = w.shape
    assert K == K2 and b.shape == (N,)

    # Cap the M tile so double-buffered X/out tiles + the resident weight stay
    # below the explicit 32 MiB vmem limit (valid on v5e/v6e/v7x).
    budget = 20 * 1024 * 1024
    out_bytes = jnp.dtype(out_dtype).itemsize
    row_bytes = 2 * (K * 2) + 2 * (N * out_bytes)   # 2x bf16 X row + 2x out row
    avail = budget - 2 * K * N * 2                  # bf16 weight, double-buffered
    tm_cap = max(8, (avail // row_bytes) // 8 * 8) if avail > row_bytes else 8
    tm = int(min(tm, tm_cap, _round_up(M, 8)))
    # TODO(synk): add a K grid axis with an f32 VMEM accumulator (pl.when init /
    # finalize) if K ever grows past what a single (tm, K) block can hold.

    Mp = _round_up(M, tm)
    if Mp != M:
        x = jnp.pad(x, ((0, Mp - M), (0, 0)))

    xb = x.astype(jnp.bfloat16)
    wb = w.astype(jnp.bfloat16)
    b2 = b.reshape(1, N).astype(jnp.float32)

    out = pl.pallas_call(
        functools.partial(_matmul_bias_kernel, apply_relu=apply_relu),
        out_shape=jax.ShapeDtypeStruct((Mp, N), out_dtype),
        grid=(Mp // tm,),
        in_specs=[
            pl.BlockSpec((tm, K), lambda i: (i, 0)),
            pl.BlockSpec((K, N), lambda i: (0, 0)),   # weight stays resident
            pl.BlockSpec((1, N), lambda i: (0, 0)),
        ],
        out_specs=pl.BlockSpec((tm, N), lambda i: (i, 0)),
        compiler_params=pltpu.CompilerParams(
            dimension_semantics=("parallel",),
            vmem_limit_bytes=32 * 1024 * 1024),
    )(xb, wb, b2)
    return out[:M] if Mp != M else out


# --------------------------------------------------------------------------
# Pallas kernel: fused 3x3 / stride-2 / pad-1 conv (C=128) + bias + ReLU.
# IB images per grid step; the padded input is fed as 4 stride-2 parity
# planes (bf16), flattened to (IB, L, C).  Tap (kh, kw) of image `img` is a
# static contiguous row-slice of plane (kh%2, kw%2); 9 MXU matmuls accumulate
# in f32.  No im2col matrix is ever materialized in HBM.
# --------------------------------------------------------------------------
def _conv2_kernel(p00, p01, p10, p11, w_ref, b_ref, o_ref, *, m_rows, row_stride):
    planes = (p00, p01, p10, p11)
    ib = o_ref.shape[0]
    n_out = o_ref.shape[-1]
    for img in range(ib):                       # static unroll over the block
        acc = jnp.zeros((m_rows, n_out), jnp.float32)
        for kh in range(3):
            for kw in range(3):
                pr = planes[(kh % 2) * 2 + (kw % 2)]
                s = (kh // 2) * row_stride + (kw // 2)
                acc = acc + jnp.dot(pr[img, s:s + m_rows, :],   # bf16 already
                                    w_ref[kh * 3 + kw],
                                    preferred_element_type=jnp.float32)
        acc = acc + b_ref[...]
        o_ref[img, :, :] = jnp.maximum(acc, 0.0).astype(o_ref.dtype)


def pallas_conv3x3_s2_p1(y, w, b, *, images_per_step=8):
    """y: [B, H, W, C] NHWC (H, W even), w: [Cout, C, 3, 3] OIHW, b: [Cout].
    Returns relu(conv(y)) as [B, H//2, W//2, Cout] NHWC (bf16)."""
    B, H, W, C = y.shape
    Cout = w.shape[0]
    assert w.shape == (Cout, C, 3, 3) and H % 2 == 0 and W % 2 == 0
    OH, OW = H // 2, W // 2
    row_stride = OW + 1
    m_rows = OH * row_stride
    L = (OH + 2) * row_stride

    # Amortize per-step overhead, but keep >= 2 grid steps (v7x dual TCs).
    IB = max(1, min(images_per_step, B // 2)) if B >= 2 else 1
    Bp = _round_up(B, IB)

    # Zero-padded bf16 input -> 4 parity planes (plus one extra zero row each
    # so every tap's flattened row window stays in bounds), flattened (Bp, L, C).
    yp = jnp.pad(y.astype(jnp.bfloat16), ((0, Bp - B), (1, 1), (1, 1), (0, 0)))
    planes = []
    for ph in (0, 1):
        for pw in (0, 1):
            pr = yp[:, ph::2, pw::2, :]                          # (Bp, OH+1, OW+1, C)
            pr = jnp.pad(pr, ((0, 0), (0, 1), (0, 0), (0, 0)))   # (Bp, OH+2, OW+1, C)
            planes.append(pr.reshape(Bp, L, C))
    # TODO(synk): optionally fuse the parity-plane extraction into the kernel
    # (strided in-kernel reads) to drop this extra XLA pass over the activation.

    # Per-tap weights: w_taps[kh*3+kw, ci, co] = w[co, ci, kh, kw]
    w_taps = jnp.transpose(w, (2, 3, 1, 0)).reshape(9, C, Cout).astype(jnp.bfloat16)
    b2 = b.reshape(1, Cout).astype(jnp.float32)

    plane_spec = pl.BlockSpec((IB, L, C), lambda bb: (bb, 0, 0))
    out = pl.pallas_call(
        functools.partial(_conv2_kernel, m_rows=m_rows, row_stride=row_stride),
        out_shape=jax.ShapeDtypeStruct((Bp, m_rows, Cout), jnp.bfloat16),
        grid=(Bp // IB,),
        in_specs=[plane_spec, plane_spec, plane_spec, plane_spec,
                  pl.BlockSpec((9, C, Cout), lambda bb: (0, 0, 0)),
                  pl.BlockSpec((1, Cout), lambda bb: (0, 0))],
        out_specs=pl.BlockSpec((IB, m_rows, Cout), lambda bb: (bb, 0, 0)),
        compiler_params=pltpu.CompilerParams(
            dimension_semantics=("parallel",),
            vmem_limit_bytes=32 * 1024 * 1024),
    )(*planes, w_taps, b2)

    # Output rows are (oh, ow) with ow running over OW+1; drop the junk column.
    return out[:B].reshape(B, OH, row_stride, Cout)[:, :, :OW, :]


# --------------------------------------------------------------------------
# Conv1 im2col glue (plain JAX, tiny: single input channel, bf16)
# --------------------------------------------------------------------------
def _im2col_conv1(x, OH, OW):
    """x: [B, H, W] -> patches [B*OH*OW, 9] ordered (kh, kw)."""
    B = x.shape[0]
    xp = jnp.pad(x, ((0, 0), (1, 1), (1, 1)))
    cols = []
    for kh in range(3):
        for kw in range(3):
            cols.append(xp[:, kh:kh + 2 * OH - 1:2, kw:kw + 2 * OW - 1:2])
    p = jnp.stack(cols, axis=-1)                  # (B, OH, OW, 9)
    return p.reshape(B * OH * OW, 9)


# --------------------------------------------------------------------------
# Encoder forward (Pallas-backed)
# --------------------------------------------------------------------------
def encoder_forward(x, params, im_size):
    """x: [B, 1, im_size, im_size] (or [B, im_size, im_size]) -> [B, latent_dim]."""
    w1, b1, w2, b2, wl, bl = params

    if x.ndim == 3:
        x = x[:, None, :, :]
    assert x.ndim == 4 and x.shape[1] == 1
    assert x.shape[-1] == im_size and x.shape[-2] == im_size
    # TODO(synk): the odd-size (padding=0) branch of the PyTorch module is not
    # implemented; the course model uses im_size=40 (even / even).
    assert im_size % 2 == 0 and (im_size // 2) % 2 == 0

    B = x.shape[0]
    C = w1.shape[0]                                # 128
    latent_dim = wl.shape[0]
    OH1 = OW1 = im_size // 2
    OH2 = OW2 = OH1 // 2

    # ---- Conv1: 1 -> 128, 3x3, stride 2, pad 1, fused ReLU (im2col GEMM) ----
    KP = 16                                        # K padded only 9 -> 16 (bf16 pack)
    p1 = _im2col_conv1(x[:, 0].astype(jnp.bfloat16), OH1, OW1)   # (B*OH1*OW1, 9)
    p1 = jnp.pad(p1, ((0, 0), (0, KP - 9)))
    w1_flat = jnp.pad(w1.reshape(C, 9).T, ((0, KP - 9), (0, 0)))  # (16, C)
    y1 = pallas_matmul_bias(p1, w1_flat, b1, apply_relu=True,
                            out_dtype=jnp.bfloat16, tm=1024)
    y1 = y1.reshape(B, OH1, OW1, C)                # NHWC bf16, no transpose

    # ---- Conv2: 128 -> 128, 3x3, stride 2, pad 1, fused ReLU (fused kernel) ----
    y2 = pallas_conv3x3_s2_p1(y1, w2, b2)          # (B, OH2, OW2, C) NHWC bf16

    # ---- Flatten + Linear ----
    # PyTorch flattens NCHW as (c, h, w); we keep NHWC and permute the Linear
    # weight columns once at trace time instead (bit-exact same math).
    wl_mat = wl.reshape(latent_dim, C, OH2, OW2).transpose(2, 3, 1, 0)
    wl_mat = wl_mat.reshape(OH2 * OW2 * C, latent_dim)   # N = latent_dim, no pad
    flat = y2.reshape(B, OH2 * OW2 * C)
    out = pallas_matmul_bias(flat, wl_mat, bl, apply_relu=False,
                             out_dtype=jnp.float32)
    return out


# --------------------------------------------------------------------------
# Pure-JAX reference (for correctness check)
# --------------------------------------------------------------------------
def reference_forward(x, params):
    w1, b1, w2, b2, wl, bl = params
    dn = ("NCHW", "OIHW", "NCHW")
    y = jax.lax.conv_general_dilated(x, w1, (2, 2), ((1, 1), (1, 1)),
                                     dimension_numbers=dn)
    y = jax.nn.relu(y + b1[None, :, None, None])
    y = jax.lax.conv_general_dilated(y, w2, (2, 2), ((1, 1), (1, 1)),
                                     dimension_numbers=dn)
    y = jax.nn.relu(y + b2[None, :, None, None])
    y = y.reshape(y.shape[0], -1)
    return y @ wl.T + bl


# --------------------------------------------------------------------------
# Deterministic parameter init (shapes from the module __init__)
# --------------------------------------------------------------------------
def init_params(key, im_size, latent_dim):
    encoder_dim = im_size // 2 // 2
    k1, k2, k3, k4, k5, k6 = jax.random.split(key, 6)
    w1 = jax.random.normal(k1, (128, 1, 3, 3), jnp.float32) * 0.1
    b1 = jax.random.normal(k2, (128,), jnp.float32) * 0.01
    w2 = jax.random.normal(k3, (128, 128, 3, 3), jnp.float32) * 0.02
    b2 = jax.random.normal(k4, (128,), jnp.float32) * 0.01
    wl = jax.random.normal(k5, (latent_dim, encoder_dim * encoder_dim * 128),
                           jnp.float32) * 0.01
    bl = jax.random.normal(k6, (latent_dim,), jnp.float32) * 0.01
    return (w1, b1, w2, b2, wl, bl)


if __name__ == "__main__":
    im_size = 16       # small but even with even im_size//2 (like the course's 40)
    latent_dim = 2
    batch = 2

    key = jax.random.PRNGKey(0)
    pkey, xkey = jax.random.split(key)
    params = init_params(pkey, im_size, latent_dim)
    x = jax.random.normal(xkey, (batch, 1, im_size, im_size), jnp.float32)

    fwd = jax.jit(encoder_forward, static_argnums=(2,))
    out = jax.block_until_ready(fwd(x, params, im_size))
    ref = jax.block_until_ready(reference_forward(x, params))

    assert out.shape == (batch, latent_dim)
    # bf16 MXU operands / bf16 intermediate activations with f32 accumulation.
    assert jnp.allclose(out, ref, atol=2e-2, rtol=5e-2), (out, ref)

    print("KERNEL_OK")
</pallas_src>

<mosaic_0001>
module attributes {stable_mosaic.version = 11 : i64} {
  func.func @_matmul_bias_kernel(%arg0: i32, %arg1: memref<128x16xbf16, #tpu.memory_space<vmem>>, %arg2: memref<16x128xbf16, #tpu.memory_space<vmem>>, %arg3: memref<1x128xf32, #tpu.memory_space<vmem>>, %arg4: memref<128x128xbf16, #tpu.memory_space<vmem>>) attributes {dimension_semantics = [#tpu.dimension_semantics<parallel>], iteration_bounds = array<i64: 1>, scalar_prefetch = 0 : i64, scratch_operands = 0 : i64, tpu.core_type = #tpu.core_type<tc>, window_params = [{transform_indices = @transform_0, window_bounds = array<i64: 128, 16>}, {pipeline_mode = #tpu.pipeline_mode<synchronous>, transform_indices = @transform_1, window_bounds = array<i64: 16, 128>}, {pipeline_mode = #tpu.pipeline_mode<synchronous>, transform_indices = @transform_2, window_bounds = array<i64: 1, 128>}, {transform_indices = @transform_3, window_bounds = array<i64: 128, 128>}]} {
    %c0 = arith.constant 0 : index
    %c0_0 = arith.constant 0 : index
    %0 = vector.load %arg1[%c0, %c0_0] : memref<128x16xbf16, #tpu.memory_space<vmem>>, vector<128x16xbf16>
    %c0_1 = arith.constant 0 : index
    %c0_2 = arith.constant 0 : index
    %1 = vector.load %arg2[%c0_1, %c0_2] : memref<16x128xbf16, #tpu.memory_space<vmem>>, vector<16x128xbf16>
    %cst = arith.constant dense<0.000000e+00> : vector<128x128xf32>
    %2 = tpu.matmul %0, %1, %cst {dimension_numbers = #tpu.dot_dimension_numbers<[1], [0], [0], [1], [0, 0, 1, 1], [], []>} : vector<128x16xbf16>, vector<16x128xbf16>, vector<128x128xf32> -> vector<128x128xf32>
    %c0_3 = arith.constant 0 : index
    %c0_4 = arith.constant 0 : index
    %3 = vector.load %arg3[%c0_3, %c0_4] : memref<1x128xf32, #tpu.memory_space<vmem>>, vector<1x128xf32>
    %4 = vector.broadcast %3 : vector<1x128xf32> to vector<128x128xf32>
    %5 = arith.addf %2, %4 : vector<128x128xf32>
    %cst_5 = arith.constant 0.000000e+00 : f32
    %6 = vector.broadcast %cst_5 : f32 to vector<128x128xf32>
    %7 = arith.maximumf %5, %6 : vector<128x128xf32>
    %8 = arith.truncf %7 : vector<128x128xf32> to vector<128x128xbf16>
    %c0_6 = arith.constant 0 : index
    %c0_7 = arith.constant 0 : index
    %9 = vector.load %arg4[%c0_6, %c0_7] : memref<128x128xbf16, #tpu.memory_space<vmem>>, vector<128x128xbf16>
    tpu.vector_store %arg4[%c0_6, %c0_7], %8 {strides = array<i32>} : memref<128x128xbf16, #tpu.memory_space<vmem>>, vector<128x128xbf16>,
    return
  }
  func.func @transform_0(%arg0: i32) -> (i32, i32) {
    %c0_i32 = arith.constant 0 : i32
    %c0_i32_0 = arith.constant 0 : i32
    return %arg0, %c0_i32 : i32, i32
  }
  func.func @transform_1(%arg0: i32) -> (i32, i32) {
    %c0_i32 = arith.constant 0 : i32
    %c0_i32_0 = arith.constant 0 : i32
    %c0_i32_1 = arith.constant 0 : i32
    return %c0_i32, %c0_i32_0 : i32, i32
  }
  func.func @transform_2(%arg0: i32) -> (i32, i32) {
    %c0_i32 = arith.constant 0 : i32
    %c0_i32_0 = arith.constant 0 : i32
    %c0_i32_1 = arith.constant 0 : i32
    return %c0_i32, %c0_i32_0 : i32, i32
  }
  func.func @transform_3(%arg0: i32) -> (i32, i32) {
    %c0_i32 = arith.constant 0 : i32
    %c0_i32_0 = arith.constant 0 : i32
    return %arg0, %c0_i32 : i32, i32
  }
}

module attributes {stable_mosaic.version = 11 : i64} {
  func.func @_conv2_kernel(%arg0: i32, %arg1: memref<1x30x128xbf16, #tpu.memory_space<vmem>>, %arg2: memref<1x30x128xbf16, #tpu.memory_space<vmem>>, %arg3: memref<1x30x128xbf16, #tpu.memory_space<vmem>>, %arg4: memref<1x30x128xbf16, #tpu.memory_space<vmem>>, %arg5: memref<9x128x128xbf16, #tpu.memory_space<vmem>>, %arg6: memref<1x128xf32, #tpu.memory_space<vmem>>, %arg7: memref<1x20x128xbf16, #tpu.memory_space<vmem>>) attributes {dimension_semantics = [#tpu.dimension_semantics<parallel>], iteration_bounds = array<i64: 2>, scalar_prefetch = 0 : i64, scratch_operands = 0 : i64, tpu.core_type = #tpu.core_type<tc>, window_params = [{transform_indices = @transform_0, window_bounds = array<i64: 1, 30, 128>}, {transform_indices = @transform_1, window_bounds = array<i64: 1, 30, 128>}, {transform_indices = @transform_2, window_bounds = array<i64: 1, 30, 128>}, {transform_indices = @transform_3, window_bounds = array<i64: 1, 30, 128>}, {pipeline_mode = #tpu.pipeline_mode<synchronous>, transform_indices = @transform_4, window_bounds = array<i64: 9, 128, 128>}, {pipeline_mode = #tpu.pipeline_mode<synchronous>, transform_indices = @transform_5, window_bounds = array<i64: 1, 128>}, {transform_indices = @transform_6, window_bounds = array<i64: 1, 20, 128>}]} {
    %cst = arith.constant 0.000000e+00 : f32
    %0 = vector.broadcast %cst : f32 to vector<20x128xf32>
    %c0 = arith.constant 0 : index
    %c0_0 = arith.constant 0 : index
    %c0_1 = arith.constant 0 : index
    %1 = vector.load %arg1[%c0, %c0_0, %c0_1] : memref<1x30x128xbf16, #tpu.memory_space<vmem>>, vector<1x20x128xbf16>
    %2 = vector.shape_cast %1 : vector<1x20x128xbf16> to vector<20x128xbf16>
    %c0_2 = arith.constant 0 : index
    %c0_3 = arith.constant 0 : index
    %c0_4 = arith.constant 0 : index
    %3 = vector.load %arg5[%c0_2, %c0_3, %c0_4] : memref<9x128x128xbf16, #tpu.memory_space<vmem>>, vector<1x128x128xbf16>
    %4 = vector.shape_cast %3 : vector<1x128x128xbf16> to vector<128x128xbf16>
    %cst_5 = arith.constant dense<0.000000e+00> : vector<20x128xf32>
    %5 = tpu.matmul %2, %4, %cst_5 {dimension_numbers = #tpu.dot_dimension_numbers<[1], [0], [0], [1], [0, 0, 1, 1], [], []>} : vector<20x128xbf16>, vector<128x128xbf16>, vector<20x128xf32> -> vector<20x128xf32>
    %6 = arith.addf %0, %5 : vector<20x128xf32>
    %c0_6 = arith.constant 0 : index
    %c0_7 = arith.constant 0 : index
    %c0_8 = arith.constant 0 : index
    %7 = vector.load %arg2[%c0_6, %c0_7, %c0_8] : memref<1x30x128xbf16, #tpu.memory_space<vmem>>, vector<1x20x128xbf16>
    %8 = vector.shape_cast %7 : vector<1x20x128xbf16> to vector<20x128xbf16>
    %c1 = arith.constant 1 : index
    %c0_9 = arith.constant 0 : index
    %c0_10 = arith.constant 0 : index
    %9 = vector.load %arg5[%c1, %c0_9, %c0_10] : memref<9x128x128xbf16, #tpu.memory_space<vmem>>, vector<1x128x128xbf16>
    %10 = vector.shape_cast %9 : vector<1x128x128xbf16> to vector<128x128xbf16>
    %cst_11 = arith.constant dense<0.000000e+00> : vector<20x128xf32>
    %11 = tpu.matmul %8, %10, %cst_11 {dimension_numbers = #tpu.dot_dimension_numbers<[1], [0], [0], [1], [0, 0, 1, 1], [], []>} : vector<20x128xbf16>, vector<128x128xbf16>, vector<20x128xf32> -> vector<20x128xf32>
    %12 = arith.addf %6, %11 : vector<20x128xf32>
    %c0_12 = arith.constant 0 : index
    %c1_13 = arith.constant 1 : index
    %c0_14 = arith.constant 0 : index
    %13 = vector.load %arg1[%c0_12, %c1_13, %c0_14] : memref<1x30x128xbf16, #tpu.memory_space<vmem>>, vector<1x20x128xbf16>
    %14 = vector.shape_cast %13 : vector<1x20x128xbf16> to vector<20x128xbf16>
    %c2 = arith.constant 2 : index
    %c0_15 = arith.constant 0 : index
    %c0_16 = arith.constant 0 : index
    %15 = vector.load %arg5[%c2, %c0_15, %c0_16] : memref<9x128x128xbf16, #tpu.memory_space<vmem>>, vector<1x128x128xbf16>
    %16 = vector.shape_cast %15 : vector<1x128x128xbf16> to vector<128x128xbf16>
    %cst_17 = arith.constant dense<0.000000e+00> : vector<20x128xf32>
    %17 = tpu.matmul %14, %16, %cst_17 {dimension_numbers = #tpu.dot_dimension_numbers<[1], [0], [0], [1], [0, 0, 1, 1], [], []>} : vector<20x128xbf16>, vector<128x128xbf16>, vector<20x128xf32> -> vector<20x128xf32>
    %18 = arith.addf %12, %17 : vector<20x128xf32>
    %c0_18 = arith.constant 0 : index
    %c0_19 = arith.constant 0 : index
    %c0_20 = arith.constant 0 : index
    %19 = vector.load %arg3[%c0_18, %c0_19, %c0_20] : memref<1x30x128xbf16, #tpu.memory_space<vmem>>, vector<1x20x128xbf16>
    %20 = vector.shape_cast %19 : vector<1x20x128xbf16> to vector<20x128xbf16>
    %c3 = arith.constant 3 : index
    %c0_21 = arith.constant 0 : index
    %c0_22 = arith.constant 0 : index
    %21 = vector.load %arg5[%c3, %c0_21, %c0_22] : memref<9x128x128xbf16, #tpu.memory_space<vmem>>, vector<1x128x128xbf16>
    %22 = vector.shape_cast %21 : vector<1x128x128xbf16> to vector<128x128xbf16>
    %cst_23 = arith.constant dense<0.000000e+00> : vector<20x128xf32>
    %23 = tpu.matmul %20, %22, %cst_23 {dimension_numbers = #tpu.dot_dimension_numbers<[1], [0], [0], [1], [0, 0, 1, 1], [], []>} : vector<20x128xbf16>, vector<128x128xbf16>, vector<20x128xf32> -> vector<20x128xf32>
    %24 = arith.addf %18, %23 : vector<20x128xf32>
    %c0_24 = arith.constant 0 : index
    %c0_25 = arith.constant 0 : index
    %c0_26 = arith.constant 0 : index
    %25 = vector.load %arg4[%c0_24, %c0_25, %c0_26] : memref<1x30x128xbf16, #tpu.memory_space<vmem>>, vector<1x20x128xbf16>
    %26 = vector.shape_cast %25 : vector<1x20x128xbf16> to vector<20x128xbf16>
    %c4 = arith.constant 4 : index
    %c0_27 = arith.constant 0 : index
    %c0_28 = arith.constant 0 : index
    %27 = vector.load %arg5[%c4, %c0_27, %c0_28] : memref<9x128x128xbf16, #tpu.memory_space<vmem>>, vector<1x128x128xbf16>
    %28 = vector.shape_cast %27 : vector<1x128x128xbf16> to vector<128x128xbf16>
    %cst_29 = arith.constant dense<0.000000e+00> : vector<20x128xf32>
    %29 = tpu.matmul %26, %28, %cst_29 {dimension_numbers = #tpu.dot_dimension_numbers<[1], [0], [0], [1], [0, 0, 1, 1], [], []>} : vector<20x128xbf16>, vector<128x128xbf16>, vector<20x128xf32> -> vector<20x128xf32>
    %30 = arith.addf %24, %29 : vector<20x128xf32>
    %c0_30 = arith.constant 0 : index
    %c1_31 = arith.constant 1 : index
    %c0_32 = arith.constant 0 : index
    %31 = vector.load %arg3[%c0_30, %c1_31, %c0_32] : memref<1x30x128xbf16, #tpu.memory_space<vmem>>, vector<1x20x128xbf16>
    %32 = vector.shape_cast %31 : vector<1x20x128xbf16> to vector<20x128xbf16>
    %c5 = arith.constant 5 : index
    %c0_33 = arith.constant 0 : index
    %c0_34 = arith.constant 0 : index
    %33 = vector.load %arg5[%c5, %c0_33, %c0_34] : memref<9x128x128xbf16, #tpu.memory_space<vmem>>, vector<1x128x128xbf16>
    %34 = vector.shape_cast %33 : vector<1x128x128xbf16> to vector<128x128xbf16>
    %cst_35 = arith.constant dense<0.000000e+00> : vector<20x128xf32>
    %35 = tpu.matmul %32, %34, %cst_35 {dimension_numbers = #tpu.dot_dimension_numbers<[1], [0], [0], [1], [0, 0, 1, 1], [], []>} : vector<20x128xbf16>, vector<128x128xbf16>, vector<20x128xf32> -> vector<20x128xf32>
    %36 = arith.addf %30, %35 : vector<20x128xf32>
    %c0_36 = arith.constant 0 : index
    %c5_37 = arith.constant 5 : index
    %c0_38 = arith.constant 0 : index
    %37 = vector.load %arg1[%c0_36, %c5_37, %c0_38] : memref<1x30x128xbf16, #tpu.memory_space<vmem>>, vector<1x20x128xbf16>
    %38 = vector.shape_cast %37 : vector<1x20x128xbf16> to vector<20x128xbf16>
    %c6 = arith.constant 6 : index
    %c0_39 = arith.constant 0 : index
    %c0_40 = arith.constant 0 : index
    %39 = vector.load %arg5[%c6, %c0_39, %c0_40] : memref<9x128x128xbf16, #tpu.memory_space<vmem>>, vector<1x128x128xbf16>
    %40 = vector.shape_cast %39 : vector<1x128x128xbf16> to vector<128x128xbf16>
    %cst_41 = arith.constant dense<0.000000e+00> : vector<20x128xf32>
    %41 = tpu.matmul %38, %40, %cst_41 {dimension_numbers = #tpu.dot_dimension_numbers<[1], [0], [0], [1], [0, 0, 1, 1], [], []>} : vector<20x128xbf16>, vector<128x128xbf16>, vector<20x128xf32> -> vector<20x128xf32>
    %42 = arith.addf %36, %41 : vector<20x128xf32>
    %c0_42 = arith.constant 0 : index
    %c5_43 = arith.constant 5 : index
    %c0_44 = arith.constant 0 : index
    %43 = vector.load %arg2[%c0_42, %c5_43, %c0_44] : memref<1x30x128xbf16, #tpu.memory_space<vmem>>, vector<1x20x128xbf16>
    %44 = vector.shape_cast %43 : vector<1x20x128xbf16> to vector<20x128xbf16>
    %c7 = arith.constant 7 : index
    %c0_45 = arith.constant 0 : index
    %c0_46 = arith.constant 0 : index
    %45 = vector.load %arg5[%c7, %c0_45, %c0_46] : memref<9x128x128xbf16, #tpu.memory_space<vmem>>, vector<1x128x128xbf16>
    %46 = vector.shape_cast %45 : vector<1x128x128xbf16> to vector<128x128xbf16>
    %cst_47 = arith.constant dense<0.000000e+00> : vector<20x128xf32>
    %47 = tpu.matmul %44, %46, %cst_47 {dimension_numbers = #tpu.dot_dimension_numbers<[1], [0], [0], [1], [0, 0, 1, 1], [], []>} : vector<20x128xbf16>, vector<128x128xbf16>, vector<20x128xf32> -> vector<20x128xf32>
    %48 = arith.addf %42, %47 : vector<20x128xf32>
    %c0_48 = arith.constant 0 : index
    %c6_49 = arith.constant 6 : index
    %c0_50 = arith.constant 0 : index
    %49 = vector.load %arg1[%c0_48, %c6_49, %c0_50] : memref<1x30x128xbf16, #tpu.memory_space<vmem>>, vector<1x20x128xbf16>
    %50 = vector.shape_cast %49 : vector<1x20x128xbf16> to vector<20x128xbf16>
    %c8 = arith.constant 8 : index
    %c0_51 = arith.constant 0 : index
    %c0_52 = arith.constant 0 : index
    %51 = vector.load %arg5[%c8, %c0_51, %c0_52] : memref<9x128x128xbf16, #tpu.memory_space<vmem>>, vector<1x128x128xbf16>
    %52 = vector.shape_cast %51 : vector<1x128x128xbf16> to vector<128x128xbf16>
    %cst_53 = arith.constant dense<0.000000e+00> : vector<20x128xf32>
    %53 = tpu.matmul %50, %52, %cst_53 {dimension_numbers = #tpu.dot_dimension_numbers<[1], [0], [0], [1], [0, 0, 1, 1], [], []>} : vector<20x128xbf16>, vector<128x128xbf16>, vector<20x128xf32> -> vector<20x128xf32>
    %54 = arith.addf %48, %53 : vector<20x128xf32>
    %c0_54 = arith.constant 0 : index
    %c0_55 = arith.constant 0 : index
    %55 = vector.load %arg6[%c0_54, %c0_55] : memref<1x128xf32, #tpu.memory_space<vmem>>, vector<1x128xf32>
    %56 = vector.broadcast %55 : vector<1x128xf32> to vector<20x128xf32>
    %57 = arith.addf %54, %56 : vector<20x128xf32>
    %cst_56 = arith.constant 0.000000e+00 : f32
    %58 = vector.broadcast %cst_56 : f32 to vector<20x128xf32>
    %59 = arith.maximumf %57, %58 : vector<20x128xf32>
    %60 = arith.truncf %59 : vector<20x128xf32> to vector<20x128xbf16>
    %c0_57 = arith.constant 0 : index
    %c0_58 = arith.constant 0 : index
    %c0_59 = arith.constant 0 : index
    %61 = vector.load %arg7[%c0_57, %c0_58, %c0_59] : memref<1x20x128xbf16, #tpu.memory_space<vmem>>, vector<1x20x128xbf16>
    %62 = vector.shape_cast %61 : vector<1x20x128xbf16> to vector<20x128xbf16>
    %63 = vector.shape_cast %60 : vector<20x128xbf16> to vector<1x20x128xbf16>
    tpu.vector_store %arg7[%c0_57, %c0_58, %c0_59], %63 {strides = array<i32>} : memref<1x20x128xbf16, #tpu.memory_space<vmem>>, vector<1x20x128xbf16>,
    return
  }
  func.func @transform_0(%arg0: i32) -> (i32, i32, i32) {
    %c0_i32 = arith.constant 0 : i32
    %c0_i32_0 = arith.constant 0 : i32
    %c0_i32_1 = arith.constant 0 : i32
    return %arg0, %c0_i32, %c0_i32_0 : i32, i32, i32
  }
  func.func @transform_1(%arg0: i32) -> (i32, i32, i32) {
    %c0_i32 = arith.constant 0 : i32
    %c0_i32_0 = arith.constant 0 : i32
    %c0_i32_1 = arith.constant 0 : i32
    return %arg0, %c0_i32, %c0_i32_0 : i32, i32, i32
  }
  func.func @transform_2(%arg0: i32) -> (i32, i32, i32) {
    %c0_i32 = arith.constant 0 : i32
    %c0_i32_0 = arith.constant 0 : i32
    %c0_i32_1 = arith.constant 0 : i32
    return %arg0, %c0_i32, %c0_i32_0 : i32, i32, i32
  }
  func.func @transform_3(%arg0: i32) -> (i32, i32, i32) {
    %c0_i32 = arith.constant 0 : i32
    %c0_i32_0 = arith.constant 0 : i32
    %c0_i32_1 = arith.constant 0 : i32
    return %arg0, %c0_i32, %c0_i32_0 : i32, i32, i32
  }
  func.func @transform_4(%arg0: i32) -> (i32, i32, i32) {
    %c0_i32 = arith.constant 0 : i32
    %c0_i32_0 = arith.constant 0 : i32
    %c0_i32_1 = arith.constant 0 : i32
    %c0_i32_2 = arith.constant 0 : i32
    return %c0_i32, %c0_i32_0, %c0_i32_1 : i32, i32, i32
  }
  func.func @transform_5(%arg0: i32) -> (i32, i32) {
    %c0_i32 = arith.constant 0 : i32
    %c0_i32_0 = arith.constant 0 : i32
    %c0_i32_1 = arith.constant 0 : i32
    return %c0_i32, %c0_i32_0 : i32, i32
  }
  func.func @transform_6(%arg0: i32) -> (i32, i32, i32) {
    %c0_i32 = arith.constant 0 : i32
    %c0_i32_0 = arith.constant 0 : i32
    %c0_i32_1 = arith.constant 0 : i32
    return %arg0, %c0_i32, %c0_i32_0 : i32, i32, i32
  }
}

module attributes {stable_mosaic.version = 11 : i64} {
  func.func @_matmul_bias_kernel(%arg0: i32, %arg1: memref<8x2048xbf16, #tpu.memory_space<vmem>>, %arg2: memref<2048x2xbf16, #tpu.memory_space<vmem>>, %arg3: memref<1x2xf32, #tpu.memory_space<vmem>>, %arg4: memref<8x2xf32, #tpu.memory_space<vmem>>) attributes {dimension_semantics = [#tpu.dimension_semantics<parallel>], iteration_bounds = array<i64: 1>, scalar_prefetch = 0 : i64, scratch_operands = 0 : i64, tpu.core_type = #tpu.core_type<tc>, window_params = [{transform_indices = @transform_0, window_bounds = array<i64: 8, 2048>}, {pipeline_mode = #tpu.pipeline_mode<synchronous>, transform_indices = @transform_1, window_bounds = array<i64: 2048, 2>}, {pipeline_mode = #tpu.pipeline_mode<synchronous>, transform_indices = @transform_2, window_bounds = array<i64: 1, 2>}, {transform_indices = @transform_3, window_bounds = array<i64: 8, 2>}]} {
    %c0 = arith.constant 0 : index
    %c0_0 = arith.constant 0 : index
    %0 = vector.load %arg1[%c0, %c0_0] : memref<8x2048xbf16, #tpu.memory_space<vmem>>, vector<8x2048xbf16>
    %c0_1 = arith.constant 0 : index
    %c0_2 = arith.constant 0 : index
    %1 = vector.load %arg2[%c0_1, %c0_2] : memref<2048x2xbf16, #tpu.memory_space<vmem>>, vector<2048x2xbf16>
    %cst = arith.constant dense<0.000000e+00> : vector<8x2xf32>
    %2 = tpu.matmul %0, %1, %cst {dimension_numbers = #tpu.dot_dimension_numbers<[1], [0], [0], [1], [0, 0, 1, 1], [], []>} : vector<8x2048xbf16>, vector<2048x2xbf16>, vector<8x2xf32> -> vector<8x2xf32>
    %c0_3 = arith.constant 0 : index
    %c0_4 = arith.constant 0 : index
    %3 = vector.load %arg3[%c0_3, %c0_4] : memref<1x2xf32, #tpu.memory_space<vmem>>, vector<1x2xf32>
    %4 = vector.broadcast %3 : vector<1x2xf32> to vector<8x2xf32>
    %5 = arith.addf %2, %4 : vector<8x2xf32>
    %c0_5 = arith.constant 0 : index
    %c0_6 = arith.constant 0 : index
    %6 = vector.load %arg4[%c0_5, %c0_6] : memref<8x2xf32, #tpu.memory_space<vmem>>, vector<8x2xf32>
    tpu.vector_store %arg4[%c0_5, %c0_6], %5 {strides = array<i32>} : memref<8x2xf32, #tpu.memory_space<vmem>>, vector<8x2xf32>,
    return
  }
  func.func @transform_0(%arg0: i32) -> (i32, i32) {
    %c0_i32 = arith.constant 0 : i32
    %c0_i32_0 = arith.constant 0 : i32
    return %arg0, %c0_i32 : i32, i32
  }
  func.func @transform_1(%arg0: i32) -> (i32, i32) {
    %c0_i32 = arith.constant 0 : i32
    %c0_i32_0 = arith.constant 0 : i32
    %c0_i32_1 = arith.constant 0 : i32
    return %c0_i32, %c0_i32_0 : i32, i32
  }
  func.func @transform_2(%arg0: i32) -> (i32, i32) {
    %c0_i32 = arith.constant 0 : i32
    %c0_i32_0 = arith.constant 0 : i32
    %c0_i32_1 = arith.constant 0 : i32
    return %c0_i32, %c0_i32_0 : i32, i32
  }
  func.func @transform_3(%arg0: i32) -> (i32, i32) {
    %c0_i32 = arith.constant 0 : i32
    %c0_i32_0 = arith.constant 0 : i32
    return %arg0, %c0_i32 : i32, i32
  }
}

</mosaic_0001>

<llo_original>
// kernel: encoder_forward.3
$region0: #{encoder_forward.3}
  #allocation0 [shape = 'u32[]', space=smem, size = 0x4, offset = 0x4, fixed_abs, tag = 'smem constant byte address 0x4 - core index']
  #allocation1 [shape = 'u32[144,128]{1,0:T(1,128)}', space=vmem, size = 0x12000, scoped, tag = 'internal scratch']
  %s0 = inlined_call_operand.vmem [shape: bf16[128,16], index: 0, kind: input, shape index: {}]
  %s1 = inlined_call_operand.vmem [shape: bf16[16,128], index: 1, kind: input, shape index: {}]
  %s2 = inlined_call_operand.vmem [shape: f32[1,128], index: 2, kind: input, shape index: {}]
  %s3 = inlined_call_operand.vmem [shape: bf16[128,128], index: 3, kind: output, shape index: {}]
  %s4 = sld [smem:[#allocation0]]
  $region22: #{encoder_forward.3} parent=0
    _
  %s6 = ssub.s32 1, %s4
  %s7 = scalar_select 0, %s6, %s4
  // Predicated region
  $region2: #{encoder_forward.3} parent=0 // pred_check
    _
  $region3: #{encoder_forward.3} parent=0 // pred_check_branch
    %9 = sbr.rel (0) target = $region5
  $region4: #{encoder_forward.3} parent=0 // pred_region
    _
  $region5: #{encoder_forward.3} parent=0 // pred_fallthru
    _
  // Predicated region
  $region6: #{encoder_forward.3} parent=0 // pred_check
    _
  $region7: #{encoder_forward.3} parent=0 // pred_check_branch
    %11 = sbr.rel (0) target = $region9
  $region8: #{encoder_forward.3} parent=0 // pred_region
    _
  $region9: #{encoder_forward.3} parent=0 // pred_fallthru
    _
  // Predicated region
  $region10: #{encoder_forward.3} parent=0 // pred_check
    _
  $region11: #{encoder_forward.3} parent=0 // pred_check_branch
    %13 = sbr.rel (0) target = $region13
  $region12: #{encoder_forward.3} parent=0 // pred_region
    _
  $region13: #{encoder_forward.3} parent=0 // pred_fallthru
    _
  %v15 = vld [vmem:[%s0] sm:$0xf]
  %v16 = vld [vmem:[%s0 + $0x4] sm:$0xf]
  %v17 = vld [vmem:[%s0 + $0x8] sm:$0xf]
  %v18 = vld [vmem:[%s0 + $0xc] sm:$0xf]
  %v19 = vld [vmem:[%s0 + $0x10] sm:$0xf]
  %v20 = vld [vmem:[%s0 + $0x14] sm:$0xf]
  %v21 = vld [vmem:[%s0 + $0x18] sm:$0xf]
  %v22 = vld [vmem:[%s0 + $0x1c] sm:$0xf]
  %v23 = vld [vmem:[%s0 + $0x20] sm:$0xf]
  %v24 = vld [vmem:[%s0 + $0x24] sm:$0xf]
  %v25 = vld [vmem:[%s0 + $0x28] sm:$0xf]
  %v26 = vld [vmem:[%s0 + $0x2c] sm:$0xf]
  %v27 = vld [vmem:[%s0 + $0x30] sm:$0xf]
  %v28 = vld [vmem:[%s0 + $0x34] sm:$0xf]
  %v29 = vld [vmem:[%s0 + $0x38] sm:$0xf]
  %v30 = vld [vmem:[%s0 + $0x3c] sm:$0xf]
  %v31 = vld [vmem:[%s1] sm:$0xf]
  %v32 = vld [vmem:[%s1 + $0x4] sm:$0xf]
  %v33 = vld [vmem:[%s2] sm:$0x1]
  %v35 = vlaneseq
  %v36 = vshrl.u32 %v35, 7
  %v37 = vsub.s32 0, %v36
  %v38 = vrot.slane %v33, %v37
  %v56 = vunpack.c.l.b16 %v15
  %v57 = vunpack.c.l.b16 %v16
  %v58 = vunpack.c.l.b16 %v17
  %v59 = vunpack.c.l.b16 %v18
  %v60 = vunpack.c.l.b16 %v19
  %v61 = vunpack.c.l.b16 %v20
  %v62 = vunpack.c.l.b16 %v21
  %v63 = vunpack.c.l.b16 %v22
  %v64 = vunpack.c.l.b16 %v23
  %v65 = vunpack.c.l.b16 %v24
  %v66 = vunpack.c.l.b16 %v25
  %v67 = vunpack.c.l.b16 %v26
  %v68 = vunpack.c.l.b16 %v27
  %v69 = vunpack.c.l.b16 %v28
  %v70 = vunpack.c.l.b16 %v29
  %v71 = vunpack.c.l.b16 %v30
  %v72 = vpack.c.b16 %v57, %v56
  %v73 = vpack.c.b16 %v59, %v58
  %v74 = vpack.c.b16 %v61, %v60
  %v75 = vpack.c.b16 %v63, %v62
  %v76 = vpack.c.b16 %v65, %v64
  %v77 = vpack.c.b16 %v67, %v66
  %v78 = vpack.c.b16 %v69, %v68
  %v79 = vpack.c.b16 %v71, %v70
  %v82 = vunpack.c.l.b16 %v31
  %v83 = vunpack.c.l.b16 %v32
  %v84 = vpack.c.b16 %v83, %v82
  %vm86 = vcmask 130048
  %v88 = vsel %vm86, %v72, 0
  %v91 = vsel %vm86, %v73, 0
  %v94 = vsel %vm86, %v74, 0
  %v97 = vsel %vm86, %v75, 0
  %v100 = vsel %vm86, %v76, 0
  %v103 = vsel %vm86, %v77, 0
  %v106 = vsel %vm86, %v78, 0
  %v109 = vsel %vm86, %v79, 0
  %111 = vmatprep.subr.bf16.mxu0 0
  %112 = vmatpush1.bf16.msra.mxu0 0
  %113 = vmatprep.subr.bf16.mxu0 0
  %114 = vmatpush1.bf16.msra.mxu0 0
  %115 = vmatprep.subr.bf16.mxu0 0
  %116 = vmatpush1.bf16.msra.mxu0 0
  %117 = vmatprep.subr.bf16.mxu0 0
  %118 = vmatpush1.bf16.msra.mxu0 0
  %119 = vmatprep.subr.bf16.mxu0 0
  %120 = vmatpush1.bf16.msra.mxu0 0
  %121 = vmatprep.subr.bf16.mxu0 0
  %122 = vmatpush1.bf16.msra.mxu0 0
  %123 = vmatprep.subr.bf16.mxu0 0
  %124 = vmatpush1.bf16.msra.mxu0 0
  %125 = vmatprep.subr.bf16.mxu0 0
  %126 = vmatpush1.bf16.msra.mxu0 %v84
  %127 = vmatprep.subr.bf16.mxu0 0
  %128 = vmatpush2.bf16.msra.mxu0 0
  %129 = vmatprep.subr.bf16.mxu0 0
  %130 = vmatpush2.bf16.msra.mxu0 0
  %131 = vmatprep.subr.bf16.mxu0 0
  %132 = vmatpush2.bf16.msra.mxu0 0
  %133 = vmatprep.subr.bf16.mxu0 0
  %134 = vmatpush2.bf16.msra.mxu0 0
  %135 = vmatprep.subr.bf16.mxu0 0
  %136 = vmatpush2.bf16.msra.mxu0 0
  %137 = vmatprep.subr.bf16.mxu0 0
  %138 = vmatpush2.bf16.msra.mxu0 0
  %139 = vmatprep.subr.bf16.mxu0 0
  %140 = vmatpush2.bf16.msra.mxu0 0
  %141 = vmatprep.subr.bf16.mxu0 0
  %142 = vmatpush2.bf16.msra.mxu0 0
  %143 = vmatprep.mubr.bf16.mxu0 0
  %144 = vmatmul.mubr.bf16.gmra.mxu0 %v88
  %v145 = vpop.f32.mrf.mxu0
  %v146 = vadd.f32 %v38, %v145
  %v147 = vpop.f32.mrf.mxu0
  %v148 = vpop.f32.mrf.mxu0
  %v149 = vadd.f32 %v38, %v148
  %v150 = vpop.f32.mrf.mxu0
  %151 = vmatprep.mubr.bf16.mxu0 0
  %152 = vmatmul.mubr.bf16.gmra.mxu0 %v91
  %v153 = vpop.f32.mrf.mxu0
  %v154 = vadd.f32 %v38, %v153
  %v155 = vpop.f32.mrf.mxu0
  %v156 = vpop.f32.mrf.mxu0
  %v157 = vadd.f32 %v38, %v156
  %v158 = vpop.f32.mrf.mxu0
  %159 = vmatprep.mubr.bf16.mxu0 0
  %160 = vmatmul.mubr.bf16.gmra.mxu0 %v94
  %v161 = vpop.f32.mrf.mxu0
  %v162 = vadd.f32 %v38, %v161
  %v163 = vpop.f32.mrf.mxu0
  %v164 = vpop.f32.mrf.mxu0
  %v165 = vadd.f32 %v38, %v164
  %v166 = vpop.f32.mrf.mxu0
  %167 = vmatprep.mubr.bf16.mxu0 0
  %168 = vmatmul.mubr.bf16.gmra.mxu0 %v97
  %v169 = vpop.f32.mrf.mxu0
  %v170 = vadd.f32 %v38, %v169
  %v171 = vpop.f32.mrf.mxu0
  %v172 = vpop.f32.mrf.mxu0
  %v173 = vadd.f32 %v38, %v172
  %v174 = vpop.f32.mrf.mxu0
  %175 = vmatprep.mubr.bf16.mxu0 0
  %176 = vmatmul.mubr.bf16.gmra.mxu0 %v100
  %v177 = vpop.f32.mrf.mxu0
  %v178 = vadd.f32 %v38, %v177
  %v179 = vpop.f32.mrf.mxu0
  %v180 = vpop.f32.mrf.mxu0
  %v181 = vadd.f32 %v38, %v180
  %v182 = vpop.f32.mrf.mxu0
  %183 = vmatprep.mubr.bf16.mxu0 0
  %184 = vmatmul.mubr.bf16.gmra.mxu0 %v103
  %v185 = vpop.f32.mrf.mxu0
  %v186 = vadd.f32 %v38, %v185
  %v187 = vpop.f32.mrf.mxu0
  %v188 = vpop.f32.mrf.mxu0
  %v189 = vadd.f32 %v38, %v188
  %v190 = vpop.f32.mrf.mxu0
  %191 = vmatprep.mubr.bf16.mxu0 0
  %192 = vmatmul.mubr.bf16.gmra.mxu0 %v106
  %v193 = vpop.f32.mrf.mxu0
  %v194 = vadd.f32 %v38, %v193
  %v195 = vpop.f32.mrf.mxu0
  %v196 = vpop.f32.mrf.mxu0
  %v197 = vadd.f32 %v38, %v196
  %v198 = vpop.f32.mrf.mxu0
  %199 = vmatprep.mubr.bf16.mxu0 0
  %200 = vmatmul.mubr.bf16.gmra.mxu0 %v109
  %v201 = vpop.f32.mrf.mxu0
  %v202 = vadd.f32 %v38, %v201
  %v203 = vpop.f32.mrf.mxu0
  %v204 = vpop.f32.mrf.mxu0
  %v205 = vadd.f32 %v38, %v204
  %v206 = vpop.f32.mrf.mxu0
  %207 = vdwg.mxu0
  %v208 = vmax.f32 %v146, 0.0
  %v209 = vmax.f32 %v149, 0.0
  %v210 = vmax.f32 %v154, 0.0
  %v211 = vmax.f32 %v157, 0.0
  %v212 = vmax.f32 %v162, 0.0
  %v213 = vmax.f32 %v165, 0.0
  %v214 = vmax.f32 %v170, 0.0
  %v215 = vmax.f32 %v173, 0.0
  %v216 = vmax.f32 %v178, 0.0
  %v217 = vmax.f32 %v181, 0.0
  %v218 = vmax.f32 %v186, 0.0
  %v219 = vmax.f32 %v189, 0.0
  %v220 = vmax.f32 %v194, 0.0
  %v221 = vmax.f32 %v197, 0.0
  %v222 = vmax.f32 %v202, 0.0
  %v223 = vmax.f32 %v205, 0.0
  %v224 = vpack.c.bf16 %v209, %v208
  %v225 = vpack.c.bf16 %v211, %v210
  %v226 = vpack.c.bf16 %v213, %v212
  %v227 = vpack.c.bf16 %v215, %v214
  %v228 = vpack.c.bf16 %v217, %v216
  %v229 = vpack.c.bf16 %v219, %v218
  %v230 = vpack.c.bf16 %v221, %v220
  %v231 = vpack.c.bf16 %v223, %v222
  %v240 = vunpack.c.l.b16 %v224
  %v241 = vunpack.c.h.b16 %v224
  %v242 = vunpack.c.l.b16 %v225
  %v243 = vunpack.c.h.b16 %v225
  %v244 = vunpack.c.l.b16 %v226
  %v245 = vunpack.c.h.b16 %v226
  %v246 = vunpack.c.l.b16 %v227
  %v247 = vunpack.c.h.b16 %v227
  %v248 = vunpack.c.l.b16 %v228
  %v249 = vunpack.c.h.b16 %v228
  %v250 = vunpack.c.l.b16 %v229
  %v251 = vunpack.c.h.b16 %v229
  %v252 = vunpack.c.l.b16 %v230
  %v253 = vunpack.c.h.b16 %v230
  %v254 = vunpack.c.l.b16 %v231
  %v255 = vunpack.c.h.b16 %v231
  %v256 = vpack.c.b16 %v240, %v240
  %v257 = vpack.c.b16 %v241, %v241
  %v258 = vpack.c.b16 %v242, %v242
  %v259 = vpack.c.b16 %v243, %v243
  %v260 = vpack.c.b16 %v244, %v244
  %v261 = vpack.c.b16 %v245, %v245
  %v262 = vpack.c.b16 %v246, %v246
  %v263 = vpack.c.b16 %v247, %v247
  %v264 = vpack.c.b16 %v248, %v248
  %v265 = vpack.c.b16 %v249, %v249
  %v266 = vpack.c.b16 %v250, %v250
  %v267 = vpack.c.b16 %v251, %v251
  %v268 = vpack.c.b16 %v252, %v252
  %v269 = vpack.c.b16 %v253, %v253
  %v270 = vpack.c.b16 %v254, %v254
  %v271 = vpack.c.b16 %v255, %v255
  %288 = vst [vmem:[%s3] sm:$0xf] %v256
  %289 = vst [vmem:[%s3 + $0x4] sm:$0xf] %v257
  %290 = vst [vmem:[%s3 + $0x8] sm:$0xf] %v258
  %291 = vst [vmem:[%s3 + $0xc] sm:$0xf] %v259
  %292 = vst [vmem:[%s3 + $0x10] sm:$0xf] %v260
  %293 = vst [vmem:[%s3 + $0x14] sm:$0xf] %v261
  %294 = vst [vmem:[%s3 + $0x18] sm:$0xf] %v262
  %295 = vst [vmem:[%s3 + $0x1c] sm:$0xf] %v263
  %296 = vst [vmem:[%s3 + $0x20] sm:$0xf] %v264
  %297 = vst [vmem:[%s3 + $0x24] sm:$0xf] %v265
  %298 = vst [vmem:[%s3 + $0x28] sm:$0xf] %v266
  %299 = vst [vmem:[%s3 + $0x2c] sm:$0xf] %v267
  %300 = vst [vmem:[%s3 + $0x30] sm:$0xf] %v268
  %301 = vst [vmem:[%s3 + $0x34] sm:$0xf] %v269
  %302 = vst [vmem:[%s3 + $0x38] sm:$0xf] %v270
  %303 = vst [vmem:[%s3 + $0x3c] sm:$0xf] %v271
  // Predicated region
  $region14: #{encoder_forward.3} parent=0 // pred_check
    _
  $region15: #{encoder_forward.3} parent=0 // pred_check_branch
    %305 = sbr.rel (0) target = $region17
  $region16: #{encoder_forward.3} parent=0 // pred_region
    _
  $region17: #{encoder_forward.3} parent=0 // pred_fallthru
    _
  // Predicated region
  $region18: #{encoder_forward.3} parent=0 // pred_check
    _
  $region19: #{encoder_forward.3} parent=0 // pred_check_branch
    %307 = sbr.rel (0) target = $region21
  $region20: #{encoder_forward.3} parent=0 // pred_region
    _
  $region21: #{encoder_forward.3} parent=0 // pred_fallthru
    _

// kernel: encoder_forward.4
$region0: #{encoder_forward.4}
  #allocation0 [shape = 'u32[]', space=smem, size = 0x4, offset = 0x4, fixed_abs, tag = 'smem constant byte address 0x4 - core index']
  #allocation1 [shape = 'u32[144,128]{1,0:T(1,128)}', space=vmem, size = 0x12000, scoped, tag = 'internal scratch']
  %s0 = inlined_call_operand.vmem [shape: bf16[2,30,128], index: 0, kind: input, shape index: {}]
  %s1 = inlined_call_operand.vmem [shape: bf16[2,30,128], index: 1, kind: input, shape index: {}]
  %s2 = inlined_call_operand.vmem [shape: bf16[2,30,128], index: 2, kind: input, shape index: {}]
  %s3 = inlined_call_operand.vmem [shape: bf16[2,30,128], index: 3, kind: input, shape index: {}]
  %s4 = inlined_call_operand.vmem [shape: bf16[9,128,128], index: 4, kind: input, shape index: {}]
  %s5 = inlined_call_operand.vmem [shape: f32[1,128], index: 5, kind: input, shape index: {}]
  %s6 = inlined_call_operand.vmem [shape: bf16[2,20,128], index: 6, kind: output, shape index: {}]
  %s7 = sld [smem:[#allocation0]]
  $region57: #{encoder_forward.4} parent=0
    _
  %s9 = ssub.s32 1, %s7
  %s10 = scalar_select 0, %s9, %s7
  loop: start=0, step=1, limit=4
  $region2: #{encoder_forward.4} parent=0 // loop_pre_header
    _
  $region3: #{encoder_forward.4} parent=0 // loop_header
    %s12 = sphi 0, %s16
    %p13 = scmp.ge.s32.totalorder %s12, 4
    %s22 = sphi 0, %s24
    %s25 = sphi 0, %s22
    %s26 = sphi 0, %s25
    %s42 = sphi 0, %s26
    %s48 = sphi 0, %s50
    %s51 = sphi 0, %s48
    %s52 = sphi 0, %s51
    %s68 = sphi 0, %s52
    %s74 = sphi 0, %s76
    %s77 = sphi 0, %s74
    %s78 = sphi 0, %s77
    %s94 = sphi 0, %s78
    %s100 = sphi 0, %s102
    %s103 = sphi 0, %s100
    %s104 = sphi 0, %s103
    %s120 = sphi 0, %s104
    %s124 = sphi 0, %s124
    %s126 = sphi 0, %s124
    %s127 = sphi 0, %s126
    %s141 = sphi 0, %s127
    %s145 = sphi 0, %s145
    %s147 = sphi 0, %s145
    %s148 = sphi 0, %s147
    %s162 = sphi 0, %s148
    %s168 = sphi 0, %s170
    %s171 = sphi 0, %s168
    %s172 = sphi 0, %s171
    %s188 = sphi 0, %s172
  $region4: #{encoder_forward.4} parent=0 // loop_header_branch
    %15 = sbr.rel (%p13) target = $region8
  $region5: #{encoder_forward.4} parent=0 // loop_body
    %s17 = ssub.s32 %s12, 1
    %s18 = ssub.s32 %s12, 2
    %s19 = sadd.s32 %s12, 1
    %s20 = ssub.s32 %s12, %s19
    %p21 = scmp.eq.s32.totalorder %s20, 0
    %s23 = sadd.s32 %s22, 1
    %s24 = scalar_select %p21, %s22, %s23
    %p27 = pneg %p21
    %p28 = scmp.eq.s32.totalorder %s12, 1
    %p29 = por %p27, %p28
    %p30 = scmp.ne.s32.totalorder %s22, %s25
    %p31 = scmp.eq.s32.totalorder %s12, 0
    %p32 = por %p30, %p31
    %p33 = scmp.ne.s32.totalorder %s22, %s25
    %p34 = scmp.eq.s32.totalorder %s17, 1
    %p35 = por %p33, %p34
    %p36 = scmp.ne.s32.totalorder %s25, %s26
    %p37 = scmp.eq.s32.totalorder %s17, 0
    %p38 = por %p36, %p37
    %p39 = scmp.ne.s32.totalorder %s25, %s26
    %p40 = scmp.eq.s32.totalorder %s18, 1
    %p41 = por %p39, %p40
    %p43 = scmp.ne.s32.totalorder %s26, %s42
    %p44 = scmp.eq.s32.totalorder %s18, 0
    %p45 = por %p43, %p44
    %s46 = ssub.s32 %s12, %s19
    %p47 = scmp.eq.s32.totalorder %s46, 0
    %s49 = sadd.s32 %s48, 1
    %s50 = scalar_select %p47, %s48, %s49
    %p53 = pneg %p47
    %p54 = scmp.eq.s32.totalorder %s12, 1
    %p55 = por %p53, %p54
    %p56 = scmp.ne.s32.totalorder %s48, %s51
    %p57 = scmp.eq.s32.totalorder %s12, 0
    %p58 = por %p56, %p57
    %p59 = scmp.ne.s32.totalorder %s48, %s51
    %p60 = scmp.eq.s32.totalorder %s17, 1
    %p61 = por %p59, %p60
    %p62 = scmp.ne.s32.totalorder %s51, %s52
    %p63 = scmp.eq.s32.totalorder %s17, 0
    %p64 = por %p62, %p63
    %p65 = scmp.ne.s32.totalorder %s51, %s52
    %p66 = scmp.eq.s32.totalorder %s18, 1
    %p67 = por %p65, %p66
    %p69 = scmp.ne.s32.totalorder %s52, %s68
    %p70 = scmp.eq.s32.totalorder %s18, 0
    %p71 = por %p69, %p70
    %s72 = ssub.s32 %s12, %s19
    %p73 = scmp.eq.s32.totalorder %s72, 0
    %s75 = sadd.s32 %s74, 1
    %s76 = scalar_select %p73, %s74, %s75
    %p79 = pneg %p73
    %p80 = scmp.eq.s32.totalorder %s12, 1
    %p81 = por %p79, %p80
    %p82 = scmp.ne.s32.totalorder %s74, %s77
    %p83 = scmp.eq.s32.totalorder %s12, 0
    %p84 = por %p82, %p83
    %p85 = scmp.ne.s32.totalorder %s74, %s77
    %p86 = scmp.eq.s32.totalorder %s17, 1
    %p87 = por %p85, %p86
    %p88 = scmp.ne.s32.totalorder %s77, %s78
    %p89 = scmp.eq.s32.totalorder %s17, 0
    %p90 = por %p88, %p89
    %p91 = scmp.ne.s32.totalorder %s77, %s78
    %p92 = scmp.eq.s32.totalorder %s18, 1
    %p93 = por %p91, %p92
    %p95 = scmp.ne.s32.totalorder %s78, %s94
    %p96 = scmp.eq.s32.totalorder %s18, 0
    %p97 = por %p95, %p96
    %s98 = ssub.s32 %s12, %s19
    %p99 = scmp.eq.s32.totalorder %s98, 0
    %s101 = sadd.s32 %s100, 1
    %s102 = scalar_select %p99, %s100, %s101
    %p105 = pneg %p99
    %p106 = scmp.eq.s32.totalorder %s12, 1
    %p107 = por %p105, %p106
    %p108 = scmp.ne.s32.totalorder %s100, %s103
    %p109 = scmp.eq.s32.totalorder %s12, 0
    %p110 = por %p108, %p109
    %p111 = scmp.ne.s32.totalorder %s100, %s103
    %p112 = scmp.eq.s32.totalorder %s17, 1
    %p113 = por %p111, %p112
    %p114 = scmp.ne.s32.totalorder %s103, %s104
    %p115 = scmp.eq.s32.totalorder %s17, 0
    %p116 = por %p114, %p115
    %p117 = scmp.ne.s32.totalorder %s103, %s104
    %p118 = scmp.eq.s32.totalorder %s18, 1
    %p119 = por %p117, %p118
    %p121 = scmp.ne.s32.totalorder %s104, %s120
    %p122 = scmp.eq.s32.totalorder %s18, 0
    %p123 = por %p121, %p122
    %s125 = sadd.s32 %s124, 1
    %p128 = scmp.eq.s32.totalorder %s12, 1
    %p129 = scmp.ne.s32.totalorder %s124, %s126
    %p130 = scmp.eq.s32.totalorder %s12, 0
    %p131 = por %p129, %p130
    %p132 = scmp.ne.s32.totalorder %s124, %s126
    %p133 = scmp.eq.s32.totalorder %s17, 1
    %p134 = por %p132, %p133
    %p135 = scmp.ne.s32.totalorder %s126, %s127
    %p136 = scmp.eq.s32.totalorder %s17, 0
    %p137 = por %p135, %p136
    %p138 = scmp.ne.s32.totalorder %s126, %s127
    %p139 = scmp.eq.s32.totalorder %s18, 1
    %p140 = por %p138, %p139
    %p142 = scmp.ne.s32.totalorder %s127, %s141
    %p143 = scmp.eq.s32.totalorder %s18, 0
    %p144 = por %p142, %p143
    %s146 = sadd.s32 %s145, 1
    %p149 = scmp.eq.s32.totalorder %s12, 1
    %p150 = scmp.ne.s32.totalorder %s145, %s147
    %p151 = scmp.eq.s32.totalorder %s12, 0
    %p152 = por %p150, %p151
    %p153 = scmp.ne.s32.totalorder %s145, %s147
    %p154 = scmp.eq.s32.totalorder %s17, 1
    %p155 = por %p153, %p154
    %p156 = scmp.ne.s32.totalorder %s147, %s148
    %p157 = scmp.eq.s32.totalorder %s17, 0
    %p158 = por %p156, %p157
    %p159 = scmp.ne.s32.totalorder %s147, %s148
    %p160 = scmp.eq.s32.totalorder %s18, 1
    %p161 = por %p159, %p160
    %p163 = scmp.ne.s32.totalorder %s148, %s162
    %p164 = scmp.eq.s32.totalorder %s18, 0
    %p165 = por %p163, %p164
    %s166 = ssub.s32 %s12, %s19
    %p167 = scmp.eq.s32.totalorder %s166, 0
    %s169 = sadd.s32 %s168, 1
    %s170 = scalar_select %p167, %s168, %s169
    %p173 = pneg %p167
    %p174 = scmp.eq.s32.totalorder %s12, 1
    %p175 = por %p173, %p174
    %p176 = scmp.ne.s32.totalorder %s168, %s171
    %p177 = scmp.eq.s32.totalorder %s12, 0
    %p178 = por %p176, %p177
    %p179 = scmp.ne.s32.totalorder %s168, %s171
    %p180 = scmp.eq.s32.totalorder %s17, 1
    %p181 = por %p179, %p180
    %p182 = scmp.ne.s32.totalorder %s171, %s172
    %p183 = scmp.eq.s32.totalorder %s17, 0
    %p184 = por %p182, %p183
    %p185 = scmp.ne.s32.totalorder %s171, %s172
    %p186 = scmp.eq.s32.totalorder %s18, 1
    %p187 = por %p185, %p186
    %p189 = scmp.ne.s32.totalorder %s172, %s188
    %p190 = scmp.eq.s32.totalorder %s18, 0
    %p191 = por %p189, %p190
    %p192 = scmp.le.s32.totalorder 1, %s12
    %p193 = scmp.lt.s32.totalorder %s12, 3
    %p194 = pnand %p192, %p193
    %p195 = pneg %p194
    // Predicated region
    $region9: #{encoder_forward.4} parent=5 // pred_check
      _
    $region10: #{encoder_forward.4} parent=5 // pred_check_branch
      %197 = sbr.rel (%p194) target = $region12
    $region11: #{encoder_forward.4} parent=5 // pred_region
      %s198 = ssub.s32 %s12, 1
      // Predicated region
      $region13: #{encoder_forward.4} parent=11 // pred_check
        %p199 = pneg %p137
      $region14: #{encoder_forward.4} parent=11 // pred_check_branch
        %201 = sbr.rel (%p199) target = $region16
      $region15: #{encoder_forward.4} parent=11 // pred_region
        _
      $region16: #{encoder_forward.4} parent=11 // pred_fallthru
        _
      // Predicated region
      $region17: #{encoder_forward.4} parent=11 // pred_check
        %p202 = pneg %p158
      $region18: #{encoder_forward.4} parent=11 // pred_check_branch
        %204 = sbr.rel (%p202) target = $region20
      $region19: #{encoder_forward.4} parent=11 // pred_region
        _
      $region20: #{encoder_forward.4} parent=11 // pred_fallthru
        _
    $region12: #{encoder_forward.4} parent=5 // pred_fallthru
      _
    %p205 = scmp.lt.s32.totalorder %s12, 2
    // Predicated region
    $region21: #{encoder_forward.4} parent=5 // pred_check
      %p206 = pneg %p205
    $region22: #{encoder_forward.4} parent=5 // pred_check_branch
      %208 = sbr.rel (%p206) target = $region24
    $region23: #{encoder_forward.4} parent=5 // pred_region
      // Predicated region
      $region25: #{encoder_forward.4} parent=23 // pred_check
        %p209 = pneg %p32
      $region26: #{encoder_forward.4} parent=23 // pred_check_branch
        %211 = sbr.rel (%p209) target = $region28
      $region27: #{encoder_forward.4} parent=23 // pred_region
        %p212 = scmp.lt.s32.totalorder %s12, 1
        %s213 = scalar_select %p212, %s12, 1
        %s214 = smul.addr %s213, 4
        %s215 = smul.addr %s214, 4
        %s216 = scalar_lea.vmem %s0, %s215
      $region28: #{encoder_forward.4} parent=23 // pred_fallthru
        _
      // Predicated region
      $region29: #{encoder_forward.4} parent=23 // pred_check
        %p217 = pneg %p58
      $region30: #{encoder_forward.4} parent=23 // pred_check_branch
        %219 = sbr.rel (%p217) target = $region32
      $region31: #{encoder_forward.4} parent=23 // pred_region
        %p220 = scmp.lt.s32.totalorder %s12, 1
        %s221 = scalar_select %p220, %s12, 1
        %s222 = smul.addr %s221, 4
        %s223 = smul.addr %s222, 4
        %s224 = scalar_lea.vmem %s1, %s223
      $region32: #{encoder_forward.4} parent=23 // pred_fallthru
        _
      // Predicated region
      $region33: #{encoder_forward.4} parent=23 // pred_check
        %p225 = pneg %p84
      $region34: #{encoder_forward.4} parent=23 // pred_check_branch
        %227 = sbr.rel (%p225) target = $region36
      $region35: #{encoder_forward.4} parent=23 // pred_region
        %p228 = scmp.lt.s32.totalorder %s12, 1
        %s229 = scalar_select %p228, %s12, 1
        %s230 = smul.addr %s229, 4
        %s231 = smul.addr %s230, 4
        %s232 = scalar_lea.vmem %s2, %s231
      $region36: #{encoder_forward.4} parent=23 // pred_fallthru
        _
      // Predicated region
      $region37: #{encoder_forward.4} parent=23 // pred_check
        %p233 = pneg %p110
      $region38: #{encoder_forward.4} parent=23 // pred_check_branch
        %235 = sbr.rel (%p233) target = $region40
      $region39: #{encoder_forward.4} parent=23 // pred_region
        %p236 = scmp.lt.s32.totalorder %s12, 1
        %s237 = scalar_select %p236, %s12, 1
        %s238 = smul.addr %s237, 4
        %s239 = smul.addr %s238, 4
        %s240 = scalar_lea.vmem %s3, %s239
      $region40: #{encoder_forward.4} parent=23 // pred_fallthru
        _
    $region24: #{encoder_forward.4} parent=5 // pred_fallthru
      _
    %p241 = scmp.le.s32.totalorder 1, %s12
    %p242 = scmp.lt.s32.totalorder %s12, 3
    %p243 = pnand %p241, %p242
    %p244 = pneg %p243
    // Predicated region
    $region41: #{encoder_forward.4} parent=5 // pred_check
      _
    $region42: #{encoder_forward.4} parent=5 // pred_check_branch
      %246 = sbr.rel (%p243) target = $region44
    $region43: #{encoder_forward.4} parent=5 // pred_region
      %s247 = ssub.s32 %s12, 1
      %p248 = scmp.lt.s32.totalorder %s17, 1
      %s249 = scalar_select %p248, %s17, 1
      %s250 = smul.addr %s249, 4
      %s251 = smul.addr %s250, 4
      %s252 = scalar_lea.vmem %s0, %s251
      %p253 = pneg %p38
      %p254 = pneg %p35
      %p255 = scmp.lt.s32.totalorder %s17, 1
      %s256 = scalar_select %p255, %s17, 1
      %s257 = smul.addr %s256, 4
      %s258 = smul.addr %s257, 4
      %s259 = scalar_lea.vmem %s1, %s258
      %p260 = pneg %p64
      %p261 = pneg %p61
      %p262 = scmp.lt.s32.totalorder %s17, 1
      %s263 = scalar_select %p262, %s17, 1
      %s264 = smul.addr %s263, 4
      %s265 = smul.addr %s264, 4
      %s266 = scalar_lea.vmem %s2, %s265
      %p267 = pneg %p90
      %p268 = pneg %p87
      %p269 = scmp.lt.s32.totalorder %s17, 1
      %s270 = scalar_select %p269, %s17, 1
      %s271 = smul.addr %s270, 4
      %s272 = smul.addr %s271, 4
      %s273 = scalar_lea.vmem %s3, %s272
      %p274 = pneg %p116
      %p275 = pneg %p113
      %p276 = pneg %p137
      %p277 = pneg %p134
      %p278 = pneg %p158
      %p279 = pneg %p155
      %p280 = pneg %p184
      %p281 = pneg %p181
      %p282 = scmp.lt.s32.totalorder %s17, 1
      %s283 = scalar_select %p282, %s17, 1
      %s284 = smul.addr %s283, 3
      %s285 = smul.addr %s284, 4
      %s286 = scalar_lea.vmem %s6, %s285
      %p287 = scmp.lt.s32.totalorder %s17, 1
      %s288 = scalar_select %p287, %s17, 1
      %s289 = smul.addr %s288, 4
      %s290 = smul.addr %s289, 4
      %s291 = scalar_lea.vmem %s0, %s290
      %p292 = scmp.lt.s32.totalorder %s17, 1
      %s293 = scalar_select %p292, %s17, 1
      %s294 = smul.addr %s293, 4
      %s295 = smul.addr %s294, 4
      %s296 = scalar_lea.vmem %s1, %s295
      %p297 = scmp.lt.s32.totalorder %s17, 1
      %s298 = scalar_select %p297, %s17, 1
      %s299 = smul.addr %s298, 4
      %s300 = smul.addr %s299, 4
      %s301 = scalar_lea.vmem %s2, %s300
      %p302 = scmp.lt.s32.totalorder %s17, 1
      %s303 = scalar_select %p302, %s17, 1
      %s304 = smul.addr %s303, 4
      %s305 = smul.addr %s304, 4
      %s306 = scalar_lea.vmem %s3, %s305
      %p307 = scmp.lt.s32.totalorder %s17, 1
      %s308 = scalar_select %p307, %s17, 1
      %s309 = smul.addr %s308, 3
      %s310 = smul.addr %s309, 4
      %s311 = scalar_lea.vmem %s6, %s310
      %v313 = vld [vmem:[%s291] sm:$0xf]
      %v314 = vld [vmem:[%s291 + $0x4] sm:$0xf]
      %v315 = vld [vmem:[%s291 + $0x8] sm:$0x3]
      %v316 = vld [vmem:[%s4] sm:$0xf]
      %v317 = vld [vmem:[%s4 + $0x4] sm:$0xf]
      %v318 = vld [vmem:[%s4 + $0x8] sm:$0xf]
      %v319 = vld [vmem:[%s4 + $0xc] sm:$0xf]
      %v320 = vld [vmem:[%s4 + $0x10] sm:$0xf]
      %v321 = vld [vmem:[%s4 + $0x14] sm:$0xf]
      %v322 = vld [vmem:[%s4 + $0x18] sm:$0xf]
      %v323 = vld [vmem:[%s4 + $0x1c] sm:$0xf]
      %v324 = vld [vmem:[%s4 + $0x20] sm:$0xf]
      %v325 = vld [vmem:[%s4 + $0x24] sm:$0xf]
      %v326 = vld [vmem:[%s4 + $0x28] sm:$0xf]
      %v327 = vld [vmem:[%s4 + $0x2c] sm:$0xf]
      %v328 = vld [vmem:[%s4 + $0x30] sm:$0xf]
      %v329 = vld [vmem:[%s4 + $0x34] sm:$0xf]
      %v330 = vld [vmem:[%s4 + $0x38] sm:$0xf]
      %v331 = vld [vmem:[%s4 + $0x3c] sm:$0xf]
      %v332 = vld [vmem:[%s296] sm:$0xf]
      %v333 = vld [vmem:[%s296 + $0x4] sm:$0xf]
      %v334 = vld [vmem:[%s296 + $0x8] sm:$0x3]
      %s335 = scalar_lea.vmem %s4, 64
      %v336 = vld [vmem:[%s335] sm:$0xf]
      %v337 = vld [vmem:[%s335 + $0x4] sm:$0xf]
      %v338 = vld [vmem:[%s335 + $0x8] sm:$0xf]
      %v339 = vld [vmem:[%s335 + $0xc] sm:$0xf]
      %v340 = vld [vmem:[%s335 + $0x10] sm:$0xf]
      %v341 = vld [vmem:[%s335 + $0x14] sm:$0xf]
      %v342 = vld [vmem:[%s335 + $0x18] sm:$0xf]
      %v343 = vld [vmem:[%s335 + $0x1c] sm:$0xf]
      %v344 = vld [vmem:[%s335 + $0x20] sm:$0xf]
      %v345 = vld [vmem:[%s335 + $0x24] sm:$0xf]
      %v346 = vld [vmem:[%s335 + $0x28] sm:$0xf]
      %v347 = vld [vmem:[%s335 + $0x2c] sm:$0xf]
      %v348 = vld [vmem:[%s335 + $0x30] sm:$0xf]
      %v349 = vld [vmem:[%s335 + $0x34] sm:$0xf]
      %v350 = vld [vmem:[%s335 + $0x38] sm:$0xf]
      %v351 = vld [vmem:[%s335 + $0x3c] sm:$0xf]
      %v355 = vunpack.c.l.b16 %v332
      %v356 = vunpack.c.l.b16 %v333
      %v357 = vunpack.c.l.b16 %v334
      %v358 = vpack.c.b16 %v356, %v355
      %v359 = vpack.c.b16 %v357, %v357
      %v378 = vunpack.c.l.b16 %v336
      %v379 = vunpack.c.l.b16 %v337
      %v380 = vunpack.c.l.b16 %v338
      %v381 = vunpack.c.l.b16 %v339
      %v382 = vunpack.c.l.b16 %v340
      %v383 = vunpack.c.l.b16 %v341
      %v384 = vunpack.c.l.b16 %v342
      %v385 = vunpack.c.l.b16 %v343
      %v386 = vunpack.c.l.b16 %v344
      %v387 = vunpack.c.l.b16 %v345
      %v388 = vunpack.c.l.b16 %v346
      %v389 = vunpack.c.l.b16 %v347
      %v390 = vunpack.c.l.b16 %v348
      %v391 = vunpack.c.l.b16 %v349
      %v392 = vunpack.c.l.b16 %v350
      %v393 = vunpack.c.l.b16 %v351
      %v394 = vpack.c.b16 %v379, %v378
      %v395 = vpack.c.b16 %v381, %v380
      %v396 = vpack.c.b16 %v383, %v382
      %v397 = vpack.c.b16 %v385, %v384
      %v398 = vpack.c.b16 %v387, %v386
      %v399 = vpack.c.b16 %v389, %v388
      %v400 = vpack.c.b16 %v391, %v390
      %v401 = vpack.c.b16 %v393, %v392
      %410 = vmatprep.subr.bf16.mxu0 0
      %411 = vmatpush1.bf16.msra.mxu0 %v401
      %412 = vmatprep.subr.bf16.mxu0 0
      %413 = vmatpush1.bf16.msra.mxu0 %v400
      %414 = vmatprep.subr.bf16.mxu0 0
      %415 = vmatpush1.bf16.msra.mxu0 %v399
      %416 = vmatprep.subr.bf16.mxu0 0
      %417 = vmatpush1.bf16.msra.mxu0 %v398
      %418 = vmatprep.subr.bf16.mxu0 0
      %419 = vmatpush1.bf16.msra.mxu0 %v397
      %420 = vmatprep.subr.bf16.mxu0 0
      %421 = vmatpush1.bf16.msra.mxu0 %v396
      %422 = vmatprep.subr.bf16.mxu0 0
      %423 = vmatpush1.bf16.msra.mxu0 %v395
      %424 = vmatprep.subr.bf16.mxu0 0
      %425 = vmatpush1.bf16.msra.mxu0 %v394
      %426 = vmatprep.subr.bf16.mxu0 0
      %427 = vmatpush2.bf16.msra.mxu0 0
      %428 = vmatprep.subr.bf16.mxu0 0
      %429 = vmatpush2.bf16.msra.mxu0 0
      %430 = vmatprep.subr.bf16.mxu0 0
      %431 = vmatpush2.bf16.msra.mxu0 0
      %432 = vmatprep.subr.bf16.mxu0 0
      %433 = vmatpush2.bf16.msra.mxu0 0
      %434 = vmatprep.subr.bf16.mxu0 0
      %435 = vmatpush2.bf16.msra.mxu0 0
      %436 = vmatprep.subr.bf16.mxu0 0
      %437 = vmatpush2.bf16.msra.mxu0 0
      %438 = vmatprep.subr.bf16.mxu0 0
      %439 = vmatpush2.bf16.msra.mxu0 0
      %440 = vmatprep.subr.bf16.mxu0 0
      %441 = vmatpush2.bf16.msra.mxu0 0
      %442 = vmatprep.mubr.bf16.mxu0 0
      %443 = vmatmul.mubr.bf16.gmra.mxu0 %v358
      %v444 = vpop.f32.mrf.mxu0
      %v445 = vadd.f32 0.0, %v444
      %v446 = vpop.f32.mrf.mxu0
      %v447 = vpop.f32.mrf.mxu0
      %v448 = vadd.f32 0.0, %v447
      %v449 = vpop.f32.mrf.mxu0
      %450 = vmatprep.mubr.bf16.mxu0 0
      %451 = vmatmul.mubr.bf16.gmra.mxu0 %v359
      %v452 = vpop.f32.mrf.mxu0
      %v453 = vadd.f32 0.0, %v452
      %v454 = vpop.f32.mrf.mxu0
      %v455 = vpop.f32.mrf.mxu0
      %v456 = vpop.f32.mrf.mxu0
      %457 = vdwg.mxu0
      %v461 = vunpack.c.l.b16 %v313
      %v462 = vunpack.c.l.b16 %v314
      %v463 = vunpack.c.l.b16 %v315
      %v464 = vpack.c.b16 %v462, %v461
      %v465 = vpack.c.b16 %v463, %v463
      %v484 = vunpack.c.l.b16 %v316
      %v485 = vunpack.c.l.b16 %v317
      %v486 = vunpack.c.l.b16 %v318
      %v487 = vunpack.c.l.b16 %v319
      %v488 = vunpack.c.l.b16 %v320
      %v489 = vunpack.c.l.b16 %v321
      %v490 = vunpack.c.l.b16 %v322
      %v491 = vunpack.c.l.b16 %v323
      %v492 = vunpack.c.l.b16 %v324
      %v493 = vunpack.c.l.b16 %v325
      %v494 = vunpack.c.l.b16 %v326
      %v495 = vunpack.c.l.b16 %v327
      %v496 = vunpack.c.l.b16 %v328
      %v497 = vunpack.c.l.b16 %v329
      %v498 = vunpack.c.l.b16 %v330
      %v499 = vunpack.c.l.b16 %v331
      %v500 = vpack.c.b16 %v485, %v484
      %v501 = vpack.c.b16 %v487, %v486
      %v502 = vpack.c.b16 %v489, %v488
      %v503 = vpack.c.b16 %v491, %v490
      %v504 = vpack.c.b16 %v493, %v492
      %v505 = vpack.c.b16 %v495, %v494
      %v506 = vpack.c.b16 %v497, %v496
      %v507 = vpack.c.b16 %v499, %v498
      %516 = vmatprep.subr.bf16.mxu0 0
      %517 = vmatpush1.bf16.msra.mxu0 %v507
      %518 = vmatprep.subr.bf16.mxu0 0
      %519 = vmatpush1.bf16.msra.mxu0 %v506
      %520 = vmatprep.subr.bf16.mxu0 0
      %521 = vmatpush1.bf16.msra.mxu0 %v505
      %522 = vmatprep.subr.bf16.mxu0 0
      %523 = vmatpush1.bf16.msra.mxu0 %v504
      %524 = vmatprep.subr.bf16.mxu0 0
      %525 = vmatpush1.bf16.msra.mxu0 %v503
      %526 = vmatprep.subr.bf16.mxu0 0
      %527 = vmatpush1.bf16.msra.mxu0 %v502
      %528 = vmatprep.subr.bf16.mxu0 0
      %529 = vmatpush1.bf16.msra.mxu0 %v501
      %530 = vmatprep.subr.bf16.mxu0 0
      %531 = vmatpush1.bf16.msra.mxu0 %v500
      %532 = vmatprep.subr.bf16.mxu0 0
      %533 = vmatpush2.bf16.msra.mxu0 0
      %534 = vmatprep.subr.bf16.mxu0 0
      %535 = vmatpush2.bf16.msra.mxu0 0
      %536 = vmatprep.subr.bf16.mxu0 0
      %537 = vmatpush2.bf16.msra.mxu0 0
      %538 = vmatprep.subr.bf16.mxu0 0
      %539 = vmatpush2.bf16.msra.mxu0 0
      %540 = vmatprep.subr.bf16.mxu0 0
      %541 = vmatpush2.bf16.msra.mxu0 0
      %542 = vmatprep.subr.bf16.mxu0 0
      %543 = vmatpush2.bf16.msra.mxu0 0
      %544 = vmatprep.subr.bf16.mxu0 0
      %545 = vmatpush2.bf16.msra.mxu0 0
      %546 = vmatprep.subr.bf16.mxu0 0
      %547 = vmatpush2.bf16.msra.mxu0 0
      %548 = vmatprep.mubr.bf16.mxu0 0
      %549 = vmatmul.mubr.bf16.gmra.mxu0 %v464
      %v550 = vpop.f32.mrf.mxu0
      %v551 = vadd.f32 %v445, %v550
      %v552 = vpop.f32.mrf.mxu0
      %v553 = vpop.f32.mrf.mxu0
      %v554 = vadd.f32 %v448, %v553
      %v555 = vpop.f32.mrf.mxu0
      %556 = vmatprep.mubr.bf16.mxu0 0
      %557 = vmatmul.mubr.bf16.gmra.mxu0 %v465
      %v558 = vpop.f32.mrf.mxu0
      %v559 = vadd.f32 %v453, %v558
      %v560 = vpop.f32.mrf.mxu0
      %v561 = vpop.f32.mrf.mxu0
      %v562 = vpop.f32.mrf.mxu0
      %563 = vdwg.mxu0
      %v564 = vld [vmem:[%s291 + $0x8] sm:$0x7]
      %s565 = scalar_lea.vmem %s4, 128
      %v566 = vld [vmem:[%s565] sm:$0xf]
      %v567 = vld [vmem:[%s565 + $0x4] sm:$0xf]
      %v568 = vld [vmem:[%s565 + $0x8] sm:$0xf]
      %v569 = vld [vmem:[%s565 + $0xc] sm:$0xf]
      %v570 = vld [vmem:[%s565 + $0x10] sm:$0xf]
      %v571 = vld [vmem:[%s565 + $0x14] sm:$0xf]
      %v572 = vld [vmem:[%s565 + $0x18] sm:$0xf]
      %v573 = vld [vmem:[%s565 + $0x1c] sm:$0xf]
      %v574 = vld [vmem:[%s565 + $0x20] sm:$0xf]
      %v575 = vld [vmem:[%s565 + $0x24] sm:$0xf]
      %v576 = vld [vmem:[%s565 + $0x28] sm:$0xf]
      %v577 = vld [vmem:[%s565 + $0x2c] sm:$0xf]
      %v578 = vld [vmem:[%s565 + $0x30] sm:$0xf]
      %v579 = vld [vmem:[%s565 + $0x34] sm:$0xf]
      %v580 = vld [vmem:[%s565 + $0x38] sm:$0xf]
      %v581 = vld [vmem:[%s565 + $0x3c] sm:$0xf]
      %v583 = vunpack.c.l.b16 %v564
      %v584 = vpack.c.b16 %v583, %v583
      %vm585 = vsmask.f32 7424
      %v587 = vshrl.u32 %v464, 16
      %v589 = vshll.u32 %v464, 16
      %v591 = vrot.slane %v589, 1
      %v592 = vor.u32 %v587, %v591
      %v594 = vshll.u32 %v584, 16
      %v596 = vrot.slane %v594, 1
      %v597 = vsel %vm585, %v592, %v596
      %v598 = vshrl.u32 %v584, 16
      %v600 = vor.u32 %v598, %v596
      %v619 = vunpack.c.l.b16 %v566
      %v620 = vunpack.c.l.b16 %v567
      %v621 = vunpack.c.l.b16 %v568
      %v622 = vunpack.c.l.b16 %v569
      %v623 = vunpack.c.l.b16 %v570
      %v624 = vunpack.c.l.b16 %v571
      %v625 = vunpack.c.l.b16 %v572
      %v626 = vunpack.c.l.b16 %v573
      %v627 = vunpack.c.l.b16 %v574
      %v628 = vunpack.c.l.b16 %v575
      %v629 = vunpack.c.l.b16 %v576
      %v630 = vunpack.c.l.b16 %v577
      %v631 = vunpack.c.l.b16 %v578
      %v632 = vunpack.c.l.b16 %v579
      %v633 = vunpack.c.l.b16 %v580
      %v634 = vunpack.c.l.b16 %v581
      %v635 = vpack.c.b16 %v620, %v619
      %v636 = vpack.c.b16 %v622, %v621
      %v637 = vpack.c.b16 %v624, %v623
      %v638 = vpack.c.b16 %v626, %v625
      %v639 = vpack.c.b16 %v628, %v627
      %v640 = vpack.c.b16 %v630, %v629
      %v641 = vpack.c.b16 %v632, %v631
      %v642 = vpack.c.b16 %v634, %v633
      %651 = vmatprep.subr.bf16.mxu0 0
      %652 = vmatpush1.bf16.msra.mxu0 %v642
      %653 = vmatprep.subr.bf16.mxu0 0
      %654 = vmatpush1.bf16.msra.mxu0 %v641
      %655 = vmatprep.subr.bf16.mxu0 0
      %656 = vmatpush1.bf16.msra.mxu0 %v640
      %657 = vmatprep.subr.bf16.mxu0 0
      %658 = vmatpush1.bf16.msra.mxu0 %v639
      %659 = vmatprep.subr.bf16.mxu0 0
      %660 = vmatpush1.bf16.msra.mxu0 %v638
      %661 = vmatprep.subr.bf16.mxu0 0
      %662 = vmatpush1.bf16.msra.mxu0 %v637
      %663 = vmatprep.subr.bf16.mxu0 0
      %664 = vmatpush1.bf16.msra.mxu0 %v636
      %665 = vmatprep.subr.bf16.mxu0 0
      %666 = vmatpush1.bf16.msra.mxu0 %v635
      %667 = vmatprep.subr.bf16.mxu0 0
      %668 = vmatpush2.bf16.msra.mxu0 0
      %669 = vmatprep.subr.bf16.mxu0 0
      %670 = vmatpush2.bf16.msra.mxu0 0
      %671 = vmatprep.subr.bf16.mxu0 0
      %672 = vmatpush2.bf16.msra.mxu0 0
      %673 = vmatprep.subr.bf16.mxu0 0
      %674 = vmatpush2.bf16.msra.mxu0 0
      %675 = vmatprep.subr.bf16.mxu0 0
      %676 = vmatpush2.bf16.msra.mxu0 0
      %677 = vmatprep.subr.bf16.mxu0 0
      %678 = vmatpush2.bf16.msra.mxu0 0
      %679 = vmatprep.subr.bf16.mxu0 0
      %680 = vmatpush2.bf16.msra.mxu0 0
      %681 = vmatprep.subr.bf16.mxu0 0
      %682 = vmatpush2.bf16.msra.mxu0 0
      %683 = vmatprep.mubr.bf16.mxu0 0
      %684 = vmatmul.mubr.bf16.gmra.mxu0 %v597
      %v685 = vpop.f32.mrf.mxu0
      %v686 = vadd.f32 0.0, %v685
      %v687 = vpop.f32.mrf.mxu0
      %v688 = vpop.f32.mrf.mxu0
      %v689 = vadd.f32 0.0, %v688
      %v690 = vpop.f32.mrf.mxu0
      %691 = vmatprep.mubr.bf16.mxu0 0
      %692 = vmatmul.mubr.bf16.gmra.mxu0 %v600
      %v693 = vpop.f32.mrf.mxu0
      %v694 = vadd.f32 0.0, %v693
      %v695 = vpop.f32.mrf.mxu0
      %v696 = vpop.f32.mrf.mxu0
      %v697 = vpop.f32.mrf.mxu0
      %698 = vdwg.mxu0
      %v699 = vadd.f32 %v551, %v686
      %v700 = vadd.f32 %v554, %v689
      %v701 = vadd.f32 %v559, %v694
      %v702 = vld [vmem:[%s301] sm:$0xf]
      %v703 = vld [vmem:[%s301 + $0x4] sm:$0xf]
      %v704 = vld [vmem:[%s301 + $0x8] sm:$0x3]
      %s705 = scalar_lea.vmem %s4, 192
      %v706 = vld [vmem:[%s705] sm:$0xf]
      %v707 = vld [vmem:[%s705 + $0x4] sm:$0xf]
      %v708 = vld [vmem:[%s705 + $0x8] sm:$0xf]
      %v709 = vld [vmem:[%s705 + $0xc] sm:$0xf]
      %v710 = vld [vmem:[%s705 + $0x10] sm:$0xf]
      %v711 = vld [vmem:[%s705 + $0x14] sm:$0xf]
      %v712 = vld [vmem:[%s705 + $0x18] sm:$0xf]
      %v713 = vld [vmem:[%s705 + $0x1c] sm:$0xf]
      %v714 = vld [vmem:[%s705 + $0x20] sm:$0xf]
      %v715 = vld [vmem:[%s705 + $0x24] sm:$0xf]
      %v716 = vld [vmem:[%s705 + $0x28] sm:$0xf]
      %v717 = vld [vmem:[%s705 + $0x2c] sm:$0xf]
      %v718 = vld [vmem:[%s705 + $0x30] sm:$0xf]
      %v719 = vld [vmem:[%s705 + $0x34] sm:$0xf]
      %v720 = vld [vmem:[%s705 + $0x38] sm:$0xf]
      %v721 = vld [vmem:[%s705 + $0x3c] sm:$0xf]
      %v725 = vunpack.c.l.b16 %v702
      %v726 = vunpack.c.l.b16 %v703
      %v727 = vunpack.c.l.b16 %v704
      %v728 = vpack.c.b16 %v726, %v725
      %v729 = vpack.c.b16 %v727, %v727
      %v748 = vunpack.c.l.b16 %v706
      %v749 = vunpack.c.l.b16 %v707
      %v750 = vunpack.c.l.b16 %v708
      %v751 = vunpack.c.l.b16 %v709
      %v752 = vunpack.c.l.b16 %v710
      %v753 = vunpack.c.l.b16 %v711
      %v754 = vunpack.c.l.b16 %v712
      %v755 = vunpack.c.l.b16 %v713
      %v756 = vunpack.c.l.b16 %v714
      %v757 = vunpack.c.l.b16 %v715
      %v758 = vunpack.c.l.b16 %v716
      %v759 = vunpack.c.l.b16 %v717
      %v760 = vunpack.c.l.b16 %v718
      %v761 = vunpack.c.l.b16 %v719
      %v762 = vunpack.c.l.b16 %v720
      %v763 = vunpack.c.l.b16 %v721
      %v764 = vpack.c.b16 %v749, %v748
      %v765 = vpack.c.b16 %v751, %v750
      %v766 = vpack.c.b16 %v753, %v752
      %v767 = vpack.c.b16 %v755, %v754
      %v768 = vpack.c.b16 %v757, %v756
      %v769 = vpack.c.b16 %v759, %v758
      %v770 = vpack.c.b16 %v761, %v760
      %v771 = vpack.c.b16 %v763, %v762
      %780 = vmatprep.subr.bf16.mxu0 0
      %781 = vmatpush1.bf16.msra.mxu0 %v771
      %782 = vmatprep.subr.bf16.mxu0 0
      %783 = vmatpush1.bf16.msra.mxu0 %v770
      %784 = vmatprep.subr.bf16.mxu0 0
      %785 = vmatpush1.bf16.msra.mxu0 %v769
      %786 = vmatprep.subr.bf16.mxu0 0
      %787 = vmatpush1.bf16.msra.mxu0 %v768
      %788 = vmatprep.subr.bf16.mxu0 0
      %789 = vmatpush1.bf16.msra.mxu0 %v767
      %790 = vmatprep.subr.bf16.mxu0 0
      %791 = vmatpush1.bf16.msra.mxu0 %v766
      %792 = vmatprep.subr.bf16.mxu0 0
      %793 = vmatpush1.bf16.msra.mxu0 %v765
      %794 = vmatprep.subr.bf16.mxu0 0
      %795 = vmatpush1.bf16.msra.mxu0 %v764
      %796 = vmatprep.subr.bf16.mxu0 0
      %797 = vmatpush2.bf16.msra.mxu0 0
      %798 = vmatprep.subr.bf16.mxu0 0
      %799 = vmatpush2.bf16.msra.mxu0 0
      %800 = vmatprep.subr.bf16.mxu0 0
      %801 = vmatpush2.bf16.msra.mxu0 0
      %802 = vmatprep.subr.bf16.mxu0 0
      %803 = vmatpush2.bf16.msra.mxu0 0
      %804 = vmatprep.subr.bf16.mxu0 0
      %805 = vmatpush2.bf16.msra.mxu0 0
      %806 = vmatprep.subr.bf16.mxu0 0
      %807 = vmatpush2.bf16.msra.mxu0 0
      %808 = vmatprep.subr.bf16.mxu0 0
      %809 = vmatpush2.bf16.msra.mxu0 0
      %810 = vmatprep.subr.bf16.mxu0 0
      %811 = vmatpush2.bf16.msra.mxu0 0
      %812 = vmatprep.mubr.bf16.mxu0 0
      %813 = vmatmul.mubr.bf16.gmra.mxu0 %v728
      %v814 = vpop.f32.mrf.mxu0
      %v815 = vadd.f32 0.0, %v814
      %v816 = vpop.f32.mrf.mxu0
      %v817 = vpop.f32.mrf.mxu0
      %v818 = vadd.f32 0.0, %v817
      %v819 = vpop.f32.mrf.mxu0
      %820 = vmatprep.mubr.bf16.mxu0 0
      %821 = vmatmul.mubr.bf16.gmra.mxu0 %v729
      %v822 = vpop.f32.mrf.mxu0
      %v823 = vadd.f32 0.0, %v822
      %v824 = vpop.f32.mrf.mxu0
      %v825 = vpop.f32.mrf.mxu0
      %v826 = vpop.f32.mrf.mxu0
      %827 = vdwg.mxu0
      %v828 = vadd.f32 %v699, %v815
      %v829 = vadd.f32 %v700, %v818
      %v830 = vadd.f32 %v701, %v823
      %v831 = vld [vmem:[%s306] sm:$0xf]
      %v832 = vld [vmem:[%s306 + $0x4] sm:$0xf]
      %v833 = vld [vmem:[%s306 + $0x8] sm:$0x3]
      %s834 = scalar_lea.vmem %s4, 256
      %v835 = vld [vmem:[%s834] sm:$0xf]
      %v836 = vld [vmem:[%s834 + $0x4] sm:$0xf]
      %v837 = vld [vmem:[%s834 + $0x8] sm:$0xf]
      %v838 = vld [vmem:[%s834 + $0xc] sm:$0xf]
      %v839 = vld [vmem:[%s834 + $0x10] sm:$0xf]
      %v840 = vld [vmem:[%s834 + $0x14] sm:$0xf]
      %v841 = vld [vmem:[%s834 + $0x18] sm:$0xf]
      %v842 = vld [vmem:[%s834 + $0x1c] sm:$0xf]
      %v843 = vld [vmem:[%s834 + $0x20] sm:$0xf]
      %v844 = vld [vmem:[%s834 + $0x24] sm:$0xf]
      %v845 = vld [vmem:[%s834 + $0x28] sm:$0xf]
      %v846 = vld [vmem:[%s834 + $0x2c] sm:$0xf]
      %v847 = vld [vmem:[%s834 + $0x30] sm:$0xf]
      %v848 = vld [vmem:[%s834 + $0x34] sm:$0xf]
      %v849 = vld [vmem:[%s834 + $0x38] sm:$0xf]
      %v850 = vld [vmem:[%s834 + $0x3c] sm:$0xf]
      %v854 = vunpack.c.l.b16 %v831
      %v855 = vunpack.c.l.b16 %v832
      %v856 = vunpack.c.l.b16 %v833
      %v857 = vpack.c.b16 %v855, %v854
      %v858 = vpack.c.b16 %v856, %v856
      %v877 = vunpack.c.l.b16 %v835
      %v878 = vunpack.c.l.b16 %v836
      %v879 = vunpack.c.l.b16 %v837
      %v880 = vunpack.c.l.b16 %v838
      %v881 = vunpack.c.l.b16 %v839
      %v882 = vunpack.c.l.b16 %v840
      %v883 = vunpack.c.l.b16 %v841
      %v884 = vunpack.c.l.b16 %v842
      %v885 = vunpack.c.l.b16 %v843
      %v886 = vunpack.c.l.b16 %v844
      %v887 = vunpack.c.l.b16 %v845
      %v888 = vunpack.c.l.b16 %v846
      %v889 = vunpack.c.l.b16 %v847
      %v890 = vunpack.c.l.b16 %v848
      %v891 = vunpack.c.l.b16 %v849
      %v892 = vunpack.c.l.b16 %v850
      %v893 = vpack.c.b16 %v878, %v877
      %v894 = vpack.c.b16 %v880, %v879
      %v895 = vpack.c.b16 %v882, %v881
      %v896 = vpack.c.b16 %v884, %v883
      %v897 = vpack.c.b16 %v886, %v885
      %v898 = vpack.c.b16 %v888, %v887
      %v899 = vpack.c.b16 %v890, %v889
      %v900 = vpack.c.b16 %v892, %v891
      %909 = vmatprep.subr.bf16.mxu0 0
      %910 = vmatpush1.bf16.msra.mxu0 %v900
      %911 = vmatprep.subr.bf16.mxu0 0
      %912 = vmatpush1.bf16.msra.mxu0 %v899
      %913 = vmatprep.subr.bf16.mxu0 0
      %914 = vmatpush1.bf16.msra.mxu0 %v898
      %915 = vmatprep.subr.bf16.mxu0 0
      %916 = vmatpush1.bf16.msra.mxu0 %v897
      %917 = vmatprep.subr.bf16.mxu0 0
      %918 = vmatpush1.bf16.msra.mxu0 %v896
      %919 = vmatprep.subr.bf16.mxu0 0
      %920 = vmatpush1.bf16.msra.mxu0 %v895
      %921 = vmatprep.subr.bf16.mxu0 0
      %922 = vmatpush1.bf16.msra.mxu0 %v894
      %923 = vmatprep.subr.bf16.mxu0 0
      %924 = vmatpush1.bf16.msra.mxu0 %v893
      %925 = vmatprep.subr.bf16.mxu0 0
      %926 = vmatpush2.bf16.msra.mxu0 0
      %927 = vmatprep.subr.bf16.mxu0 0
      %928 = vmatpush2.bf16.msra.mxu0 0
      %929 = vmatprep.subr.bf16.mxu0 0
      %930 = vmatpush2.bf16.msra.mxu0 0
      %931 = vmatprep.subr.bf16.mxu0 0
      %932 = vmatpush2.bf16.msra.mxu0 0
      %933 = vmatprep.subr.bf16.mxu0 0
      %934 = vmatpush2.bf16.msra.mxu0 0
      %935 = vmatprep.subr.bf16.mxu0 0
      %936 = vmatpush2.bf16.msra.mxu0 0
      %937 = vmatprep.subr.bf16.mxu0 0
      %938 = vmatpush2.bf16.msra.mxu0 0
      %939 = vmatprep.subr.bf16.mxu0 0
      %940 = vmatpush2.bf16.msra.mxu0 0
      %941 = vmatprep.mubr.bf16.mxu0 0
      %942 = vmatmul.mubr.bf16.gmra.mxu0 %v857
      %v943 = vpop.f32.mrf.mxu0
      %v944 = vadd.f32 0.0, %v943
      %v945 = vpop.f32.mrf.mxu0
      %v946 = vpop.f32.mrf.mxu0
      %v947 = vadd.f32 0.0, %v946
      %v948 = vpop.f32.mrf.mxu0
      %949 = vmatprep.mubr.bf16.mxu0 0
      %950 = vmatmul.mubr.bf16.gmra.mxu0 %v858
      %v951 = vpop.f32.mrf.mxu0
      %v952 = vadd.f32 0.0, %v951
      %v953 = vpop.f32.mrf.mxu0
      %v954 = vpop.f32.mrf.mxu0
      %v955 = vpop.f32.mrf.mxu0
      %956 = vdwg.mxu0
      %v957 = vadd.f32 %v828, %v944
      %v958 = vadd.f32 %v829, %v947
      %v959 = vadd.f32 %v830, %v952
      %v960 = vld [vmem:[%s301 + $0x8] sm:$0x7]
      %s961 = scalar_lea.vmem %s4, 320
      %v962 = vld [vmem:[%s961] sm:$0xf]
      %v963 = vld [vmem:[%s961 + $0x4] sm:$0xf]
      %v964 = vld [vmem:[%s961 + $0x8] sm:$0xf]
      %v965 = vld [vmem:[%s961 + $0xc] sm:$0xf]
      %v966 = vld [vmem:[%s961 + $0x10] sm:$0xf]
      %v967 = vld [vmem:[%s961 + $0x14] sm:$0xf]
      %v968 = vld [vmem:[%s961 + $0x18] sm:$0xf]
      %v969 = vld [vmem:[%s961 + $0x1c] sm:$0xf]
      %v970 = vld [vmem:[%s961 + $0x20] sm:$0xf]
      %v971 = vld [vmem:[%s961 + $0x24] sm:$0xf]
      %v972 = vld [vmem:[%s961 + $0x28] sm:$0xf]
      %v973 = vld [vmem:[%s961 + $0x2c] sm:$0xf]
      %v974 = vld [vmem:[%s961 + $0x30] sm:$0xf]
      %v975 = vld [vmem:[%s961 + $0x34] sm:$0xf]
      %v976 = vld [vmem:[%s961 + $0x38] sm:$0xf]
      %v977 = vld [vmem:[%s961 + $0x3c] sm:$0xf]
      %v979 = vunpack.c.l.b16 %v960
      %v980 = vpack.c.b16 %v979, %v979
      %v982 = vshrl.u32 %v728, 16
      %v984 = vshll.u32 %v728, 16
      %v986 = vrot.slane %v984, 1
      %v987 = vor.u32 %v982, %v986
      %v989 = vshll.u32 %v980, 16
      %v991 = vrot.slane %v989, 1
      %v992 = vsel %vm585, %v987, %v991
      %v993 = vshrl.u32 %v980, 16
      %v995 = vor.u32 %v993, %v991
      %v1014 = vunpack.c.l.b16 %v962
      %v1015 = vunpack.c.l.b16 %v963
      %v1016 = vunpack.c.l.b16 %v964
      %v1017 = vunpack.c.l.b16 %v965
      %v1018 = vunpack.c.l.b16 %v966
      %v1019 = vunpack.c.l.b16 %v967
      %v1020 = vunpack.c.l.b16 %v968
      %v1021 = vunpack.c.l.b16 %v969
      %v1022 = vunpack.c.l.b16 %v970
      %v1023 = vunpack.c.l.b16 %v971
      %v1024 = vunpack.c.l.b16 %v972
      %v1025 = vunpack.c.l.b16 %v973
      %v1026 = vunpack.c.l.b16 %v974
      %v1027 = vunpack.c.l.b16 %v975
      %v1028 = vunpack.c.l.b16 %v976
      %v1029 = vunpack.c.l.b16 %v977
      %v1030 = vpack.c.b16 %v1015, %v1014
      %v1031 = vpack.c.b16 %v1017, %v1016
      %v1032 = vpack.c.b16 %v1019, %v1018
      %v1033 = vpack.c.b16 %v1021, %v1020
      %v1034 = vpack.c.b16 %v1023, %v1022
      %v1035 = vpack.c.b16 %v1025, %v1024
      %v1036 = vpack.c.b16 %v1027, %v1026
      %v1037 = vpack.c.b16 %v1029, %v1028
      %1046 = vmatprep.subr.bf16.mxu0 0
      %1047 = vmatpush1.bf16.msra.mxu0 %v1037
      %1048 = vmatprep.subr.bf16.mxu0 0
      %1049 = vmatpush1.bf16.msra.mxu0 %v1036
      %1050 = vmatprep.subr.bf16.mxu0 0
      %1051 = vmatpush1.bf16.msra.mxu0 %v1035
      %1052 = vmatprep.subr.bf16.mxu0 0
      %1053 = vmatpush1.bf16.msra.mxu0 %v1034
      %1054 = vmatprep.subr.bf16.mxu0 0
      %1055 = vmatpush1.bf16.msra.mxu0 %v1033
      %1056 = vmatprep.subr.bf16.mxu0 0
      %1057 = vmatpush1.bf16.msra.mxu0 %v1032
      %1058 = vmatprep.subr.bf16.mxu0 0
      %1059 = vmatpush1.bf16.msra.mxu0 %v1031
      %1060 = vmatprep.subr.bf16.mxu0 0
      %1061 = vmatpush1.bf16.msra.mxu0 %v1030
      %1062 = vmatprep.subr.bf16.mxu0 0
      %1063 = vmatpush2.bf16.msra.mxu0 0
      %1064 = vmatprep.subr.bf16.mxu0 0
      %1065 = vmatpush2.bf16.msra.mxu0 0
      %1066 = vmatprep.subr.bf16.mxu0 0
      %1067 = vmatpush2.bf16.msra.mxu0 0
      %1068 = vmatprep.subr.bf16.mxu0 0
      %1069 = vmatpush2.bf16.msra.mxu0 0
      %1070 = vmatprep.subr.bf16.mxu0 0
      %1071 = vmatpush2.bf16.msra.mxu0 0
      %1072 = vmatprep.subr.bf16.mxu0 0
      %1073 = vmatpush2.bf16.msra.mxu0 0
      %1074 = vmatprep.subr.bf16.mxu0 0
      %1075 = vmatpush2.bf16.msra.mxu0 0
      %1076 = vmatprep.subr.bf16.mxu0 0
      %1077 = vmatpush2.bf16.msra.mxu0 0
      %1078 = vmatprep.mubr.bf16.mxu0 0
      %1079 = vmatmul.mubr.bf16.gmra.mxu0 %v992
      %v1080 = vpop.f32.mrf.mxu0
      %v1081 = vadd.f32 0.0, %v1080
      %v1082 = vpop.f32.mrf.mxu0
      %v1083 = vpop.f32.mrf.mxu0
      %v1084 = vadd.f32 0.0, %v1083
      %v1085 = vpop.f32.mrf.mxu0
      %1086 = vmatprep.mubr.bf16.mxu0 0
      %1087 = vmatmul.mubr.bf16.gmra.mxu0 %v995
      %v1088 = vpop.f32.mrf.mxu0
      %v1089 = vadd.f32 0.0, %v1088
      %v1090 = vpop.f32.mrf.mxu0
      %v1091 = vpop.f32.mrf.mxu0
      %v1092 = vpop.f32.mrf.mxu0
      %1093 = vdwg.mxu0
      %v1094 = vadd.f32 %v957, %v1081
      %v1095 = vadd.f32 %v958, %v1084
      %v1096 = vadd.f32 %v959, %v1089
      %v1097 = vld [vmem:[%s291] sm:$0xc]
      %v1098 = vld [vmem:[%s291 + $0x4] sm:$0xf]
      %v1099 = vld [vmem:[%s291 + $0x8] sm:$0xf]
      %v1100 = vld [vmem:[%s291 + $0xc] sm:$0x1]
      %s1101 = scalar_lea.vmem %s4, 384
      %v1102 = vld [vmem:[%s1101] sm:$0xf]
      %v1103 = vld [vmem:[%s1101 + $0x4] sm:$0xf]
      %v1104 = vld [vmem:[%s1101 + $0x8] sm:$0xf]
      %v1105 = vld [vmem:[%s1101 + $0xc] sm:$0xf]
      %v1106 = vld [vmem:[%s1101 + $0x10] sm:$0xf]
      %v1107 = vld [vmem:[%s1101 + $0x14] sm:$0xf]
      %v1108 = vld [vmem:[%s1101 + $0x18] sm:$0xf]
      %v1109 = vld [vmem:[%s1101 + $0x1c] sm:$0xf]
      %v1110 = vld [vmem:[%s1101 + $0x20] sm:$0xf]
      %v1111 = vld [vmem:[%s1101 + $0x24] sm:$0xf]
      %v1112 = vld [vmem:[%s1101 + $0x28] sm:$0xf]
      %v1113 = vld [vmem:[%s1101 + $0x2c] sm:$0xf]
      %v1114 = vld [vmem:[%s1101 + $0x30] sm:$0xf]
      %v1115 = vld [vmem:[%s1101 + $0x34] sm:$0xf]
      %v1116 = vld [vmem:[%s1101 + $0x38] sm:$0xf]
      %v1117 = vld [vmem:[%s1101 + $0x3c] sm:$0xf]
      %v1122 = vunpack.c.l.b16 %v1097
      %v1123 = vunpack.c.l.b16 %v1098
      %v1124 = vunpack.c.l.b16 %v1099
      %v1125 = vunpack.c.l.b16 %v1100
      %v1126 = vpack.c.b16 %v1123, %v1122
      %v1127 = vpack.c.b16 %v1125, %v1124
      %vm1128 = vsmask.f32 5376
      %v1130 = vshrl.u32 %v1126, 16
      %v1132 = vrot.slane %v1130, 2
      %v1133 = vshll.u32 %v1126, 16
      %v1135 = vrot.slane %v1133, 3
      %v1136 = vor.u32 %v1132, %v1135
      %v1138 = vshrl.u32 %v1127, 16
      %v1140 = vrot.slane %v1138, 2
      %v1141 = vshll.u32 %v1127, 16
      %v1143 = vrot.slane %v1141, 3
      %v1144 = vor.u32 %v1140, %v1143
      %v1145 = vsel %vm1128, %v1136, %v1144
      %v1164 = vunpack.c.l.b16 %v1102
      %v1165 = vunpack.c.l.b16 %v1103
      %v1166 = vunpack.c.l.b16 %v1104
      %v1167 = vunpack.c.l.b16 %v1105
      %v1168 = vunpack.c.l.b16 %v1106
      %v1169 = vunpack.c.l.b16 %v1107
      %v1170 = vunpack.c.l.b16 %v1108
      %v1171 = vunpack.c.l.b16 %v1109
      %v1172 = vunpack.c.l.b16 %v1110
      %v1173 = vunpack.c.l.b16 %v1111
      %v1174 = vunpack.c.l.b16 %v1112
      %v1175 = vunpack.c.l.b16 %v1113
      %v1176 = vunpack.c.l.b16 %v1114
      %v1177 = vunpack.c.l.b16 %v1115
      %v1178 = vunpack.c.l.b16 %v1116
      %v1179 = vunpack.c.l.b16 %v1117
      %v1180 = vpack.c.b16 %v1165, %v1164
      %v1181 = vpack.c.b16 %v1167, %v1166
      %v1182 = vpack.c.b16 %v1169, %v1168
      %v1183 = vpack.c.b16 %v1171, %v1170
      %v1184 = vpack.c.b16 %v1173, %v1172
      %v1185 = vpack.c.b16 %v1175, %v1174
      %v1186 = vpack.c.b16 %v1177, %v1176
      %v1187 = vpack.c.b16 %v1179, %v1178
      %1196 = vmatprep.subr.bf16.mxu0 0
      %1197 = vmatpush1.bf16.msra.mxu0 %v1187
      %1198 = vmatprep.subr.bf16.mxu0 0
      %1199 = vmatpush1.bf16.msra.mxu0 %v1186
      %1200 = vmatprep.subr.bf16.mxu0 0
      %1201 = vmatpush1.bf16.msra.mxu0 %v1185
      %1202 = vmatprep.subr.bf16.mxu0 0
      %1203 = vmatpush1.bf16.msra.mxu0 %v1184
      %1204 = vmatprep.subr.bf16.mxu0 0
      %1205 = vmatpush1.bf16.msra.mxu0 %v1183
      %1206 = vmatprep.subr.bf16.mxu0 0
      %1207 = vmatpush1.bf16.msra.mxu0 %v1182
      %1208 = vmatprep.subr.bf16.mxu0 0
      %1209 = vmatpush1.bf16.msra.mxu0 %v1181
      %1210 = vmatprep.subr.bf16.mxu0 0
      %1211 = vmatpush1.bf16.msra.mxu0 %v1180
      %1212 = vmatprep.subr.bf16.mxu0 0
      %1213 = vmatpush2.bf16.msra.mxu0 0
      %1214 = vmatprep.subr.bf16.mxu0 0
      %1215 = vmatpush2.bf16.msra.mxu0 0
      %1216 = vmatprep.subr.bf16.mxu0 0
      %1217 = vmatpush2.bf16.msra.mxu0 0
      %1218 = vmatprep.subr.bf16.mxu0 0
      %1219 = vmatpush2.bf16.msra.mxu0 0
      %1220 = vmatprep.subr.bf16.mxu0 0
      %1221 = vmatpush2.bf16.msra.mxu0 0
      %1222 = vmatprep.subr.bf16.mxu0 0
      %1223 = vmatpush2.bf16.msra.mxu0 0
      %1224 = vmatprep.subr.bf16.mxu0 0
      %1225 = vmatpush2.bf16.msra.mxu0 0
      %1226 = vmatprep.subr.bf16.mxu0 0
      %1227 = vmatpush2.bf16.msra.mxu0 0
      %1228 = vmatprep.mubr.bf16.mxu0 0
      %1229 = vmatmul.mubr.bf16.gmra.mxu0 %v1145
      %v1230 = vpop.f32.mrf.mxu0
      %v1231 = vadd.f32 0.0, %v1230
      %v1232 = vpop.f32.mrf.mxu0
      %v1233 = vpop.f32.mrf.mxu0
      %v1234 = vadd.f32 0.0, %v1233
      %v1235 = vpop.f32.mrf.mxu0
      %1236 = vmatprep.mubr.bf16.mxu0 0
      %1237 = vmatmul.mubr.bf16.gmra.mxu0 %v1144
      %v1238 = vpop.f32.mrf.mxu0
      %v1239 = vadd.f32 0.0, %v1238
      %v1240 = vpop.f32.mrf.mxu0
      %v1241 = vpop.f32.mrf.mxu0
      %v1242 = vpop.f32.mrf.mxu0
      %1243 = vdwg.mxu0
      %v1244 = vadd.f32 %v1094, %v1231
      %v1245 = vadd.f32 %v1095, %v1234
      %v1246 = vadd.f32 %v1096, %v1239
      %v1247 = vld [vmem:[%s296] sm:$0xc]
      %v1248 = vld [vmem:[%s296 + $0x4] sm:$0xf]
      %v1249 = vld [vmem:[%s296 + $0x8] sm:$0xf]
      %v1250 = vld [vmem:[%s296 + $0xc] sm:$0x1]
      %s1251 = scalar_lea.vmem %s4, 448
      %v1252 = vld [vmem:[%s1251] sm:$0xf]
      %v1253 = vld [vmem:[%s1251 + $0x4] sm:$0xf]
      %v1254 = vld [vmem:[%s1251 + $0x8] sm:$0xf]
      %v1255 = vld [vmem:[%s1251 + $0xc] sm:$0xf]
      %v1256 = vld [vmem:[%s1251 + $0x10] sm:$0xf]
      %v1257 = vld [vmem:[%s1251 + $0x14] sm:$0xf]
      %v1258 = vld [vmem:[%s1251 + $0x18] sm:$0xf]
      %v1259 = vld [vmem:[%s1251 + $0x1c] sm:$0xf]
      %v1260 = vld [vmem:[%s1251 + $0x20] sm:$0xf]
      %v1261 = vld [vmem:[%s1251 + $0x24] sm:$0xf]
      %v1262 = vld [vmem:[%s1251 + $0x28] sm:$0xf]
      %v1263 = vld [vmem:[%s1251 + $0x2c] sm:$0xf]
      %v1264 = vld [vmem:[%s1251 + $0x30] sm:$0xf]
      %v1265 = vld [vmem:[%s1251 + $0x34] sm:$0xf]
      %v1266 = vld [vmem:[%s1251 + $0x38] sm:$0xf]
      %v1267 = vld [vmem:[%s1251 + $0x3c] sm:$0xf]
      %v1272 = vunpack.c.l.b16 %v1247
      %v1273 = vunpack.c.l.b16 %v1248
      %v1274 = vunpack.c.l.b16 %v1249
      %v1275 = vunpack.c.l.b16 %v1250
      %v1276 = vpack.c.b16 %v1273, %v1272
      %v1277 = vpack.c.b16 %v1275, %v1274
      %v1279 = vshrl.u32 %v1276, 16
      %v1281 = vrot.slane %v1279, 2
      %v1282 = vshll.u32 %v1276, 16
      %v1284 = vrot.slane %v1282, 3
      %v1285 = vor.u32 %v1281, %v1284
      %v1287 = vshrl.u32 %v1277, 16
      %v1289 = vrot.slane %v1287, 2
      %v1290 = vshll.u32 %v1277, 16
      %v1292 = vrot.slane %v1290, 3
      %v1293 = vor.u32 %v1289, %v1292
      %v1294 = vsel %vm1128, %v1285, %v1293
      %v1313 = vunpack.c.l.b16 %v1252
      %v1314 = vunpack.c.l.b16 %v1253
      %v1315 = vunpack.c.l.b16 %v1254
      %v1316 = vunpack.c.l.b16 %v1255
      %v1317 = vunpack.c.l.b16 %v1256
      %v1318 = vunpack.c.l.b16 %v1257
      %v1319 = vunpack.c.l.b16 %v1258
      %v1320 = vunpack.c.l.b16 %v1259
      %v1321 = vunpack.c.l.b16 %v1260
      %v1322 = vunpack.c.l.b16 %v1261
      %v1323 = vunpack.c.l.b16 %v1262
      %v1324 = vunpack.c.l.b16 %v1263
      %v1325 = vunpack.c.l.b16 %v1264
      %v1326 = vunpack.c.l.b16 %v1265
      %v1327 = vunpack.c.l.b16 %v1266
      %v1328 = vunpack.c.l.b16 %v1267
      %v1329 = vpack.c.b16 %v1314, %v1313
      %v1330 = vpack.c.b16 %v1316, %v1315
      %v1331 = vpack.c.b16 %v1318, %v1317
      %v1332 = vpack.c.b16 %v1320, %v1319
      %v1333 = vpack.c.b16 %v1322, %v1321
      %v1334 = vpack.c.b16 %v1324, %v1323
      %v1335 = vpack.c.b16 %v1326, %v1325
      %v1336 = vpack.c.b16 %v1328, %v1327
      %1345 = vmatprep.subr.bf16.mxu0 0
      %1346 = vmatpush1.bf16.msra.mxu0 %v1336
      %1347 = vmatprep.subr.bf16.mxu0 0
      %1348 = vmatpush1.bf16.msra.mxu0 %v1335
      %1349 = vmatprep.subr.bf16.mxu0 0
      %1350 = vmatpush1.bf16.msra.mxu0 %v1334
      %1351 = vmatprep.subr.bf16.mxu0 0
      %1352 = vmatpush1.bf16.msra.mxu0 %v1333
      %1353 = vmatprep.subr.bf16.mxu0 0
      %1354 = vmatpush1.bf16.msra.mxu0 %v1332
      %1355 = vmatprep.subr.bf16.mxu0 0
      %1356 = vmatpush1.bf16.msra.mxu0 %v1331
      %1357 = vmatprep.subr.bf16.mxu0 0
      %1358 = vmatpush1.bf16.msra.mxu0 %v1330
      %1359 = vmatprep.subr.bf16.mxu0 0
      %1360 = vmatpush1.bf16.msra.mxu0 %v1329
      %1361 = vmatprep.subr.bf16.mxu0 0
      %1362 = vmatpush2.bf16.msra.mxu0 0
      %1363 = vmatprep.subr.bf16.mxu0 0
      %1364 = vmatpush2.bf16.msra.mxu0 0
      %1365 = vmatprep.subr.bf16.mxu0 0
      %1366 = vmatpush2.bf16.msra.mxu0 0
      %1367 = vmatprep.subr.bf16.mxu0 0
      %1368 = vmatpush2.bf16.msra.mxu0 0
      %1369 = vmatprep.subr.bf16.mxu0 0
      %1370 = vmatpush2.bf16.msra.mxu0 0
      %1371 = vmatprep.subr.bf16.mxu0 0
      %1372 = vmatpush2.bf16.msra.mxu0 0
      %1373 = vmatprep.subr.bf16.mxu0 0
      %1374 = vmatpush2.bf16.msra.mxu0 0
      %1375 = vmatprep.subr.bf16.mxu0 0
      %1376 = vmatpush2.bf16.msra.mxu0 0
      %1377 = vmatprep.mubr.bf16.mxu0 0
      %1378 = vmatmul.mubr.bf16.gmra.mxu0 %v1294
      %v1379 = vpop.f32.mrf.mxu0
      %v1380 = vadd.f32 0.0, %v1379
      %v1381 = vpop.f32.mrf.mxu0
      %v1382 = vpop.f32.mrf.mxu0
      %v1383 = vadd.f32 0.0, %v1382
      %v1384 = vpop.f32.mrf.mxu0
      %1385 = vmatprep.mubr.bf16.mxu0 0
      %1386 = vmatmul.mubr.bf16.gmra.mxu0 %v1293
      %v1387 = vpop.f32.mrf.mxu0
      %v1388 = vadd.f32 0.0, %v1387
      %v1389 = vpop.f32.mrf.mxu0
      %v1390 = vpop.f32.mrf.mxu0
      %v1391 = vpop.f32.mrf.mxu0
      %1392 = vdwg.mxu0
      %v1393 = vadd.f32 %v1244, %v1380
      %v1394 = vadd.f32 %v1245, %v1383
      %v1395 = vadd.f32 %v1246, %v1388
      %v1396 = vld [vmem:[%s291] sm:$0x8]
      %s1397 = scalar_lea.vmem %s4, 512
      %v1398 = vld [vmem:[%s1397] sm:$0xf]
      %v1399 = vld [vmem:[%s1397 + $0x4] sm:$0xf]
      %v1400 = vld [vmem:[%s1397 + $0x8] sm:$0xf]
      %v1401 = vld [vmem:[%s1397 + $0xc] sm:$0xf]
      %v1402 = vld [vmem:[%s1397 + $0x10] sm:$0xf]
      %v1403 = vld [vmem:[%s1397 + $0x14] sm:$0xf]
      %v1404 = vld [vmem:[%s1397 + $0x18] sm:$0xf]
      %v1405 = vld [vmem:[%s1397 + $0x1c] sm:$0xf]
      %v1406 = vld [vmem:[%s1397 + $0x20] sm:$0xf]
      %v1407 = vld [vmem:[%s1397 + $0x24] sm:$0xf]
      %v1408 = vld [vmem:[%s1397 + $0x28] sm:$0xf]
      %v1409 = vld [vmem:[%s1397 + $0x2c] sm:$0xf]
      %v1410 = vld [vmem:[%s1397 + $0x30] sm:$0xf]
      %v1411 = vld [vmem:[%s1397 + $0x34] sm:$0xf]
      %v1412 = vld [vmem:[%s1397 + $0x38] sm:$0xf]
      %v1413 = vld [vmem:[%s1397 + $0x3c] sm:$0xf]
      %v1415 = vunpack.c.l.b16 %v1396
      %v1416 = vpack.c.b16 %v1123, %v1415
      %vm1417 = vcmask 1044480
      %v1418 = vrot.slane %v1416, 3
      %v1419 = vrot.slane %v1127, 3
      %v1420 = vsel %vm1417, %v1418, %v1419
      %v1439 = vunpack.c.l.b16 %v1398
      %v1440 = vunpack.c.l.b16 %v1399
      %v1441 = vunpack.c.l.b16 %v1400
      %v1442 = vunpack.c.l.b16 %v1401
      %v1443 = vunpack.c.l.b16 %v1402
      %v1444 = vunpack.c.l.b16 %v1403
      %v1445 = vunpack.c.l.b16 %v1404
      %v1446 = vunpack.c.l.b16 %v1405
      %v1447 = vunpack.c.l.b16 %v1406
      %v1448 = vunpack.c.l.b16 %v1407
      %v1449 = vunpack.c.l.b16 %v1408
      %v1450 = vunpack.c.l.b16 %v1409
      %v1451 = vunpack.c.l.b16 %v1410
      %v1452 = vunpack.c.l.b16 %v1411
      %v1453 = vunpack.c.l.b16 %v1412
      %v1454 = vunpack.c.l.b16 %v1413
      %v1455 = vpack.c.b16 %v1440, %v1439
      %v1456 = vpack.c.b16 %v1442, %v1441
      %v1457 = vpack.c.b16 %v1444, %v1443
      %v1458 = vpack.c.b16 %v1446, %v1445
      %v1459 = vpack.c.b16 %v1448, %v1447
      %v1460 = vpack.c.b16 %v1450, %v1449
      %v1461 = vpack.c.b16 %v1452, %v1451
      %v1462 = vpack.c.b16 %v1454, %v1453
      %1471 = vmatprep.subr.bf16.mxu0 0
      %1472 = vmatpush1.bf16.msra.mxu0 %v1462
      %1473 = vmatprep.subr.bf16.mxu0 0
      %1474 = vmatpush1.bf16.msra.mxu0 %v1461
      %1475 = vmatprep.subr.bf16.mxu0 0
      %1476 = vmatpush1.bf16.msra.mxu0 %v1460
      %1477 = vmatprep.subr.bf16.mxu0 0
      %1478 = vmatpush1.bf16.msra.mxu0 %v1459
      %1479 = vmatprep.subr.bf16.mxu0 0
      %1480 = vmatpush1.bf16.msra.mxu0 %v1458
      %1481 = vmatprep.subr.bf16.mxu0 0
      %1482 = vmatpush1.bf16.msra.mxu0 %v1457
      %1483 = vmatprep.subr.bf16.mxu0 0
      %1484 = vmatpush1.bf16.msra.mxu0 %v1456
      %1485 = vmatprep.subr.bf16.mxu0 0
      %1486 = vmatpush1.bf16.msra.mxu0 %v1455
      %1487 = vmatprep.subr.bf16.mxu0 0
      %1488 = vmatpush2.bf16.msra.mxu0 0
      %1489 = vmatprep.subr.bf16.mxu0 0
      %1490 = vmatpush2.bf16.msra.mxu0 0
      %1491 = vmatprep.subr.bf16.mxu0 0
      %1492 = vmatpush2.bf16.msra.mxu0 0
      %1493 = vmatprep.subr.bf16.mxu0 0
      %1494 = vmatpush2.bf16.msra.mxu0 0
      %1495 = vmatprep.subr.bf16.mxu0 0
      %1496 = vmatpush2.bf16.msra.mxu0 0
      %1497 = vmatprep.subr.bf16.mxu0 0
      %1498 = vmatpush2.bf16.msra.mxu0 0
      %1499 = vmatprep.subr.bf16.mxu0 0
      %1500 = vmatpush2.bf16.msra.mxu0 0
      %1501 = vmatprep.subr.bf16.mxu0 0
      %1502 = vmatpush2.bf16.msra.mxu0 0
      %1503 = vmatprep.mubr.bf16.mxu0 0
      %1504 = vmatmul.mubr.bf16.gmra.mxu0 %v1420
      %v1505 = vpop.f32.mrf.mxu0
      %v1506 = vadd.f32 0.0, %v1505
      %v1507 = vpop.f32.mrf.mxu0
      %v1508 = vpop.f32.mrf.mxu0
      %v1509 = vadd.f32 0.0, %v1508
      %v1510 = vpop.f32.mrf.mxu0
      %1511 = vmatprep.mubr.bf16.mxu0 0
      %1512 = vmatmul.mubr.bf16.gmra.mxu0 %v1419
      %v1513 = vpop.f32.mrf.mxu0
      %v1514 = vadd.f32 0.0, %v1513
      %v1515 = vpop.f32.mrf.mxu0
      %v1516 = vpop.f32.mrf.mxu0
      %v1517 = vpop.f32.mrf.mxu0
      %1518 = vdwg.mxu0
      %v1519 = vadd.f32 %v1393, %v1506
      %v1520 = vadd.f32 %v1394, %v1509
      %v1521 = vadd.f32 %v1395, %v1514
      %v1522 = vld [vmem:[%s5] sm:$0x1]
      %v1524 = vlaneseq
      %v1525 = vshrl.u32 %v1524, 7
      %v1526 = vsub.s32 0, %v1525
      %v1527 = vrot.slane %v1522, %v1526
      %v1529 = vadd.f32 %v1519, %v1527
      %v1530 = vadd.f32 %v1520, %v1527
      %v1531 = vadd.f32 %v1521, %v1527
      %v1532 = vmax.f32 %v1529, 0.0
      %v1533 = vmax.f32 %v1530, 0.0
      %v1534 = vmax.f32 %v1531, 0.0
      %v1535 = vpack.c.bf16 %v1533, %v1532
      %v1536 = vpack.c.bf16 %v1534, %v1534
      %v1539 = vunpack.c.l.b16 %v1535
      %v1540 = vunpack.c.h.b16 %v1535
      %v1541 = vunpack.c.l.b16 %v1536
      %v1542 = vpack.c.b16 %v1539, %v1539
      %v1543 = vpack.c.b16 %v1540, %v1540
      %v1544 = vpack.c.b16 %v1541, %v1541
      %1548 = vst [vmem:[%s311] sm:$0xf] %v1542
      %1549 = vst [vmem:[%s311 + $0x4] sm:$0xf] %v1543
      %1550 = vst [vmem:[%s311 + $0x8] sm:$0x3] %v1544
      %p1551 = scmp.lt.s32.totalorder %s17, 1
      %s1552 = scalar_select %p1551, %s17, 1
      %s1553 = smul.addr %s1552, 3
      %s1554 = smul.addr %s1553, 4
      %s1555 = scalar_lea.vmem %s6, %s1554
      // Predicated region
      $region45: #{encoder_forward.4} parent=43 // pred_check
        %p1556 = pneg %p181
      $region46: #{encoder_forward.4} parent=43 // pred_check_branch
        %1558 = sbr.rel (%p1556) target = $region48
      $region47: #{encoder_forward.4} parent=43 // pred_region
        _
      $region48: #{encoder_forward.4} parent=43 // pred_fallthru
        _
    $region44: #{encoder_forward.4} parent=5 // pred_fallthru
      _
    %p1559 = scmp.le.s32.totalorder 2, %s12
    // Predicated region
    $region49: #{encoder_forward.4} parent=5 // pred_check
      %p1560 = pneg %p1559
    $region50: #{encoder_forward.4} parent=5 // pred_check_branch
      %1562 = sbr.rel (%p1560) target = $region52
    $region51: #{encoder_forward.4} parent=5 // pred_region
      %s1563 = ssub.s32 %s12, 2
      // Predicated region
      $region53: #{encoder_forward.4} parent=51 // pred_check
        %p1564 = pneg %p187
      $region54: #{encoder_forward.4} parent=51 // pred_check_branch
        %1566 = sbr.rel (%p1564) target = $region56
      $region55: #{encoder_forward.4} parent=51 // pred_region
        %p1567 = scmp.lt.s32.totalorder %s18, 1
        %s1568 = scalar_select %p1567, %s18, 1
        %s1569 = smul.addr %s1568, 3
        %s1570 = smul.addr %s1569, 4
        %s1571 = scalar_lea.vmem %s6, %s1570
      $region56: #{encoder_forward.4} parent=51 // pred_fallthru
        _
    $region52: #{encoder_forward.4} parent=5 // pred_fallthru
      _
  $region6: #{encoder_forward.4} parent=0 // loop_footer
    %s16 = sadd.s32 1, %s12
  $region7: #{encoder_forward.4} parent=0 // loop_footer_branch
    %11 = sbr.rel target = $region3
  $region8: #{encoder_forward.4} parent=0 // loop_exit
    _

// kernel: encoder_forward.5
$region0: #{encoder_forward.5}
  #allocation0 [shape = 'u32[]', space=smem, size = 0x4, offset = 0x4, fixed_abs, tag = 'smem constant byte address 0x4 - core index']
  #allocation1 [shape = 'u32[144,128]{1,0:T(1,128)}', space=vmem, size = 0x12000, scoped, tag = 'internal scratch']
  %s0 = inlined_call_operand.vmem [shape: bf16[8,2048], index: 0, kind: input, shape index: {}]
  %s1 = inlined_call_operand.vmem [shape: bf16[2048,2], index: 1, kind: input, shape index: {}]
  %s2 = inlined_call_operand.vmem [shape: f32[1,2], index: 2, kind: input, shape index: {}]
  %s3 = inlined_call_operand.vmem [shape: f32[8,2], index: 3, kind: output, shape index: {}]
  %s4 = sld [smem:[#allocation0]]
  $region22: #{encoder_forward.5} parent=0
    _
  %s6 = ssub.s32 1, %s4
  %s7 = scalar_select 0, %s6, %s4
  // Predicated region
  $region2: #{encoder_forward.5} parent=0 // pred_check
    _
  $region3: #{encoder_forward.5} parent=0 // pred_check_branch
    %9 = sbr.rel (0) target = $region5
  $region4: #{encoder_forward.5} parent=0 // pred_region
    _
  $region5: #{encoder_forward.5} parent=0 // pred_fallthru
    _
  // Predicated region
  $region6: #{encoder_forward.5} parent=0 // pred_check
    _
  $region7: #{encoder_forward.5} parent=0 // pred_check_branch
    %11 = sbr.rel (0) target = $region9
  $region8: #{encoder_forward.5} parent=0 // pred_region
    _
  $region9: #{encoder_forward.5} parent=0 // pred_fallthru
    _
  // Predicated region
  $region10: #{encoder_forward.5} parent=0 // pred_check
    _
  $region11: #{encoder_forward.5} parent=0 // pred_check_branch
    %13 = sbr.rel (0) target = $region13
  $region12: #{encoder_forward.5} parent=0 // pred_region
    _
  $region13: #{encoder_forward.5} parent=0 // pred_fallthru
    _
  %v15 = vld [vmem:[%s0] sm:$0xff]
  %v16 = vld [vmem:[%s0 + $0x8] sm:$0xff]
  %v17 = vld [vmem:[%s0 + $0x10] sm:$0xff]
  %v18 = vld [vmem:[%s0 + $0x18] sm:$0xff]
  %v19 = vld [vmem:[%s0 + $0x20] sm:$0xff]
  %v20 = vld [vmem:[%s0 + $0x28] sm:$0xff]
  %v21 = vld [vmem:[%s0 + $0x30] sm:$0xff]
  %v22 = vld [vmem:[%s0 + $0x38] sm:$0xff]
  %v23 = vld [vmem:[%s1] sm:$0xf]
  %v24 = vld [vmem:[%s1 + $0x4] sm:$0xf]
  %v25 = vld [vmem:[%s1 + $0x8] sm:$0xf]
  %v26 = vld [vmem:[%s1 + $0xc] sm:$0xf]
  %v27 = vld [vmem:[%s1 + $0x10] sm:$0xf]
  %v28 = vld [vmem:[%s1 + $0x14] sm:$0xf]
  %v29 = vld [vmem:[%s1 + $0x18] sm:$0xf]
  %v30 = vld [vmem:[%s1 + $0x1c] sm:$0xf]
  %v31 = vld [vmem:[%s1 + $0x20] sm:$0xf]
  %v32 = vld [vmem:[%s1 + $0x24] sm:$0xf]
  %v33 = vld [vmem:[%s1 + $0x28] sm:$0xf]
  %v34 = vld [vmem:[%s1 + $0x2c] sm:$0xf]
  %v35 = vld [vmem:[%s1 + $0x30] sm:$0xf]
  %v36 = vld [vmem:[%s1 + $0x34] sm:$0xf]
  %v37 = vld [vmem:[%s1 + $0x38] sm:$0xf]
  %v38 = vld [vmem:[%s1 + $0x3c] sm:$0xf]
  %v39 = vld [vmem:[%s1 + $0x40] sm:$0xf]
  %v40 = vld [vmem:[%s1 + $0x44] sm:$0xf]
  %v41 = vld [vmem:[%s1 + $0x48] sm:$0xf]
  %v42 = vld [vmem:[%s1 + $0x4c] sm:$0xf]
  %v43 = vld [vmem:[%s1 + $0x50] sm:$0xf]
  %v44 = vld [vmem:[%s1 + $0x54] sm:$0xf]
  %v45 = vld [vmem:[%s1 + $0x58] sm:$0xf]
  %v46 = vld [vmem:[%s1 + $0x5c] sm:$0xf]
  %v47 = vld [vmem:[%s1 + $0x60] sm:$0xf]
  %v48 = vld [vmem:[%s1 + $0x64] sm:$0xf]
  %v49 = vld [vmem:[%s1 + $0x68] sm:$0xf]
  %v50 = vld [vmem:[%s1 + $0x6c] sm:$0xf]
  %v51 = vld [vmem:[%s1 + $0x70] sm:$0xf]
  %v52 = vld [vmem:[%s1 + $0x74] sm:$0xf]
  %v53 = vld [vmem:[%s1 + $0x78] sm:$0xf]
  %v54 = vld [vmem:[%s1 + $0x7c] sm:$0xf]
  %v55 = vld [vmem:[%s1 + $0x80] sm:$0xf]
  %v56 = vld [vmem:[%s1 + $0x84] sm:$0xf]
  %v57 = vld [vmem:[%s1 + $0x88] sm:$0xf]
  %v58 = vld [vmem:[%s1 + $0x8c] sm:$0xf]
  %v59 = vld [vmem:[%s1 + $0x90] sm:$0xf]
  %v60 = vld [vmem:[%s1 + $0x94] sm:$0xf]
  %v61 = vld [vmem:[%s1 + $0x98] sm:$0xf]
  %v62 = vld [vmem:[%s1 + $0x9c] sm:$0xf]
  %v63 = vld [vmem:[%s1 + $0xa0] sm:$0xf]
  %v64 = vld [vmem:[%s1 + $0xa4] sm:$0xf]
  %v65 = vld [vmem:[%s1 + $0xa8] sm:$0xf]
  %v66 = vld [vmem:[%s1 + $0xac] sm:$0xf]
  %v67 = vld [vmem:[%s1 + $0xb0] sm:$0xf]
  %v68 = vld [vmem:[%s1 + $0xb4] sm:$0xf]
  %v69 = vld [vmem:[%s1 + $0xb8] sm:$0xf]
  %v70 = vld [vmem:[%s1 + $0xbc] sm:$0xf]
  %v71 = vld [vmem:[%s1 + $0xc0] sm:$0xf]
  %v72 = vld [vmem:[%s1 + $0xc4] sm:$0xf]
  %v73 = vld [vmem:[%s1 + $0xc8] sm:$0xf]
  %v74 = vld [vmem:[%s1 + $0xcc] sm:$0xf]
  %v75 = vld [vmem:[%s1 + $0xd0] sm:$0xf]
  %v76 = vld [vmem:[%s1 + $0xd4] sm:$0xf]
  %v77 = vld [vmem:[%s1 + $0xd8] sm:$0xf]
  %v78 = vld [vmem:[%s1 + $0xdc] sm:$0xf]
  %v79 = vld [vmem:[%s1 + $0xe0] sm:$0xf]
  %v80 = vld [vmem:[%s1 + $0xe4] sm:$0xf]
  %v81 = vld [vmem:[%s1 + $0xe8] sm:$0xf]
  %v82 = vld [vmem:[%s1 + $0xec] sm:$0xf]
  %v83 = vld [vmem:[%s1 + $0xf0] sm:$0xf]
  %v84 = vld [vmem:[%s1 + $0xf4] sm:$0xf]
  %v85 = vld [vmem:[%s1 + $0xf8] sm:$0xf]
  %v86 = vld [vmem:[%s1 + $0xfc] sm:$0xf]
  %v87 = vld [vmem:[%s1 + $0x100] sm:$0xf]
  %v88 = vld [vmem:[%s1 + $0x104] sm:$0xf]
  %v89 = vld [vmem:[%s1 + $0x108] sm:$0xf]
  %v90 = vld [vmem:[%s1 + $0x10c] sm:$0xf]
  %v91 = vld [vmem:[%s1 + $0x110] sm:$0xf]
  %v92 = vld [vmem:[%s1 + $0x114] sm:$0xf]
  %v93 = vld [vmem:[%s1 + $0x118] sm:$0xf]
  %v94 = vld [vmem:[%s1 + $0x11c] sm:$0xf]
  %v95 = vld [vmem:[%s1 + $0x120] sm:$0xf]
  %v96 = vld [vmem:[%s1 + $0x124] sm:$0xf]
  %v97 = vld [vmem:[%s1 + $0x128] sm:$0xf]
  %v98 = vld [vmem:[%s1 + $0x12c] sm:$0xf]
  %v99 = vld [vmem:[%s1 + $0x130] sm:$0xf]
  %v100 = vld [vmem:[%s1 + $0x134] sm:$0xf]
  %v101 = vld [vmem:[%s1 + $0x138] sm:$0xf]
  %v102 = vld [vmem:[%s1 + $0x13c] sm:$0xf]
  %v103 = vld [vmem:[%s1 + $0x140] sm:$0xf]
  %v104 = vld [vmem:[%s1 + $0x144] sm:$0xf]
  %v105 = vld [vmem:[%s1 + $0x148] sm:$0xf]
  %v106 = vld [vmem:[%s1 + $0x14c] sm:$0xf]
  %v107 = vld [vmem:[%s1 + $0x150] sm:$0xf]
  %v108 = vld [vmem:[%s1 + $0x154] sm:$0xf]
  %v109 = vld [vmem:[%s1 + $0x158] sm:$0xf]
  %v110 = vld [vmem:[%s1 + $0x15c] sm:$0xf]
  %v111 = vld [vmem:[%s1 + $0x160] sm:$0xf]
  %v112 = vld [vmem:[%s1 + $0x164] sm:$0xf]
  %v113 = vld [vmem:[%s1 + $0x168] sm:$0xf]
  %v114 = vld [vmem:[%s1 + $0x16c] sm:$0xf]
  %v115 = vld [vmem:[%s1 + $0x170] sm:$0xf]
  %v116 = vld [vmem:[%s1 + $0x174] sm:$0xf]
  %v117 = vld [vmem:[%s1 + $0x178] sm:$0xf]
  %v118 = vld [vmem:[%s1 + $0x17c] sm:$0xf]
  %v119 = vld [vmem:[%s1 + $0x180] sm:$0xf]
  %v120 = vld [vmem:[%s1 + $0x184] sm:$0xf]
  %v121 = vld [vmem:[%s1 + $0x188] sm:$0xf]
  %v122 = vld [vmem:[%s1 + $0x18c] sm:$0xf]
  %v123 = vld [vmem:[%s1 + $0x190] sm:$0xf]
  %v124 = vld [vmem:[%s1 + $0x194] sm:$0xf]
  %v125 = vld [vmem:[%s1 + $0x198] sm:$0xf]
  %v126 = vld [vmem:[%s1 + $0x19c] sm:$0xf]
  %v127 = vld [vmem:[%s1 + $0x1a0] sm:$0xf]
  %v128 = vld [vmem:[%s1 + $0x1a4] sm:$0xf]
  %v129 = vld [vmem:[%s1 + $0x1a8] sm:$0xf]
  %v130 = vld [vmem:[%s1 + $0x1ac] sm:$0xf]
  %v131 = vld [vmem:[%s1 + $0x1b0] sm:$0xf]
  %v132 = vld [vmem:[%s1 + $0x1b4] sm:$0xf]
  %v133 = vld [vmem:[%s1 + $0x1b8] sm:$0xf]
  %v134 = vld [vmem:[%s1 + $0x1bc] sm:$0xf]
  %v135 = vld [vmem:[%s1 + $0x1c0] sm:$0xf]
  %v136 = vld [vmem:[%s1 + $0x1c4] sm:$0xf]
  %v137 = vld [vmem:[%s1 + $0x1c8] sm:$0xf]
  %v138 = vld [vmem:[%s1 + $0x1cc] sm:$0xf]
  %v139 = vld [vmem:[%s1 + $0x1d0] sm:$0xf]
  %v140 = vld [vmem:[%s1 + $0x1d4] sm:$0xf]
  %v141 = vld [vmem:[%s1 + $0x1d8] sm:$0xf]
  %v142 = vld [vmem:[%s1 + $0x1dc] sm:$0xf]
  %v143 = vld [vmem:[%s1 + $0x1e0] sm:$0xf]
  %v144 = vld [vmem:[%s1 + $0x1e4] sm:$0xf]
  %v145 = vld [vmem:[%s1 + $0x1e8] sm:$0xf]
  %v146 = vld [vmem:[%s1 + $0x1ec] sm:$0xf]
  %v147 = vld [vmem:[%s1 + $0x1f0] sm:$0xf]
  %v148 = vld [vmem:[%s1 + $0x1f4] sm:$0xf]
  %v149 = vld [vmem:[%s1 + $0x1f8] sm:$0xf]
  %v150 = vld [vmem:[%s1 + $0x1fc] sm:$0xf]
  %v151 = vld [vmem:[%s1 + $0x200] sm:$0xf]
  %v152 = vld [vmem:[%s1 + $0x204] sm:$0xf]
  %v153 = vld [vmem:[%s1 + $0x208] sm:$0xf]
  %v154 = vld [vmem:[%s1 + $0x20c] sm:$0xf]
  %v155 = vld [vmem:[%s1 + $0x210] sm:$0xf]
  %v156 = vld [vmem:[%s1 + $0x214] sm:$0xf]
  %v157 = vld [vmem:[%s1 + $0x218] sm:$0xf]
  %v158 = vld [vmem:[%s1 + $0x21c] sm:$0xf]
  %v159 = vld [vmem:[%s1 + $0x220] sm:$0xf]
  %v160 = vld [vmem:[%s1 + $0x224] sm:$0xf]
  %v161 = vld [vmem:[%s1 + $0x228] sm:$0xf]
  %v162 = vld [vmem:[%s1 + $0x22c] sm:$0xf]
  %v163 = vld [vmem:[%s1 + $0x230] sm:$0xf]
  %v164 = vld [vmem:[%s1 + $0x234] sm:$0xf]
  %v165 = vld [vmem:[%s1 + $0x238] sm:$0xf]
  %v166 = vld [vmem:[%s1 + $0x23c] sm:$0xf]
  %v167 = vld [vmem:[%s1 + $0x240] sm:$0xf]
  %v168 = vld [vmem:[%s1 + $0x244] sm:$0xf]
  %v169 = vld [vmem:[%s1 + $0x248] sm:$0xf]
  %v170 = vld [vmem:[%s1 + $0x24c] sm:$0xf]
  %v171 = vld [vmem:[%s1 + $0x250] sm:$0xf]
  %v172 = vld [vmem:[%s1 + $0x254] sm:$0xf]
  %v173 = vld [vmem:[%s1 + $0x258] sm:$0xf]
  %v174 = vld [vmem:[%s1 + $0x25c] sm:$0xf]
  %v175 = vld [vmem:[%s1 + $0x260] sm:$0xf]
  %v176 = vld [vmem:[%s1 + $0x264] sm:$0xf]
  %v177 = vld [vmem:[%s1 + $0x268] sm:$0xf]
  %v178 = vld [vmem:[%s1 + $0x26c] sm:$0xf]
  %v179 = vld [vmem:[%s1 + $0x270] sm:$0xf]
  %v180 = vld [vmem:[%s1 + $0x274] sm:$0xf]
  %v181 = vld [vmem:[%s1 + $0x278] sm:$0xf]
  %v182 = vld [vmem:[%s1 + $0x27c] sm:$0xf]
  %v183 = vld [vmem:[%s1 + $0x280] sm:$0xf]
  %v184 = vld [vmem:[%s1 + $0x284] sm:$0xf]
  %v185 = vld [vmem:[%s1 + $0x288] sm:$0xf]
  %v186 = vld [vmem:[%s1 + $0x28c] sm:$0xf]
  %v187 = vld [vmem:[%s1 + $0x290] sm:$0xf]
  %v188 = vld [vmem:[%s1 + $0x294] sm:$0xf]
  %v189 = vld [vmem:[%s1 + $0x298] sm:$0xf]
  %v190 = vld [vmem:[%s1 + $0x29c] sm:$0xf]
  %v191 = vld [vmem:[%s1 + $0x2a0] sm:$0xf]
  %v192 = vld [vmem:[%s1 + $0x2a4] sm:$0xf]
  %v193 = vld [vmem:[%s1 + $0x2a8] sm:$0xf]
  %v194 = vld [vmem:[%s1 + $0x2ac] sm:$0xf]
  %v195 = vld [vmem:[%s1 + $0x2b0] sm:$0xf]
  %v196 = vld [vmem:[%s1 + $0x2b4] sm:$0xf]
  %v197 = vld [vmem:[%s1 + $0x2b8] sm:$0xf]
  %v198 = vld [vmem:[%s1 + $0x2bc] sm:$0xf]
  %v199 = vld [vmem:[%s1 + $0x2c0] sm:$0xf]
  %v200 = vld [vmem:[%s1 + $0x2c4] sm:$0xf]
  %v201 = vld [vmem:[%s1 + $0x2c8] sm:$0xf]
  %v202 = vld [vmem:[%s1 + $0x2cc] sm:$0xf]
  %v203 = vld [vmem:[%s1 + $0x2d0] sm:$0xf]
  %v204 = vld [vmem:[%s1 + $0x2d4] sm:$0xf]
  %v205 = vld [vmem:[%s1 + $0x2d8] sm:$0xf]
  %v206 = vld [vmem:[%s1 + $0x2dc] sm:$0xf]
  %v207 = vld [vmem:[%s1 + $0x2e0] sm:$0xf]
  %v208 = vld [vmem:[%s1 + $0x2e4] sm:$0xf]
  %v209 = vld [vmem:[%s1 + $0x2e8] sm:$0xf]
  %v210 = vld [vmem:[%s1 + $0x2ec] sm:$0xf]
  %v211 = vld [vmem:[%s1 + $0x2f0] sm:$0xf]
  %v212 = vld [vmem:[%s1 + $0x2f4] sm:$0xf]
  %v213 = vld [vmem:[%s1 + $0x2f8] sm:$0xf]
  %v214 = vld [vmem:[%s1 + $0x2fc] sm:$0xf]
  %v215 = vld [vmem:[%s1 + $0x300] sm:$0xf]
  %v216 = vld [vmem:[%s1 + $0x304] sm:$0xf]
  %v217 = vld [vmem:[%s1 + $0x308] sm:$0xf]
  %v218 = vld [vmem:[%s1 + $0x30c] sm:$0xf]
  %v219 = vld [vmem:[%s1 + $0x310] sm:$0xf]
  %v220 = vld [vmem:[%s1 + $0x314] sm:$0xf]
  %v221 = vld [vmem:[%s1 + $0x318] sm:$0xf]
  %v222 = vld [vmem:[%s1 + $0x31c] sm:$0xf]
  %v223 = vld [vmem:[%s1 + $0x320] sm:$0xf]
  %v224 = vld [vmem:[%s1 + $0x324] sm:$0xf]
  %v225 = vld [vmem:[%s1 + $0x328] sm:$0xf]
  %v226 = vld [vmem:[%s1 + $0x32c] sm:$0xf]
  %v227 = vld [vmem:[%s1 + $0x330] sm:$0xf]
  %v228 = vld [vmem:[%s1 + $0x334] sm:$0xf]
  %v229 = vld [vmem:[%s1 + $0x338] sm:$0xf]
  %v230 = vld [vmem:[%s1 + $0x33c] sm:$0xf]
  %v231 = vld [vmem:[%s1 + $0x340] sm:$0xf]
  %v232 = vld [vmem:[%s1 + $0x344] sm:$0xf]
  %v233 = vld [vmem:[%s1 + $0x348] sm:$0xf]
  %v234 = vld [vmem:[%s1 + $0x34c] sm:$0xf]
  %v235 = vld [vmem:[%s1 + $0x350] sm:$0xf]
  %v236 = vld [vmem:[%s1 + $0x354] sm:$0xf]
  %v237 = vld [vmem:[%s1 + $0x358] sm:$0xf]
  %v238 = vld [vmem:[%s1 + $0x35c] sm:$0xf]
  %v239 = vld [vmem:[%s1 + $0x360] sm:$0xf]
  %v240 = vld [vmem:[%s1 + $0x364] sm:$0xf]
  %v241 = vld [vmem:[%s1 + $0x368] sm:$0xf]
  %v242 = vld [vmem:[%s1 + $0x36c] sm:$0xf]
  %v243 = vld [vmem:[%s1 + $0x370] sm:$0xf]
  %v244 = vld [vmem:[%s1 + $0x374] sm:$0xf]
  %v245 = vld [vmem:[%s1 + $0x378] sm:$0xf]
  %v246 = vld [vmem:[%s1 + $0x37c] sm:$0xf]
  %v247 = vld [vmem:[%s1 + $0x380] sm:$0xf]
  %v248 = vld [vmem:[%s1 + $0x384] sm:$0xf]
  %v249 = vld [vmem:[%s1 + $0x388] sm:$0xf]
  %v250 = vld [vmem:[%s1 + $0x38c] sm:$0xf]
  %v251 = vld [vmem:[%s1 + $0x390] sm:$0xf]
  %v252 = vld [vmem:[%s1 + $0x394] sm:$0xf]
  %v253 = vld [vmem:[%s1 + $0x398] sm:$0xf]
  %v254 = vld [vmem:[%s1 + $0x39c] sm:$0xf]
  %v255 = vld [vmem:[%s1 + $0x3a0] sm:$0xf]
  %v256 = vld [vmem:[%s1 + $0x3a4] sm:$0xf]
  %v257 = vld [vmem:[%s1 + $0x3a8] sm:$0xf]
  %v258 = vld [vmem:[%s1 + $0x3ac] sm:$0xf]
  %v259 = vld [vmem:[%s1 + $0x3b0] sm:$0xf]
  %v260 = vld [vmem:[%s1 + $0x3b4] sm:$0xf]
  %v261 = vld [vmem:[%s1 + $0x3b8] sm:$0xf]
  %v262 = vld [vmem:[%s1 + $0x3bc] sm:$0xf]
  %v263 = vld [vmem:[%s1 + $0x3c0] sm:$0xf]
  %v264 = vld [vmem:[%s1 + $0x3c4] sm:$0xf]
  %v265 = vld [vmem:[%s1 + $0x3c8] sm:$0xf]
  %v266 = vld [vmem:[%s1 + $0x3cc] sm:$0xf]
  %v267 = vld [vmem:[%s1 + $0x3d0] sm:$0xf]
  %v268 = vld [vmem:[%s1 + $0x3d4] sm:$0xf]
  %v269 = vld [vmem:[%s1 + $0x3d8] sm:$0xf]
  %v270 = vld [vmem:[%s1 + $0x3dc] sm:$0xf]
  %v271 = vld [vmem:[%s1 + $0x3e0] sm:$0xf]
  %v272 = vld [vmem:[%s1 + $0x3e4] sm:$0xf]
  %v273 = vld [vmem:[%s1 + $0x3e8] sm:$0xf]
  %v274 = vld [vmem:[%s1 + $0x3ec] sm:$0xf]
  %v275 = vld [vmem:[%s1 + $0x3f0] sm:$0xf]
  %v276 = vld [vmem:[%s1 + $0x3f4] sm:$0xf]
  %v277 = vld [vmem:[%s1 + $0x3f8] sm:$0xf]
  %v278 = vld [vmem:[%s1 + $0x3fc] sm:$0xf]
  %v279 = vld [vmem:[%s2] sm:$0x1]
  %v281 = vlaneseq
  %v282 = vshrl.u32 %v281, 7
  %v283 = vsub.s32 0, %v282
  %v284 = vrot.slane %v279, %v283
  %v294 = vunpack.c.l.b16 %v15
  %v295 = vunpack.c.h.b16 %v15
  %v296 = vunpack.c.l.b16 %v16
  %v297 = vunpack.c.h.b16 %v16
  %v298 = vunpack.c.l.b16 %v17
  %v299 = vunpack.c.h.b16 %v17
  %v300 = vunpack.c.l.b16 %v18
  %v301 = vunpack.c.h.b16 %v18
  %v302 = vunpack.c.l.b16 %v19
  %v303 = vunpack.c.h.b16 %v19
  %v304 = vunpack.c.l.b16 %v20
  %v305 = vunpack.c.h.b16 %v20
  %v306 = vunpack.c.l.b16 %v21
  %v307 = vunpack.c.h.b16 %v21
  %v308 = vunpack.c.l.b16 %v22
  %v309 = vunpack.c.h.b16 %v22
  %v310 = vpack.c.b16 %v294, %v294
  %v311 = vpack.c.b16 %v295, %v295
  %v312 = vpack.c.b16 %v296, %v296
  %v313 = vpack.c.b16 %v297, %v297
  %v314 = vpack.c.b16 %v298, %v298
  %v315 = vpack.c.b16 %v299, %v299
  %v316 = vpack.c.b16 %v300, %v300
  %v317 = vpack.c.b16 %v301, %v301
  %v318 = vpack.c.b16 %v302, %v302
  %v319 = vpack.c.b16 %v303, %v303
  %v320 = vpack.c.b16 %v304, %v304
  %v321 = vpack.c.b16 %v305, %v305
  %v322 = vpack.c.b16 %v306, %v306
  %v323 = vpack.c.b16 %v307, %v307
  %v324 = vpack.c.b16 %v308, %v308
  %v325 = vpack.c.b16 %v309, %v309
  %v598 = vunpack.c.l.b16 %v23
  %v599 = vunpack.c.l.b16 %v24
  %v600 = vunpack.c.l.b16 %v25
  %v601 = vunpack.c.l.b16 %v26
  %v602 = vunpack.c.l.b16 %v27
  %v603 = vunpack.c.l.b16 %v28
  %v604 = vunpack.c.l.b16 %v29
  %v605 = vunpack.c.l.b16 %v30
  %v606 = vunpack.c.l.b16 %v31
  %v607 = vunpack.c.l.b16 %v32
  %v608 = vunpack.c.l.b16 %v33
  %v609 = vunpack.c.l.b16 %v34
  %v610 = vunpack.c.l.b16 %v35
  %v611 = vunpack.c.l.b16 %v36
  %v612 = vunpack.c.l.b16 %v37
  %v613 = vunpack.c.l.b16 %v38
  %v614 = vunpack.c.l.b16 %v39
  %v615 = vunpack.c.l.b16 %v40
  %v616 = vunpack.c.l.b16 %v41
  %v617 = vunpack.c.l.b16 %v42
  %v618 = vunpack.c.l.b16 %v43
  %v619 = vunpack.c.l.b16 %v44
  %v620 = vunpack.c.l.b16 %v45
  %v621 = vunpack.c.l.b16 %v46
  %v622 = vunpack.c.l.b16 %v47
  %v623 = vunpack.c.l.b16 %v48
  %v624 = vunpack.c.l.b16 %v49
  %v625 = vunpack.c.l.b16 %v50
  %v626 = vunpack.c.l.b16 %v51
  %v627 = vunpack.c.l.b16 %v52
  %v628 = vunpack.c.l.b16 %v53
  %v629 = vunpack.c.l.b16 %v54
  %v630 = vunpack.c.l.b16 %v55
  %v631 = vunpack.c.l.b16 %v56
  %v632 = vunpack.c.l.b16 %v57
  %v633 = vunpack.c.l.b16 %v58
  %v634 = vunpack.c.l.b16 %v59
  %v635 = vunpack.c.l.b16 %v60
  %v636 = vunpack.c.l.b16 %v61
  %v637 = vunpack.c.l.b16 %v62
  %v638 = vunpack.c.l.b16 %v63
  %v639 = vunpack.c.l.b16 %v64
  %v640 = vunpack.c.l.b16 %v65
  %v641 = vunpack.c.l.b16 %v66
  %v642 = vunpack.c.l.b16 %v67
  %v643 = vunpack.c.l.b16 %v68
  %v644 = vunpack.c.l.b16 %v69
  %v645 = vunpack.c.l.b16 %v70
  %v646 = vunpack.c.l.b16 %v71
  %v647 = vunpack.c.l.b16 %v72
  %v648 = vunpack.c.l.b16 %v73
  %v649 = vunpack.c.l.b16 %v74
  %v650 = vunpack.c.l.b16 %v75
  %v651 = vunpack.c.l.b16 %v76
  %v652 = vunpack.c.l.b16 %v77
  %v653 = vunpack.c.l.b16 %v78
  %v654 = vunpack.c.l.b16 %v79
  %v655 = vunpack.c.l.b16 %v80
  %v656 = vunpack.c.l.b16 %v81
  %v657 = vunpack.c.l.b16 %v82
  %v658 = vunpack.c.l.b16 %v83
  %v659 = vunpack.c.l.b16 %v84
  %v660 = vunpack.c.l.b16 %v85
  %v661 = vunpack.c.l.b16 %v86
  %v662 = vunpack.c.l.b16 %v87
  %v663 = vunpack.c.l.b16 %v88
  %v664 = vunpack.c.l.b16 %v89
  %v665 = vunpack.c.l.b16 %v90
  %v666 = vunpack.c.l.b16 %v91
  %v667 = vunpack.c.l.b16 %v92
  %v668 = vunpack.c.l.b16 %v93
  %v669 = vunpack.c.l.b16 %v94
  %v670 = vunpack.c.l.b16 %v95
  %v671 = vunpack.c.l.b16 %v96
  %v672 = vunpack.c.l.b16 %v97
  %v673 = vunpack.c.l.b16 %v98
  %v674 = vunpack.c.l.b16 %v99
  %v675 = vunpack.c.l.b16 %v100
  %v676 = vunpack.c.l.b16 %v101
  %v677 = vunpack.c.l.b16 %v102
  %v678 = vunpack.c.l.b16 %v103
  %v679 = vunpack.c.l.b16 %v104
  %v680 = vunpack.c.l.b16 %v105
  %v681 = vunpack.c.l.b16 %v106
  %v682 = vunpack.c.l.b16 %v107
  %v683 = vunpack.c.l.b16 %v108
  %v684 = vunpack.c.l.b16 %v109
  %v685 = vunpack.c.l.b16 %v110
  %v686 = vunpack.c.l.b16 %v111
  %v687 = vunpack.c.l.b16 %v112
  %v688 = vunpack.c.l.b16 %v113
  %v689 = vunpack.c.l.b16 %v114
  %v690 = vunpack.c.l.b16 %v115
  %v691 = vunpack.c.l.b16 %v116
  %v692 = vunpack.c.l.b16 %v117
  %v693 = vunpack.c.l.b16 %v118
  %v694 = vunpack.c.l.b16 %v119
  %v695 = vunpack.c.l.b16 %v120
  %v696 = vunpack.c.l.b16 %v121
  %v697 = vunpack.c.l.b16 %v122
  %v698 = vunpack.c.l.b16 %v123
  %v699 = vunpack.c.l.b16 %v124
  %v700 = vunpack.c.l.b16 %v125
  %v701 = vunpack.c.l.b16 %v126
  %v702 = vunpack.c.l.b16 %v127
  %v703 = vunpack.c.l.b16 %v128
  %v704 = vunpack.c.l.b16 %v129
  %v705 = vunpack.c.l.b16 %v130
  %v706 = vunpack.c.l.b16 %v131
  %v707 = vunpack.c.l.b16 %v132
  %v708 = vunpack.c.l.b16 %v133
  %v709 = vunpack.c.l.b16 %v134
  %v710 = vunpack.c.l.b16 %v135
  %v711 = vunpack.c.l.b16 %v136
  %v712 = vunpack.c.l.b16 %v137
  %v713 = vunpack.c.l.b16 %v138
  %v714 = vunpack.c.l.b16 %v139
  %v715 = vunpack.c.l.b16 %v140
  %v716 = vunpack.c.l.b16 %v141
  %v717 = vunpack.c.l.b16 %v142
  %v718 = vunpack.c.l.b16 %v143
  %v719 = vunpack.c.l.b16 %v144
  %v720 = vunpack.c.l.b16 %v145
  %v721 = vunpack.c.l.b16 %v146
  %v722 = vunpack.c.l.b16 %v147
  %v723 = vunpack.c.l.b16 %v148
  %v724 = vunpack.c.l.b16 %v149
  %v725 = vunpack.c.l.b16 %v150
  %v726 = vunpack.c.l.b16 %v151
  %v727 = vunpack.c.l.b16 %v152
  %v728 = vunpack.c.l.b16 %v153
  %v729 = vunpack.c.l.b16 %v154
  %v730 = vunpack.c.l.b16 %v155
  %v731 = vunpack.c.l.b16 %v156
  %v732 = vunpack.c.l.b16 %v157
  %v733 = vunpack.c.l.b16 %v158
  %v734 = vunpack.c.l.b16 %v159
  %v735 = vunpack.c.l.b16 %v160
  %v736 = vunpack.c.l.b16 %v161
  %v737 = vunpack.c.l.b16 %v162
  %v738 = vunpack.c.l.b16 %v163
  %v739 = vunpack.c.l.b16 %v164
  %v740 = vunpack.c.l.b16 %v165
  %v741 = vunpack.c.l.b16 %v166
  %v742 = vunpack.c.l.b16 %v167
  %v743 = vunpack.c.l.b16 %v168
  %v744 = vunpack.c.l.b16 %v169
  %v745 = vunpack.c.l.b16 %v170
  %v746 = vunpack.c.l.b16 %v171
  %v747 = vunpack.c.l.b16 %v172
  %v748 = vunpack.c.l.b16 %v173
  %v749 = vunpack.c.l.b16 %v174
  %v750 = vunpack.c.l.b16 %v175
  %v751 = vunpack.c.l.b16 %v176
  %v752 = vunpack.c.l.b16 %v177
  %v753 = vunpack.c.l.b16 %v178
  %v754 = vunpack.c.l.b16 %v179
  %v755 = vunpack.c.l.b16 %v180
  %v756 = vunpack.c.l.b16 %v181
  %v757 = vunpack.c.l.b16 %v182
  %v758 = vunpack.c.l.b16 %v183
  %v759 = vunpack.c.l.b16 %v184
  %v760 = vunpack.c.l.b16 %v185
  %v761 = vunpack.c.l.b16 %v186
  %v762 = vunpack.c.l.b16 %v187
  %v763 = vunpack.c.l.b16 %v188
  %v764 = vunpack.c.l.b16 %v189
  %v765 = vunpack.c.l.b16 %v190
  %v766 = vunpack.c.l.b16 %v191
  %v767 = vunpack.c.l.b16 %v192
  %v768 = vunpack.c.l.b16 %v193
  %v769 = vunpack.c.l.b16 %v194
  %v770 = vunpack.c.l.b16 %v195
  %v771 = vunpack.c.l.b16 %v196
  %v772 = vunpack.c.l.b16 %v197
  %v773 = vunpack.c.l.b16 %v198
  %v774 = vunpack.c.l.b16 %v199
  %v775 = vunpack.c.l.b16 %v200
  %v776 = vunpack.c.l.b16 %v201
  %v777 = vunpack.c.l.b16 %v202
  %v778 = vunpack.c.l.b16 %v203
  %v779 = vunpack.c.l.b16 %v204
  %v780 = vunpack.c.l.b16 %v205
  %v781 = vunpack.c.l.b16 %v206
  %v782 = vunpack.c.l.b16 %v207
  %v783 = vunpack.c.l.b16 %v208
  %v784 = vunpack.c.l.b16 %v209
  %v785 = vunpack.c.l.b16 %v210
  %v786 = vunpack.c.l.b16 %v211
  %v787 = vunpack.c.l.b16 %v212
  %v788 = vunpack.c.l.b16 %v213
  %v789 = vunpack.c.l.b16 %v214
  %v790 = vunpack.c.l.b16 %v215
  %v791 = vunpack.c.l.b16 %v216
  %v792 = vunpack.c.l.b16 %v217
  %v793 = vunpack.c.l.b16 %v218
  %v794 = vunpack.c.l.b16 %v219
  %v795 = vunpack.c.l.b16 %v220
  %v796 = vunpack.c.l.b16 %v221
  %v797 = vunpack.c.l.b16 %v222
  %v798 = vunpack.c.l.b16 %v223
  %v799 = vunpack.c.l.b16 %v224
  %v800 = vunpack.c.l.b16 %v225
  %v801 = vunpack.c.l.b16 %v226
  %v802 = vunpack.c.l.b16 %v227
  %v803 = vunpack.c.l.b16 %v228
  %v804 = vunpack.c.l.b16 %v229
  %v805 = vunpack.c.l.b16 %v230
  %v806 = vunpack.c.l.b16 %v231
  %v807 = vunpack.c.l.b16 %v232
  %v808 = vunpack.c.l.b16 %v233
  %v809 = vunpack.c.l.b16 %v234
  %v810 = vunpack.c.l.b16 %v235
  %v811 = vunpack.c.l.b16 %v236
  %v812 = vunpack.c.l.b16 %v237
  %v813 = vunpack.c.l.b16 %v238
  %v814 = vunpack.c.l.b16 %v239
  %v815 = vunpack.c.l.b16 %v240
  %v816 = vunpack.c.l.b16 %v241
  %v817 = vunpack.c.l.b16 %v242
  %v818 = vunpack.c.l.b16 %v243
  %v819 = vunpack.c.l.b16 %v244
  %v820 = vunpack.c.l.b16 %v245
  %v821 = vunpack.c.l.b16 %v246
  %v822 = vunpack.c.l.b16 %v247
  %v823 = vunpack.c.l.b16 %v248
  %v824 = vunpack.c.l.b16 %v249
  %v825 = vunpack.c.l.b16 %v250
  %v826 = vunpack.c.l.b16 %v251
  %v827 = vunpack.c.l.b16 %v252
  %v828 = vunpack.c.l.b16 %v253
  %v829 = vunpack.c.l.b16 %v254
  %v830 = vunpack.c.l.b16 %v255
  %v831 = vunpack.c.l.b16 %v256
  %v832 = vunpack.c.l.b16 %v257
  %v833 = vunpack.c.l.b16 %v258
  %v834 = vunpack.c.l.b16 %v259
  %v835 = vunpack.c.l.b16 %v260
  %v836 = vunpack.c.l.b16 %v261
  %v837 = vunpack.c.l.b16 %v262
  %v838 = vunpack.c.l.b16 %v263
  %v839 = vunpack.c.l.b16 %v264
  %v840 = vunpack.c.l.b16 %v265
  %v841 = vunpack.c.l.b16 %v266
  %v842 = vunpack.c.l.b16 %v267
  %v843 = vunpack.c.l.b16 %v268
  %v844 = vunpack.c.l.b16 %v269
  %v845 = vunpack.c.l.b16 %v270
  %v846 = vunpack.c.l.b16 %v271
  %v847 = vunpack.c.l.b16 %v272
  %v848 = vunpack.c.l.b16 %v273
  %v849 = vunpack.c.l.b16 %v274
  %v850 = vunpack.c.l.b16 %v275
  %v851 = vunpack.c.l.b16 %v276
  %v852 = vunpack.c.l.b16 %v277
  %v853 = vunpack.c.l.b16 %v278
  %v854 = vpack.c.b16 %v599, %v598
  %v855 = vpack.c.b16 %v601, %v600
  %v856 = vpack.c.b16 %v603, %v602
  %v857 = vpack.c.b16 %v605, %v604
  %v858 = vpack.c.b16 %v607, %v606
  %v859 = vpack.c.b16 %v609, %v608
  %v860 = vpack.c.b16 %v611, %v610
  %v861 = vpack.c.b16 %v613, %v612
  %v862 = vpack.c.b16 %v615, %v614
  %v863 = vpack.c.b16 %v617, %v616
  %v864 = vpack.c.b16 %v619, %v618
  %v865 = vpack.c.b16 %v621, %v620
  %v866 = vpack.c.b16 %v623, %v622
  %v867 = vpack.c.b16 %v625, %v624
  %v868 = vpack.c.b16 %v627, %v626
  %v869 = vpack.c.b16 %v629, %v628
  %v870 = vpack.c.b16 %v631, %v630
  %v871 = vpack.c.b16 %v633, %v632
  %v872 = vpack.c.b16 %v635, %v634
  %v873 = vpack.c.b16 %v637, %v636
  %v874 = vpack.c.b16 %v639, %v638
  %v875 = vpack.c.b16 %v641, %v640
  %v876 = vpack.c.b16 %v643, %v642
  %v877 = vpack.c.b16 %v645, %v644
  %v878 = vpack.c.b16 %v647, %v646
  %v879 = vpack.c.b16 %v649, %v648
  %v880 = vpack.c.b16 %v651, %v650
  %v881 = vpack.c.b16 %v653, %v652
  %v882 = vpack.c.b16 %v655, %v654
  %v883 = vpack.c.b16 %v657, %v656
  %v884 = vpack.c.b16 %v659, %v658
  %v885 = vpack.c.b16 %v661, %v660
  %v886 = vpack.c.b16 %v663, %v662
  %v887 = vpack.c.b16 %v665, %v664
  %v888 = vpack.c.b16 %v667, %v666
  %v889 = vpack.c.b16 %v669, %v668
  %v890 = vpack.c.b16 %v671, %v670
  %v891 = vpack.c.b16 %v673, %v672
  %v892 = vpack.c.b16 %v675, %v674
  %v893 = vpack.c.b16 %v677, %v676
  %v894 = vpack.c.b16 %v679, %v678
  %v895 = vpack.c.b16 %v681, %v680
  %v896 = vpack.c.b16 %v683, %v682
  %v897 = vpack.c.b16 %v685, %v684
  %v898 = vpack.c.b16 %v687, %v686
  %v899 = vpack.c.b16 %v689, %v688
  %v900 = vpack.c.b16 %v691, %v690
  %v901 = vpack.c.b16 %v693, %v692
  %v902 = vpack.c.b16 %v695, %v694
  %v903 = vpack.c.b16 %v697, %v696
  %v904 = vpack.c.b16 %v699, %v698
  %v905 = vpack.c.b16 %v701, %v700
  %v906 = vpack.c.b16 %v703, %v702
  %v907 = vpack.c.b16 %v705, %v704
  %v908 = vpack.c.b16 %v707, %v706
  %v909 = vpack.c.b16 %v709, %v708
  %v910 = vpack.c.b16 %v711, %v710
  %v911 = vpack.c.b16 %v713, %v712
  %v912 = vpack.c.b16 %v715, %v714
  %v913 = vpack.c.b16 %v717, %v716
  %v914 = vpack.c.b16 %v719, %v718
  %v915 = vpack.c.b16 %v721, %v720
  %v916 = vpack.c.b16 %v723, %v722
  %v917 = vpack.c.b16 %v725, %v724
  %v918 = vpack.c.b16 %v727, %v726
  %v919 = vpack.c.b16 %v729, %v728
  %v920 = vpack.c.b16 %v731, %v730
  %v921 = vpack.c.b16 %v733, %v732
  %v922 = vpack.c.b16 %v735, %v734
  %v923 = vpack.c.b16 %v737, %v736
  %v924 = vpack.c.b16 %v739, %v738
  %v925 = vpack.c.b16 %v741, %v740
  %v926 = vpack.c.b16 %v743, %v742
  %v927 = vpack.c.b16 %v745, %v744
  %v928 = vpack.c.b16 %v747, %v746
  %v929 = vpack.c.b16 %v749, %v748
  %v930 = vpack.c.b16 %v751, %v750
  %v931 = vpack.c.b16 %v753, %v752
  %v932 = vpack.c.b16 %v755, %v754
  %v933 = vpack.c.b16 %v757, %v756
  %v934 = vpack.c.b16 %v759, %v758
  %v935 = vpack.c.b16 %v761, %v760
  %v936 = vpack.c.b16 %v763, %v762
  %v937 = vpack.c.b16 %v765, %v764
  %v938 = vpack.c.b16 %v767, %v766
  %v939 = vpack.c.b16 %v769, %v768
  %v940 = vpack.c.b16 %v771, %v770
  %v941 = vpack.c.b16 %v773, %v772
  %v942 = vpack.c.b16 %v775, %v774
  %v943 = vpack.c.b16 %v777, %v776
  %v944 = vpack.c.b16 %v779, %v778
  %v945 = vpack.c.b16 %v781, %v780
  %v946 = vpack.c.b16 %v783, %v782
  %v947 = vpack.c.b16 %v785, %v784
  %v948 = vpack.c.b16 %v787, %v786
  %v949 = vpack.c.b16 %v789, %v788
  %v950 = vpack.c.b16 %v791, %v790
  %v951 = vpack.c.b16 %v793, %v792
  %v952 = vpack.c.b16 %v795, %v794
  %v953 = vpack.c.b16 %v797, %v796
  %v954 = vpack.c.b16 %v799, %v798
  %v955 = vpack.c.b16 %v801, %v800
  %v956 = vpack.c.b16 %v803, %v802
  %v957 = vpack.c.b16 %v805, %v804
  %v958 = vpack.c.b16 %v807, %v806
  %v959 = vpack.c.b16 %v809, %v808
  %v960 = vpack.c.b16 %v811, %v810
  %v961 = vpack.c.b16 %v813, %v812
  %v962 = vpack.c.b16 %v815, %v814
  %v963 = vpack.c.b16 %v817, %v816
  %v964 = vpack.c.b16 %v819, %v818
  %v965 = vpack.c.b16 %v821, %v820
  %v966 = vpack.c.b16 %v823, %v822
  %v967 = vpack.c.b16 %v825, %v824
  %v968 = vpack.c.b16 %v827, %v826
  %v969 = vpack.c.b16 %v829, %v828
  %v970 = vpack.c.b16 %v831, %v830
  %v971 = vpack.c.b16 %v833, %v832
  %v972 = vpack.c.b16 %v835, %v834
  %v973 = vpack.c.b16 %v837, %v836
  %v974 = vpack.c.b16 %v839, %v838
  %v975 = vpack.c.b16 %v841, %v840
  %v976 = vpack.c.b16 %v843, %v842
  %v977 = vpack.c.b16 %v845, %v844
  %v978 = vpack.c.b16 %v847, %v846
  %v979 = vpack.c.b16 %v849, %v848
  %v980 = vpack.c.b16 %v851, %v850
  %v981 = vpack.c.b16 %v853, %v852
  %1110 = vmatprep.subr.bf16.mxu0 0
  %1111 = vmatpush1.bf16.msra.mxu0 %v861
  %1112 = vmatprep.subr.bf16.mxu0 0
  %1113 = vmatpush1.bf16.msra.mxu0 %v860
  %1114 = vmatprep.subr.bf16.mxu0 0
  %1115 = vmatpush1.bf16.msra.mxu0 %v859
  %1116 = vmatprep.subr.bf16.mxu0 0
  %1117 = vmatpush1.bf16.msra.mxu0 %v858
  %1118 = vmatprep.subr.bf16.mxu0 0
  %1119 = vmatpush1.bf16.msra.mxu0 %v857
  %1120 = vmatprep.subr.bf16.mxu0 0
  %1121 = vmatpush1.bf16.msra.mxu0 %v856
  %1122 = vmatprep.subr.bf16.mxu0 0
  %1123 = vmatpush1.bf16.msra.mxu0 %v855
  %1124 = vmatprep.subr.bf16.mxu0 0
  %1125 = vmatpush1.bf16.msra.mxu0 %v854
  %1126 = vmatprep.subr.bf16.mxu0 0
  %1127 = vmatpush2.bf16.msra.mxu0 %v869
  %1128 = vmatprep.subr.bf16.mxu0 0
  %1129 = vmatpush2.bf16.msra.mxu0 %v868
  %1130 = vmatprep.subr.bf16.mxu0 0
  %1131 = vmatpush2.bf16.msra.mxu0 %v867
  %1132 = vmatprep.subr.bf16.mxu0 0
  %1133 = vmatpush2.bf16.msra.mxu0 %v866
  %1134 = vmatprep.subr.bf16.mxu0 0
  %1135 = vmatpush2.bf16.msra.mxu0 %v865
  %1136 = vmatprep.subr.bf16.mxu0 0
  %1137 = vmatpush2.bf16.msra.mxu0 %v864
  %1138 = vmatprep.subr.bf16.mxu0 0
  %1139 = vmatpush2.bf16.msra.mxu0 %v863
  %1140 = vmatprep.subr.bf16.mxu0 0
  %1141 = vmatpush2.bf16.msra.mxu0 %v862
  %1142 = vmatprep.mubr.bf16.mxu0 %v311
  %1143 = vmatmul.mubr.bf16.gmra.mxu0 %v310
  %v1144 = vpop.f32.mrf.mxu0
  %v1145 = vadd.f32 %v284, %v1144
  %v1146 = vpop.f32.mrf.mxu0
  %v1147 = vpop.f32.mrf.mxu0
  %v1148 = vpop.f32.mrf.mxu0
  %1149 = vdwg.mxu0
  %1150 = vmatprep.subr.bf16.mxu0 0
  %1151 = vmatpush1.bf16.msra.mxu0 %v877
  %1152 = vmatprep.subr.bf16.mxu0 0
  %1153 = vmatpush1.bf16.msra.mxu0 %v876
  %1154 = vmatprep.subr.bf16.mxu0 0
  %1155 = vmatpush1.bf16.msra.mxu0 %v875
  %1156 = vmatprep.subr.bf16.mxu0 0
  %1157 = vmatpush1.bf16.msra.mxu0 %v874
  %1158 = vmatprep.subr.bf16.mxu0 0
  %1159 = vmatpush1.bf16.msra.mxu0 %v873
  %1160 = vmatprep.subr.bf16.mxu0 0
  %1161 = vmatpush1.bf16.msra.mxu0 %v872
  %1162 = vmatprep.subr.bf16.mxu0 0
  %1163 = vmatpush1.bf16.msra.mxu0 %v871
  %1164 = vmatprep.subr.bf16.mxu0 0
  %1165 = vmatpush1.bf16.msra.mxu0 %v870
  %1166 = vmatprep.subr.bf16.mxu0 0
  %1167 = vmatpush2.bf16.msra.mxu0 %v885
  %1168 = vmatprep.subr.bf16.mxu0 0
  %1169 = vmatpush2.bf16.msra.mxu0 %v884
  %1170 = vmatprep.subr.bf16.mxu0 0
  %1171 = vmatpush2.bf16.msra.mxu0 %v883
  %1172 = vmatprep.subr.bf16.mxu0 0
  %1173 = vmatpush2.bf16.msra.mxu0 %v882
  %1174 = vmatprep.subr.bf16.mxu0 0
  %1175 = vmatpush2.bf16.msra.mxu0 %v881
  %1176 = vmatprep.subr.bf16.mxu0 0
  %1177 = vmatpush2.bf16.msra.mxu0 %v880
  %1178 = vmatprep.subr.bf16.mxu0 0
  %1179 = vmatpush2.bf16.msra.mxu0 %v879
  %1180 = vmatprep.subr.bf16.mxu0 0
  %1181 = vmatpush2.bf16.msra.mxu0 %v878
  %1182 = vmatprep.mubr.bf16.mxu0 %v313
  %1183 = vmatmul.mubr.bf16.gmra.mxu0 %v312
  %v1184 = vpop.f32.mrf.mxu0
  %v1185 = vadd.f32 %v1145, %v1184
  %v1186 = vpop.f32.mrf.mxu0
  %v1187 = vpop.f32.mrf.mxu0
  %v1188 = vpop.f32.mrf.mxu0
  %1189 = vdwg.mxu0
  %1190 = vmatprep.subr.bf16.mxu0 0
  %1191 = vmatpush1.bf16.msra.mxu0 %v893
  %1192 = vmatprep.subr.bf16.mxu0 0
  %1193 = vmatpush1.bf16.msra.mxu0 %v892
  %1194 = vmatprep.subr.bf16.mxu0 0
  %1195 = vmatpush1.bf16.msra.mxu0 %v891
  %1196 = vmatprep.subr.bf16.mxu0 0
  %1197 = vmatpush1.bf16.msra.mxu0 %v890
  %1198 = vmatprep.subr.bf16.mxu0 0
  %1199 = vmatpush1.bf16.msra.mxu0 %v889
  %1200 = vmatprep.subr.bf16.mxu0 0
  %1201 = vmatpush1.bf16.msra.mxu0 %v888
  %1202 = vmatprep.subr.bf16.mxu0 0
  %1203 = vmatpush1.bf16.msra.mxu0 %v887
  %1204 = vmatprep.subr.bf16.mxu0 0
  %1205 = vmatpush1.bf16.msra.mxu0 %v886
  %1206 = vmatprep.subr.bf16.mxu0 0
  %1207 = vmatpush2.bf16.msra.mxu0 %v901
  %1208 = vmatprep.subr.bf16.mxu0 0
  %1209 = vmatpush2.bf16.msra.mxu0 %v900
  %1210 = vmatprep.subr.bf16.mxu0 0
  %1211 = vmatpush2.bf16.msra.mxu0 %v899
  %1212 = vmatprep.subr.bf16.mxu0 0
  %1213 = vmatpush2.bf16.msra.mxu0 %v898
  %1214 = vmatprep.subr.bf16.mxu0 0
  %1215 = vmatpush2.bf16.msra.mxu0 %v897
  %1216 = vmatprep.subr.bf16.mxu0 0
  %1217 = vmatpush2.bf16.msra.mxu0 %v896
  %1218 = vmatprep.subr.bf16.mxu0 0
  %1219 = vmatpush2.bf16.msra.mxu0 %v895
  %1220 = vmatprep.subr.bf16.mxu0 0
  %1221 = vmatpush2.bf16.msra.mxu0 %v894
  %1222 = vmatprep.mubr.bf16.mxu0 %v315
  %1223 = vmatmul.mubr.bf16.gmra.mxu0 %v314
  %v1224 = vpop.f32.mrf.mxu0
  %v1225 = vadd.f32 %v1185, %v1224
  %v1226 = vpop.f32.mrf.mxu0
  %v1227 = vpop.f32.mrf.mxu0
  %v1228 = vpop.f32.mrf.mxu0
  %1229 = vdwg.mxu0
  %1230 = vmatprep.subr.bf16.mxu0 0
  %1231 = vmatpush1.bf16.msra.mxu0 %v909
  %1232 = vmatprep.subr.bf16.mxu0 0
  %1233 = vmatpush1.bf16.msra.mxu0 %v908
  %1234 = vmatprep.subr.bf16.mxu0 0
  %1235 = vmatpush1.bf16.msra.mxu0 %v907
  %1236 = vmatprep.subr.bf16.mxu0 0
  %1237 = vmatpush1.bf16.msra.mxu0 %v906
  %1238 = vmatprep.subr.bf16.mxu0 0
  %1239 = vmatpush1.bf16.msra.mxu0 %v905
  %1240 = vmatprep.subr.bf16.mxu0 0
  %1241 = vmatpush1.bf16.msra.mxu0 %v904
  %1242 = vmatprep.subr.bf16.mxu0 0
  %1243 = vmatpush1.bf16.msra.mxu0 %v903
  %1244 = vmatprep.subr.bf16.mxu0 0
  %1245 = vmatpush1.bf16.msra.mxu0 %v902
  %1246 = vmatprep.subr.bf16.mxu0 0
  %1247 = vmatpush2.bf16.msra.mxu0 %v917
  %1248 = vmatprep.subr.bf16.mxu0 0
  %1249 = vmatpush2.bf16.msra.mxu0 %v916
  %1250 = vmatprep.subr.bf16.mxu0 0
  %1251 = vmatpush2.bf16.msra.mxu0 %v915
  %1252 = vmatprep.subr.bf16.mxu0 0
  %1253 = vmatpush2.bf16.msra.mxu0 %v914
  %1254 = vmatprep.subr.bf16.mxu0 0
  %1255 = vmatpush2.bf16.msra.mxu0 %v913
  %1256 = vmatprep.subr.bf16.mxu0 0
  %1257 = vmatpush2.bf16.msra.mxu0 %v912
  %1258 = vmatprep.subr.bf16.mxu0 0
  %1259 = vmatpush2.bf16.msra.mxu0 %v911
  %1260 = vmatprep.subr.bf16.mxu0 0
  %1261 = vmatpush2.bf16.msra.mxu0 %v910
  %1262 = vmatprep.mubr.bf16.mxu0 %v317
  %1263 = vmatmul.mubr.bf16.gmra.mxu0 %v316
  %v1264 = vpop.f32.mrf.mxu0
  %v1265 = vadd.f32 %v1225, %v1264
  %v1266 = vpop.f32.mrf.mxu0
  %v1267 = vpop.f32.mrf.mxu0
  %v1268 = vpop.f32.mrf.mxu0
  %1269 = vdwg.mxu0
  %1270 = vmatprep.subr.bf16.mxu0 0
  %1271 = vmatpush1.bf16.msra.mxu0 %v925
  %1272 = vmatprep.subr.bf16.mxu0 0
  %1273 = vmatpush1.bf16.msra.mxu0 %v924
  %1274 = vmatprep.subr.bf16.mxu0 0
  %1275 = vmatpush1.bf16.msra.mxu0 %v923
  %1276 = vmatprep.subr.bf16.mxu0 0
  %1277 = vmatpush1.bf16.msra.mxu0 %v922
  %1278 = vmatprep.subr.bf16.mxu0 0
  %1279 = vmatpush1.bf16.msra.mxu0 %v921
  %1280 = vmatprep.subr.bf16.mxu0 0
  %1281 = vmatpush1.bf16.msra.mxu0 %v920
  %1282 = vmatprep.subr.bf16.mxu0 0
  %1283 = vmatpush1.bf16.msra.mxu0 %v919
  %1284 = vmatprep.subr.bf16.mxu0 0
  %1285 = vmatpush1.bf16.msra.mxu0 %v918
  %1286 = vmatprep.subr.bf16.mxu0 0
  %1287 = vmatpush2.bf16.msra.mxu0 %v933
  %1288 = vmatprep.subr.bf16.mxu0 0
  %1289 = vmatpush2.bf16.msra.mxu0 %v932
  %1290 = vmatprep.subr.bf16.mxu0 0
  %1291 = vmatpush2.bf16.msra.mxu0 %v931
  %1292 = vmatprep.subr.bf16.mxu0 0
  %1293 = vmatpush2.bf16.msra.mxu0 %v930
  %1294 = vmatprep.subr.bf16.mxu0 0
  %1295 = vmatpush2.bf16.msra.mxu0 %v929
  %1296 = vmatprep.subr.bf16.mxu0 0
  %1297 = vmatpush2.bf16.msra.mxu0 %v928
  %1298 = vmatprep.subr.bf16.mxu0 0
  %1299 = vmatpush2.bf16.msra.mxu0 %v927
  %1300 = vmatprep.subr.bf16.mxu0 0
  %1301 = vmatpush2.bf16.msra.mxu0 %v926
  %1302 = vmatprep.mubr.bf16.mxu0 %v319
  %1303 = vmatmul.mubr.bf16.gmra.mxu0 %v318
  %v1304 = vpop.f32.mrf.mxu0
  %v1305 = vadd.f32 %v1265, %v1304
  %v1306 = vpop.f32.mrf.mxu0
  %v1307 = vpop.f32.mrf.mxu0
  %v1308 = vpop.f32.mrf.mxu0
  %1309 = vdwg.mxu0
  %1310 = vmatprep.subr.bf16.mxu0 0
  %1311 = vmatpush1.bf16.msra.mxu0 %v941
  %1312 = vmatprep.subr.bf16.mxu0 0
  %1313 = vmatpush1.bf16.msra.mxu0 %v940
  %1314 = vmatprep.subr.bf16.mxu0 0
  %1315 = vmatpush1.bf16.msra.mxu0 %v939
  %1316 = vmatprep.subr.bf16.mxu0 0
  %1317 = vmatpush1.bf16.msra.mxu0 %v938
  %1318 = vmatprep.subr.bf16.mxu0 0
  %1319 = vmatpush1.bf16.msra.mxu0 %v937
  %1320 = vmatprep.subr.bf16.mxu0 0
  %1321 = vmatpush1.bf16.msra.mxu0 %v936
  %1322 = vmatprep.subr.bf16.mxu0 0
  %1323 = vmatpush1.bf16.msra.mxu0 %v935
  %1324 = vmatprep.subr.bf16.mxu0 0
  %1325 = vmatpush1.bf16.msra.mxu0 %v934
  %1326 = vmatprep.subr.bf16.mxu0 0
  %1327 = vmatpush2.bf16.msra.mxu0 %v949
  %1328 = vmatprep.subr.bf16.mxu0 0
  %1329 = vmatpush2.bf16.msra.mxu0 %v948
  %1330 = vmatprep.subr.bf16.mxu0 0
  %1331 = vmatpush2.bf16.msra.mxu0 %v947
  %1332 = vmatprep.subr.bf16.mxu0 0
  %1333 = vmatpush2.bf16.msra.mxu0 %v946
  %1334 = vmatprep.subr.bf16.mxu0 0
  %1335 = vmatpush2.bf16.msra.mxu0 %v945
  %1336 = vmatprep.subr.bf16.mxu0 0
  %1337 = vmatpush2.bf16.msra.mxu0 %v944
  %1338 = vmatprep.subr.bf16.mxu0 0
  %1339 = vmatpush2.bf16.msra.mxu0 %v943
  %1340 = vmatprep.subr.bf16.mxu0 0
  %1341 = vmatpush2.bf16.msra.mxu0 %v942
  %1342 = vmatprep.mubr.bf16.mxu0 %v321
  %1343 = vmatmul.mubr.bf16.gmra.mxu0 %v320
  %v1344 = vpop.f32.mrf.mxu0
  %v1345 = vadd.f32 %v1305, %v1344
  %v1346 = vpop.f32.mrf.mxu0
  %v1347 = vpop.f32.mrf.mxu0
  %v1348 = vpop.f32.mrf.mxu0
  %1349 = vdwg.mxu0
  %1350 = vmatprep.subr.bf16.mxu0 0
  %1351 = vmatpush1.bf16.msra.mxu0 %v957
  %1352 = vmatprep.subr.bf16.mxu0 0
  %1353 = vmatpush1.bf16.msra.mxu0 %v956
  %1354 = vmatprep.subr.bf16.mxu0 0
  %1355 = vmatpush1.bf16.msra.mxu0 %v955
  %1356 = vmatprep.subr.bf16.mxu0 0
  %1357 = vmatpush1.bf16.msra.mxu0 %v954
  %1358 = vmatprep.subr.bf16.mxu0 0
  %1359 = vmatpush1.bf16.msra.mxu0 %v953
  %1360 = vmatprep.subr.bf16.mxu0 0
  %1361 = vmatpush1.bf16.msra.mxu0 %v952
  %1362 = vmatprep.subr.bf16.mxu0 0
  %1363 = vmatpush1.bf16.msra.mxu0 %v951
  %1364 = vmatprep.subr.bf16.mxu0 0
  %1365 = vmatpush1.bf16.msra.mxu0 %v950
  %1366 = vmatprep.subr.bf16.mxu0 0
  %1367 = vmatpush2.bf16.msra.mxu0 %v965
  %1368 = vmatprep.subr.bf16.mxu0 0
  %1369 = vmatpush2.bf16.msra.mxu0 %v964
  %1370 = vmatprep.subr.bf16.mxu0 0
  %1371 = vmatpush2.bf16.msra.mxu0 %v963
  %1372 = vmatprep.subr.bf16.mxu0 0
  %1373 = vmatpush2.bf16.msra.mxu0 %v962
  %1374 = vmatprep.subr.bf16.mxu0 0
  %1375 = vmatpush2.bf16.msra.mxu0 %v961
  %1376 = vmatprep.subr.bf16.mxu0 0
  %1377 = vmatpush2.bf16.msra.mxu0 %v960
  %1378 = vmatprep.subr.bf16.mxu0 0
  %1379 = vmatpush2.bf16.msra.mxu0 %v959
  %1380 = vmatprep.subr.bf16.mxu0 0
  %1381 = vmatpush2.bf16.msra.mxu0 %v958
  %1382 = vmatprep.mubr.bf16.mxu0 %v323
  %1383 = vmatmul.mubr.bf16.gmra.mxu0 %v322
  %v1384 = vpop.f32.mrf.mxu0
  %v1385 = vadd.f32 %v1345, %v1384
  %v1386 = vpop.f32.mrf.mxu0
  %v1387 = vpop.f32.mrf.mxu0
  %v1388 = vpop.f32.mrf.mxu0
  %1389 = vdwg.mxu0
  %1390 = vmatprep.subr.bf16.mxu0 0
  %1391 = vmatpush1.bf16.msra.mxu0 %v973
  %1392 = vmatprep.subr.bf16.mxu0 0
  %1393 = vmatpush1.bf16.msra.mxu0 %v972
  %1394 = vmatprep.subr.bf16.mxu0 0
  %1395 = vmatpush1.bf16.msra.mxu0 %v971
  %1396 = vmatprep.subr.bf16.mxu0 0
  %1397 = vmatpush1.bf16.msra.mxu0 %v970
  %1398 = vmatprep.subr.bf16.mxu0 0
  %1399 = vmatpush1.bf16.msra.mxu0 %v969
  %1400 = vmatprep.subr.bf16.mxu0 0
  %1401 = vmatpush1.bf16.msra.mxu0 %v968
  %1402 = vmatprep.subr.bf16.mxu0 0
  %1403 = vmatpush1.bf16.msra.mxu0 %v967
  %1404 = vmatprep.subr.bf16.mxu0 0
  %1405 = vmatpush1.bf16.msra.mxu0 %v966
  %1406 = vmatprep.subr.bf16.mxu0 0
  %1407 = vmatpush2.bf16.msra.mxu0 %v981
  %1408 = vmatprep.subr.bf16.mxu0 0
  %1409 = vmatpush2.bf16.msra.mxu0 %v980
  %1410 = vmatprep.subr.bf16.mxu0 0
  %1411 = vmatpush2.bf16.msra.mxu0 %v979
  %1412 = vmatprep.subr.bf16.mxu0 0
  %1413 = vmatpush2.bf16.msra.mxu0 %v978
  %1414 = vmatprep.subr.bf16.mxu0 0
  %1415 = vmatpush2.bf16.msra.mxu0 %v977
  %1416 = vmatprep.subr.bf16.mxu0 0
  %1417 = vmatpush2.bf16.msra.mxu0 %v976
  %1418 = vmatprep.subr.bf16.mxu0 0
  %1419 = vmatpush2.bf16.msra.mxu0 %v975
  %1420 = vmatprep.subr.bf16.mxu0 0
  %1421 = vmatpush2.bf16.msra.mxu0 %v974
  %1422 = vmatprep.mubr.bf16.mxu0 %v325
  %1423 = vmatmul.mubr.bf16.gmra.mxu0 %v324
  %v1424 = vpop.f32.mrf.mxu0
  %v1425 = vadd.f32 %v1385, %v1424
  %v1426 = vpop.f32.mrf.mxu0
  %v1427 = vpop.f32.mrf.mxu0
  %v1428 = vpop.f32.mrf.mxu0
  %1429 = vdwg.mxu0
  %vm1430 = vcmask 15360
  %1431 = vst.msk [vmem:[%s3] sm:$0xff] %vm1430, %v1425
  // Predicated region
  $region14: #{encoder_forward.5} parent=0 // pred_check
    _
  $region15: #{encoder_forward.5} parent=0 // pred_check_branch
    %1433 = sbr.rel (0) target = $region17
  $region16: #{encoder_forward.5} parent=0 // pred_region
    _
  $region17: #{encoder_forward.5} parent=0 // pred_fallthru
    _
  // Predicated region
  $region18: #{encoder_forward.5} parent=0 // pred_check
    _
  $region19: #{encoder_forward.5} parent=0 // pred_check_branch
    %1435 = sbr.rel (0) target = $region21
  $region20: #{encoder_forward.5} parent=0 // pred_region
    _
  $region21: #{encoder_forward.5} parent=0 // pred_fallthru
    _

</llo_original>
